<compile_context>
chip_gen: v7x
topology: tpu7x:2x2x1
jax: 0.10.0
libtpu: 0.0.40
codegen_flags: <defaults>
</compile_context>

<pallas_src>
import functools

import jax
import jax.numpy as jnp
from jax.experimental import pallas as pl
from jax.experimental.pallas import tpu as pltpu

IN_FEATURES = 1024
H1 = 128
H2 = 64
NUM_CLASSES = 10
PADDED_CLASSES = 128  # lane-dense output width (multiple of 128)


def mlp_kernel(x_ref, w1_ref, b1_ref, w2_ref, b2_ref, w3_ref, b3_ref, out_ref):
    """One (TB, 1024) batch tile of the MLP_Net forward pass.

    x_ref:   (TB, 1024)  f32 (streamed; cast to bf16 on-chip)
    w1_ref:  (1024, 128) bf16,  b1_ref: (1, 128) f32
    w2_ref:  (128, 64)   bf16,  b2_ref: (1, 64)  f32
    w3_ref:  (64, 128)   bf16 (zero-padded 10->128), b3_ref: (1, 128) f32 (-1e30 pad)
    out_ref: (TB, 128)   f32 log_softmax (padded cols ~-1e30; sliced in wrapper)
    """
    # Cast on-chip (VPU) right before the MXU dot — avoids an extra HBM pass in the wrapper.
    x = x_ref[...].astype(jnp.bfloat16)

    # fc1 + relu (f32 accumulation on the MXU)
    h1 = jnp.dot(x, w1_ref[...], preferred_element_type=jnp.float32) + b1_ref[...]
    h1 = jnp.maximum(h1, 0.0).astype(jnp.bfloat16)

    # fc2 + relu
    h2 = jnp.dot(h1, w2_ref[...], preferred_element_type=jnp.float32) + b2_ref[...]
    h2 = jnp.maximum(h2, 0.0).astype(jnp.bfloat16)

    # fc3: padded class columns get logit = 0 (zero w3 cols) + (-1e30 bias), so they
    # drop out of the softmax with no per-step iota/where masking.
    logits = jnp.dot(h2, w3_ref[...], preferred_element_type=jnp.float32) + b3_ref[...]

    # Numerically-stable log_softmax over the class axis (f32 throughout).
    m = jnp.max(logits, axis=-1, keepdims=True)
    shifted = logits - m
    lse = jnp.log(jnp.sum(jnp.exp(shifted), axis=-1, keepdims=True))
    out_ref[...] = (shifted - lse).astype(out_ref.dtype)


def _round_up(n, m):
    return ((n + m - 1) // m) * m


def _tpu_vmem_bytes():
    """Physical VMEM per core; conservative (v7x-sized) fallback if query fails."""
    try:
        info = pltpu.get_tpu_info()
        for attr in ("vmem_capacity_bytes", "vmem_size_bytes", "vmem_bytes"):
            v = getattr(info, attr, None)
            if v:
                return int(v)
    except Exception:
        pass
    return 64 << 20


def _tile_config(batch):
    """Pick (tile_batch, vmem_limit) per TPU generation and guarantee >=2 grid steps."""
    vmem = _tpu_vmem_bytes()
    if vmem >= (96 << 20):
        # v5e / v6e: 128 MiB physical VMEM -> long input DMAs on the slower HBM.
        tb_cap, vmem_limit = 4096, 64 << 20
    else:
        # v7x: 64 MiB per-TC VMEM -> keep the double-buffered f32 input tile modest.
        tb_cap, vmem_limit = 2048, 48 << 20
    # At least 2 grid steps when the batch allows it (v7x megacore sharding engages);
    # tiles stay multiples of 256 (MXU M dim / sublane packing).
    tb = min(tb_cap, _round_up(max(-(-batch // 2), 1), 256))
    return tb, vmem_limit


@functools.partial(jax.jit, static_argnames=("tb", "vmem_limit"))
def _mlp_forward_impl(x2d, w1, b1, w2, b2, w3, b3, *, tb, vmem_limit):
    B = x2d.shape[0]

    # Weight/bias prep (tiny, one pass): bf16 weights, f32 biases, padded fc3.
    w1b = w1.astype(jnp.bfloat16)
    w2b = w2.astype(jnp.bfloat16)
    w3b = jnp.zeros((H2, PADDED_CLASSES), jnp.bfloat16)
    w3b = w3b.at[:, :NUM_CLASSES].set(w3.astype(jnp.bfloat16))
    b1r = b1.reshape(1, -1).astype(jnp.float32)
    b2r = b2.reshape(1, -1).astype(jnp.float32)
    # Mask folded into the bias: padded class columns get -1e30.
    b3r = jnp.full((1, PADDED_CLASSES), -1e30, jnp.float32)
    b3r = b3r.at[0, :NUM_CLASSES].set(b3.astype(jnp.float32))

    grid = (pl.cdiv(B, tb),)  # ragged final block handled by Pallas (rows >= B masked)
    resident = lambda shape: pl.BlockSpec(shape, lambda i: (0, 0))  # stays in VMEM

    x_bytes = jnp.dtype(x2d.dtype).itemsize
    cost = pl.CostEstimate(
        flops=2 * B * (IN_FEATURES * H1 + H1 * H2 + H2 * PADDED_CLASSES),
        transcendentals=B * (PADDED_CLASSES + 1),
        bytes_accessed=(
            B * IN_FEATURES * x_bytes                                   # streamed input
            + (IN_FEATURES * H1 + H1 * H2 + H2 * PADDED_CLASSES) * 2    # weights (bf16)
            + (H1 + H2 + PADDED_CLASSES) * 4                            # biases (f32)
            + B * PADDED_CLASSES * 4                                    # output (f32)
        ),
    )

    out = pl.pallas_call(
        mlp_kernel,
        out_shape=jax.ShapeDtypeStruct((B, PADDED_CLASSES), jnp.float32),
        grid=grid,
        in_specs=[
            pl.BlockSpec((tb, IN_FEATURES), lambda i: (i, 0)),  # streamed, double-buffered
            resident((IN_FEATURES, H1)),
            resident((1, H1)),
            resident((H1, H2)),
            resident((1, H2)),
            resident((H2, PADDED_CLASSES)),
            resident((1, PADDED_CLASSES)),
        ],
        out_specs=pl.BlockSpec((tb, PADDED_CLASSES), lambda i: (i, 0)),
        compiler_params=pltpu.CompilerParams(
            dimension_semantics=("parallel",),  # megacore sharding on v7x
            vmem_limit_bytes=vmem_limit,
        ),
        cost_estimate=cost,
    )(x2d, w1b, b1r, w2b, b2r, w3b, b3r)

    # Drop padded class columns (batch is exact; no padded rows exist in the output).
    return out[:, :NUM_CLASSES]


def mlp_net_forward(x, w1, b1, w2, b2, w3, b3, tile_batch=None):
    """Wrapper mimicking MLP_Net.forward: x.view(-1, 1024) -> fc/relu x2 -> fc3 -> log_softmax."""
    x2d = x.reshape(-1, IN_FEATURES)  # metadata-only; x streamed in its native dtype
    tb, vmem_limit = _tile_config(x2d.shape[0])
    if tile_batch is not None:
        tb = _round_up(min(tile_batch, tb), 256)
    return _mlp_forward_impl(x2d, w1, b1, w2, b2, w3, b3, tb=tb, vmem_limit=vmem_limit)


def init_params(key):
    """Deterministic synthetic init. Weights stored as (in, out)."""
    k1, k2, k3, k4, k5, k6 = jax.random.split(key, 6)
    w1 = jax.random.normal(k1, (IN_FEATURES, H1), jnp.float32) * 0.03
    b1 = jax.random.normal(k2, (H1,), jnp.float32) * 0.01
    w2 = jax.random.normal(k3, (H1, H2), jnp.float32) * 0.06
    b2 = jax.random.normal(k4, (H2,), jnp.float32) * 0.01
    w3 = jax.random.normal(k5, (H2, NUM_CLASSES), jnp.float32) * 0.1
    b3 = jax.random.normal(k6, (NUM_CLASSES,), jnp.float32) * 0.01
    return w1, b1, w2, b2, w3, b3


def reference_forward_bf16(x, w1, b1, w2, b2, w3, b3):
    """Pure-JAX reference matching the kernel's bf16-weight / f32-accumulate numerics."""
    x2d = x.reshape(-1, IN_FEATURES).astype(jnp.bfloat16)
    h1 = jnp.dot(x2d, w1.astype(jnp.bfloat16), preferred_element_type=jnp.float32) + b1
    h1 = jnp.maximum(h1, 0.0).astype(jnp.bfloat16)
    h2 = jnp.dot(h1, w2.astype(jnp.bfloat16), preferred_element_type=jnp.float32) + b2
    h2 = jnp.maximum(h2, 0.0).astype(jnp.bfloat16)
    logits = jnp.dot(h2, w3.astype(jnp.bfloat16), preferred_element_type=jnp.float32) + b3
    return jax.nn.log_softmax(logits, axis=1)


if __name__ == "__main__":
    key = jax.random.PRNGKey(0)
    kx, kp = jax.random.split(key)

    # Input consistent with x.view(-1, 1024): (batch=2, 1, 32, 32) images.
    x = jax.random.normal(kx, (2, 1, 32, 32), jnp.float32)
    params = init_params(kp)

    out = mlp_net_forward(x, *params)
    out = jax.block_until_ready(out)

    ref = reference_forward_bf16(x, *params)
    assert out.shape == (2, NUM_CLASSES), out.shape
    max_err = float(jnp.max(jnp.abs(out - ref)))
    assert jnp.allclose(out, ref, atol=5e-3, rtol=5e-3), max_err
    # log_softmax rows should exponentiate-sum to ~1
    assert jnp.allclose(jnp.sum(jnp.exp(out), axis=1), 1.0, atol=1e-3)

    print("KERNEL_OK")
</pallas_src>

<mosaic_0001>
module attributes {stable_mosaic.version = 11 : i64} {
  func.func @mlp_kernel(%arg0: i32, %arg1: memref<256x1024xf32, #tpu.memory_space<vmem>>, %arg2: memref<1024x128xbf16, #tpu.memory_space<vmem>>, %arg3: memref<1x128xf32, #tpu.memory_space<vmem>>, %arg4: memref<128x64xbf16, #tpu.memory_space<vmem>>, %arg5: memref<1x64xf32, #tpu.memory_space<vmem>>, %arg6: memref<64x128xbf16, #tpu.memory_space<vmem>>, %arg7: memref<1x128xf32, #tpu.memory_space<vmem>>, %arg8: memref<256x128xf32, #tpu.memory_space<vmem>>) attributes {dimension_semantics = [#tpu.dimension_semantics<parallel>], iteration_bounds = array<i64: 1>, scalar_prefetch = 0 : i64, scratch_operands = 0 : i64, tpu.core_type = #tpu.core_type<tc>, window_params = [{transform_indices = @transform_0, window_bounds = array<i64: 256, 1024>}, {pipeline_mode = #tpu.pipeline_mode<synchronous>, transform_indices = @transform_1, window_bounds = array<i64: 1024, 128>}, {pipeline_mode = #tpu.pipeline_mode<synchronous>, transform_indices = @transform_2, window_bounds = array<i64: 1, 128>}, {pipeline_mode = #tpu.pipeline_mode<synchronous>, transform_indices = @transform_3, window_bounds = array<i64: 128, 64>}, {pipeline_mode = #tpu.pipeline_mode<synchronous>, transform_indices = @transform_4, window_bounds = array<i64: 1, 64>}, {pipeline_mode = #tpu.pipeline_mode<synchronous>, transform_indices = @transform_5, window_bounds = array<i64: 64, 128>}, {pipeline_mode = #tpu.pipeline_mode<synchronous>, transform_indices = @transform_6, window_bounds = array<i64: 1, 128>}, {transform_indices = @transform_7, window_bounds = array<i64: 256, 128>}]} {
    %c0 = arith.constant 0 : index
    %c0_0 = arith.constant 0 : index
    %0 = vector.load %arg1[%c0, %c0_0] : memref<256x1024xf32, #tpu.memory_space<vmem>>, vector<256x1024xf32>
    %1 = arith.truncf %0 : vector<256x1024xf32> to vector<256x1024xbf16>
    %c0_1 = arith.constant 0 : index
    %c0_2 = arith.constant 0 : index
    %2 = vector.load %arg2[%c0_1, %c0_2] : memref<1024x128xbf16, #tpu.memory_space<vmem>>, vector<1024x128xbf16>
    %cst = arith.constant dense<0.000000e+00> : vector<256x128xf32>
    %3 = tpu.matmul %1, %2, %cst {dimension_numbers = #tpu.dot_dimension_numbers<[1], [0], [0], [1], [0, 0, 1, 1], [], []>} : vector<256x1024xbf16>, vector<1024x128xbf16>, vector<256x128xf32> -> vector<256x128xf32>
    %c0_3 = arith.constant 0 : index
    %c0_4 = arith.constant 0 : index
    %4 = vector.load %arg3[%c0_3, %c0_4] : memref<1x128xf32, #tpu.memory_space<vmem>>, vector<1x128xf32>
    %5 = vector.broadcast %4 : vector<1x128xf32> to vector<256x128xf32>
    %6 = arith.addf %3, %5 : vector<256x128xf32>
    %cst_5 = arith.constant 0.000000e+00 : f32
    %7 = vector.broadcast %cst_5 : f32 to vector<256x128xf32>
    %8 = arith.maximumf %6, %7 : vector<256x128xf32>
    %9 = arith.truncf %8 : vector<256x128xf32> to vector<256x128xbf16>
    %c0_6 = arith.constant 0 : index
    %c0_7 = arith.constant 0 : index
    %10 = vector.load %arg4[%c0_6, %c0_7] : memref<128x64xbf16, #tpu.memory_space<vmem>>, vector<128x64xbf16>
    %cst_8 = arith.constant dense<0.000000e+00> : vector<256x64xf32>
    %11 = tpu.matmul %9, %10, %cst_8 {dimension_numbers = #tpu.dot_dimension_numbers<[1], [0], [0], [1], [0, 0, 1, 1], [], []>} : vector<256x128xbf16>, vector<128x64xbf16>, vector<256x64xf32> -> vector<256x64xf32>
    %c0_9 = arith.constant 0 : index
    %c0_10 = arith.constant 0 : index
    %12 = vector.load %arg5[%c0_9, %c0_10] : memref<1x64xf32, #tpu.memory_space<vmem>>, vector<1x64xf32>
    %13 = vector.broadcast %12 : vector<1x64xf32> to vector<256x64xf32>
    %14 = arith.addf %11, %13 : vector<256x64xf32>
    %cst_11 = arith.constant 0.000000e+00 : f32
    %15 = vector.broadcast %cst_11 : f32 to vector<256x64xf32>
    %16 = arith.maximumf %14, %15 : vector<256x64xf32>
    %17 = arith.truncf %16 : vector<256x64xf32> to vector<256x64xbf16>
    %c0_12 = arith.constant 0 : index
    %c0_13 = arith.constant 0 : index
    %18 = vector.load %arg6[%c0_12, %c0_13] : memref<64x128xbf16, #tpu.memory_space<vmem>>, vector<64x128xbf16>
    %cst_14 = arith.constant dense<0.000000e+00> : vector<256x128xf32>
    %19 = tpu.matmul %17, %18, %cst_14 {dimension_numbers = #tpu.dot_dimension_numbers<[1], [0], [0], [1], [0, 0, 1, 1], [], []>} : vector<256x64xbf16>, vector<64x128xbf16>, vector<256x128xf32> -> vector<256x128xf32>
    %c0_15 = arith.constant 0 : index
    %c0_16 = arith.constant 0 : index
    %20 = vector.load %arg7[%c0_15, %c0_16] : memref<1x128xf32, #tpu.memory_space<vmem>>, vector<1x128xf32>
    %21 = vector.broadcast %20 : vector<1x128xf32> to vector<256x128xf32>
    %22 = arith.addf %19, %21 : vector<256x128xf32>
    %cst_17 = arith.constant dense<0xFF800000> : vector<256xf32>
    %23 = vector.multi_reduction <maximumf>, %22, %cst_17 [1] : vector<256x128xf32> to vector<256xf32>
    %24 = vector.shape_cast %23 : vector<256xf32> to vector<256x1xf32>
    %25 = vector.broadcast %24 : vector<256x1xf32> to vector<256x128xf32>
    %26 = arith.subf %22, %25 : vector<256x128xf32>
    %27 = math.exp %26 : vector<256x128xf32>
    %cst_18 = arith.constant dense<0.000000e+00> : vector<256xf32>
    %28 = vector.multi_reduction <add>, %27, %cst_18 [1] : vector<256x128xf32> to vector<256xf32>
    %29 = vector.shape_cast %28 : vector<256xf32> to vector<256x1xf32>
    %30 = math.log %29 : vector<256x1xf32>
    %31 = vector.broadcast %30 : vector<256x1xf32> to vector<256x128xf32>
    %32 = arith.subf %26, %31 : vector<256x128xf32>
    %c0_19 = arith.constant 0 : index
    %c0_20 = arith.constant 0 : index
    %33 = vector.load %arg8[%c0_19, %c0_20] : memref<256x128xf32, #tpu.memory_space<vmem>>, vector<256x128xf32>
    tpu.vector_store %arg8[%c0_19, %c0_20], %32 {strides = array<i32>} : memref<256x128xf32, #tpu.memory_space<vmem>>, vector<256x128xf32>,
    return
  }
  func.func @transform_0(%arg0: i32) -> (i32, i32) {
    %c0_i32 = arith.constant 0 : i32
    %c0_i32_0 = arith.constant 0 : i32
    return %arg0, %c0_i32 : i32, i32
  }
  func.func @transform_1(%arg0: i32) -> (i32, i32) {
    %c0_i32 = arith.constant 0 : i32
    %c0_i32_0 = arith.constant 0 : i32
    %c0_i32_1 = arith.constant 0 : i32
    return %c0_i32, %c0_i32_0 : i32, i32
  }
  func.func @transform_2(%arg0: i32) -> (i32, i32) {
    %c0_i32 = arith.constant 0 : i32
    %c0_i32_0 = arith.constant 0 : i32
    %c0_i32_1 = arith.constant 0 : i32
    return %c0_i32, %c0_i32_0 : i32, i32
  }
  func.func @transform_3(%arg0: i32) -> (i32, i32) {
    %c0_i32 = arith.constant 0 : i32
    %c0_i32_0 = arith.constant 0 : i32
    %c0_i32_1 = arith.constant 0 : i32
    return %c0_i32, %c0_i32_0 : i32, i32
  }
  func.func @transform_4(%arg0: i32) -> (i32, i32) {
    %c0_i32 = arith.constant 0 : i32
    %c0_i32_0 = arith.constant 0 : i32
    %c0_i32_1 = arith.constant 0 : i32
    return %c0_i32, %c0_i32_0 : i32, i32
  }
  func.func @transform_5(%arg0: i32) -> (i32, i32) {
    %c0_i32 = arith.constant 0 : i32
    %c0_i32_0 = arith.constant 0 : i32
    %c0_i32_1 = arith.constant 0 : i32
    return %c0_i32, %c0_i32_0 : i32, i32
  }
  func.func @transform_6(%arg0: i32) -> (i32, i32) {
    %c0_i32 = arith.constant 0 : i32
    %c0_i32_0 = arith.constant 0 : i32
    %c0_i32_1 = arith.constant 0 : i32
    return %c0_i32, %c0_i32_0 : i32, i32
  }
  func.func @transform_7(%arg0: i32) -> (i32, i32) {
    %c0_i32 = arith.constant 0 : i32
    %c0_i32_0 = arith.constant 0 : i32
    return %arg0, %c0_i32 : i32, i32
  }
}

</mosaic_0001>

<llo_original>
// kernel: _mlp_forward_impl.1
$region0: #{_mlp_forward_impl.1}
  #allocation0 [shape = 'u32[]', space=smem, size = 0x4, offset = 0x4, fixed_abs, tag = 'smem constant byte address 0x4 - core index']
  #allocation1 [shape = 'u32[144,128]{1,0:T(1,128)}', space=vmem, size = 0x12000, scoped, tag = 'internal scratch']
  %s0 = inlined_call_operand.vmem [shape: f32[2,1024], index: 0, kind: input, shape index: {}]
  %s1 = inlined_call_operand.vmem [shape: bf16[1024,128], index: 1, kind: input, shape index: {}]
  %s2 = inlined_call_operand.vmem [shape: f32[1,128], index: 2, kind: input, shape index: {}]
  %s3 = inlined_call_operand.vmem [shape: bf16[128,64], index: 3, kind: input, shape index: {}]
  %s4 = inlined_call_operand.vmem [shape: f32[1,64], index: 4, kind: input, shape index: {}]
  %s5 = inlined_call_operand.vmem [shape: bf16[64,128], index: 5, kind: input, shape index: {}]
  %s6 = inlined_call_operand.vmem [shape: f32[1,128], index: 6, kind: input, shape index: {}]
  %s7 = inlined_call_operand.hbm [shape: f32[2,128], index: 7, kind: output, shape index: {}]
  %s8 = sld [smem:[#allocation0]]
  $region38: #{_mlp_forward_impl.1} parent=0
    _
  %s10 = ssub.s32 1, %s8
  %s11 = scalar_select 0, %s10, %s8
  $region1: #{_mlp_forward_impl.1} parent=0
    #allocation2 [shape = 'u8[131072]{0}', space=vmem, size = 0x20000, scoped, tag = 'output window, operand 0, single buffered']
    #allocation3 [shape = 's32[1]{0}', space=sflag, size = 0x4, scoped, tag = 'scoped memory for _mlp_forward_impl.1']
    %12 = vsyncpa [#allocation3], 0
    // Predicated region
    $region2: #{_mlp_forward_impl.1} parent=1 // pred_check
      _
    $region3: #{_mlp_forward_impl.1} parent=1 // pred_check_branch
      %14 = sbr.rel (0) target = $region5
    $region4: #{_mlp_forward_impl.1} parent=1 // pred_region
      _
    $region5: #{_mlp_forward_impl.1} parent=1 // pred_fallthru
      _
    // Predicated region
    $region6: #{_mlp_forward_impl.1} parent=1 // pred_check
      _
    $region7: #{_mlp_forward_impl.1} parent=1 // pred_check_branch
      %16 = sbr.rel (0) target = $region9
    $region8: #{_mlp_forward_impl.1} parent=1 // pred_region
      _
    $region9: #{_mlp_forward_impl.1} parent=1 // pred_fallthru
      _
    // Predicated region
    $region10: #{_mlp_forward_impl.1} parent=1 // pred_check
      _
    $region11: #{_mlp_forward_impl.1} parent=1 // pred_check_branch
      %18 = sbr.rel (0) target = $region13
    $region12: #{_mlp_forward_impl.1} parent=1 // pred_region
      _
    $region13: #{_mlp_forward_impl.1} parent=1 // pred_fallthru
      _
    // Predicated region
    $region14: #{_mlp_forward_impl.1} parent=1 // pred_check
      _
    $region15: #{_mlp_forward_impl.1} parent=1 // pred_check_branch
      %20 = sbr.rel (0) target = $region17
    $region16: #{_mlp_forward_impl.1} parent=1 // pred_region
      _
    $region17: #{_mlp_forward_impl.1} parent=1 // pred_fallthru
      _
    // Predicated region
    $region18: #{_mlp_forward_impl.1} parent=1 // pred_check
      _
    $region19: #{_mlp_forward_impl.1} parent=1 // pred_check_branch
      %22 = sbr.rel (0) target = $region21
    $region20: #{_mlp_forward_impl.1} parent=1 // pred_region
      _
    $region21: #{_mlp_forward_impl.1} parent=1 // pred_fallthru
      _
    // Predicated region
    $region22: #{_mlp_forward_impl.1} parent=1 // pred_check
      _
    $region23: #{_mlp_forward_impl.1} parent=1 // pred_check_branch
      %24 = sbr.rel (0) target = $region25
    $region24: #{_mlp_forward_impl.1} parent=1 // pred_region
      _
    $region25: #{_mlp_forward_impl.1} parent=1 // pred_fallthru
      _
    // Predicated region
    $region26: #{_mlp_forward_impl.1} parent=1 // pred_check
      _
    $region27: #{_mlp_forward_impl.1} parent=1 // pred_check_branch
      %26 = sbr.rel (0) target = $region29
    $region28: #{_mlp_forward_impl.1} parent=1 // pred_region
      _
    $region29: #{_mlp_forward_impl.1} parent=1 // pred_fallthru
      _
    %v28 = vld [vmem:[%s0] sm:$0xff]
    %v29 = vld [vmem:[%s0 + $0x8] sm:$0xff]
    %v30 = vld [vmem:[%s0 + $0x10] sm:$0xff]
    %v31 = vld [vmem:[%s0 + $0x18] sm:$0xff]
    %v32 = vld [vmem:[%s0 + $0x20] sm:$0xff]
    %v33 = vld [vmem:[%s0 + $0x28] sm:$0xff]
    %v34 = vld [vmem:[%s0 + $0x30] sm:$0xff]
    %v35 = vld [vmem:[%s0 + $0x38] sm:$0xff]
    %v36 = vld [vmem:[%s0 + $0x40] sm:$0xff]
    %v37 = vld [vmem:[%s0 + $0x48] sm:$0xff]
    %v38 = vld [vmem:[%s0 + $0x50] sm:$0xff]
    %v39 = vld [vmem:[%s0 + $0x58] sm:$0xff]
    %v40 = vld [vmem:[%s0 + $0x60] sm:$0xff]
    %v41 = vld [vmem:[%s0 + $0x68] sm:$0xff]
    %v42 = vld [vmem:[%s0 + $0x70] sm:$0xff]
    %v43 = vld [vmem:[%s0 + $0x78] sm:$0xff]
    %v44 = vld [vmem:[%s0 + $0x80] sm:$0xff]
    %v45 = vld [vmem:[%s0 + $0x88] sm:$0xff]
    %v46 = vld [vmem:[%s0 + $0x90] sm:$0xff]
    %v47 = vld [vmem:[%s0 + $0x98] sm:$0xff]
    %v48 = vld [vmem:[%s0 + $0xa0] sm:$0xff]
    %v49 = vld [vmem:[%s0 + $0xa8] sm:$0xff]
    %v50 = vld [vmem:[%s0 + $0xb0] sm:$0xff]
    %v51 = vld [vmem:[%s0 + $0xb8] sm:$0xff]
    %v52 = vld [vmem:[%s0 + $0xc0] sm:$0xff]
    %v53 = vld [vmem:[%s0 + $0xc8] sm:$0xff]
    %v54 = vld [vmem:[%s0 + $0xd0] sm:$0xff]
    %v55 = vld [vmem:[%s0 + $0xd8] sm:$0xff]
    %v56 = vld [vmem:[%s0 + $0xe0] sm:$0xff]
    %v57 = vld [vmem:[%s0 + $0xe8] sm:$0xff]
    %v58 = vld [vmem:[%s0 + $0xf0] sm:$0xff]
    %v59 = vld [vmem:[%s0 + $0xf8] sm:$0xff]
    %v60 = vld [vmem:[%s0 + $0x100] sm:$0xff]
    %v61 = vld [vmem:[%s0 + $0x108] sm:$0xff]
    %v62 = vld [vmem:[%s0 + $0x110] sm:$0xff]
    %v63 = vld [vmem:[%s0 + $0x118] sm:$0xff]
    %v64 = vld [vmem:[%s0 + $0x120] sm:$0xff]
    %v65 = vld [vmem:[%s0 + $0x128] sm:$0xff]
    %v66 = vld [vmem:[%s0 + $0x130] sm:$0xff]
    %v67 = vld [vmem:[%s0 + $0x138] sm:$0xff]
    %v68 = vld [vmem:[%s0 + $0x140] sm:$0xff]
    %v69 = vld [vmem:[%s0 + $0x148] sm:$0xff]
    %v70 = vld [vmem:[%s0 + $0x150] sm:$0xff]
    %v71 = vld [vmem:[%s0 + $0x158] sm:$0xff]
    %v72 = vld [vmem:[%s0 + $0x160] sm:$0xff]
    %v73 = vld [vmem:[%s0 + $0x168] sm:$0xff]
    %v74 = vld [vmem:[%s0 + $0x170] sm:$0xff]
    %v75 = vld [vmem:[%s0 + $0x178] sm:$0xff]
    %v76 = vld [vmem:[%s0 + $0x180] sm:$0xff]
    %v77 = vld [vmem:[%s0 + $0x188] sm:$0xff]
    %v78 = vld [vmem:[%s0 + $0x190] sm:$0xff]
    %v79 = vld [vmem:[%s0 + $0x198] sm:$0xff]
    %v80 = vld [vmem:[%s0 + $0x1a0] sm:$0xff]
    %v81 = vld [vmem:[%s0 + $0x1a8] sm:$0xff]
    %v82 = vld [vmem:[%s0 + $0x1b0] sm:$0xff]
    %v83 = vld [vmem:[%s0 + $0x1b8] sm:$0xff]
    %v84 = vld [vmem:[%s0 + $0x1c0] sm:$0xff]
    %v85 = vld [vmem:[%s0 + $0x1c8] sm:$0xff]
    %v86 = vld [vmem:[%s0 + $0x1d0] sm:$0xff]
    %v87 = vld [vmem:[%s0 + $0x1d8] sm:$0xff]
    %v88 = vld [vmem:[%s0 + $0x1e0] sm:$0xff]
    %v89 = vld [vmem:[%s0 + $0x1e8] sm:$0xff]
    %v90 = vld [vmem:[%s0 + $0x1f0] sm:$0xff]
    %v91 = vld [vmem:[%s0 + $0x1f8] sm:$0xff]
    %v92 = vld [vmem:[%s0 + $0x200] sm:$0xff]
    %v93 = vld [vmem:[%s0 + $0x208] sm:$0xff]
    %v94 = vld [vmem:[%s0 + $0x210] sm:$0xff]
    %v95 = vld [vmem:[%s0 + $0x218] sm:$0xff]
    %v96 = vld [vmem:[%s0 + $0x220] sm:$0xff]
    %v97 = vld [vmem:[%s0 + $0x228] sm:$0xff]
    %v98 = vld [vmem:[%s0 + $0x230] sm:$0xff]
    %v99 = vld [vmem:[%s0 + $0x238] sm:$0xff]
    %v100 = vld [vmem:[%s0 + $0x240] sm:$0xff]
    %v101 = vld [vmem:[%s0 + $0x248] sm:$0xff]
    %v102 = vld [vmem:[%s0 + $0x250] sm:$0xff]
    %v103 = vld [vmem:[%s0 + $0x258] sm:$0xff]
    %v104 = vld [vmem:[%s0 + $0x260] sm:$0xff]
    %v105 = vld [vmem:[%s0 + $0x268] sm:$0xff]
    %v106 = vld [vmem:[%s0 + $0x270] sm:$0xff]
    %v107 = vld [vmem:[%s0 + $0x278] sm:$0xff]
    %v108 = vld [vmem:[%s0 + $0x280] sm:$0xff]
    %v109 = vld [vmem:[%s0 + $0x288] sm:$0xff]
    %v110 = vld [vmem:[%s0 + $0x290] sm:$0xff]
    %v111 = vld [vmem:[%s0 + $0x298] sm:$0xff]
    %v112 = vld [vmem:[%s0 + $0x2a0] sm:$0xff]
    %v113 = vld [vmem:[%s0 + $0x2a8] sm:$0xff]
    %v114 = vld [vmem:[%s0 + $0x2b0] sm:$0xff]
    %v115 = vld [vmem:[%s0 + $0x2b8] sm:$0xff]
    %v116 = vld [vmem:[%s0 + $0x2c0] sm:$0xff]
    %v117 = vld [vmem:[%s0 + $0x2c8] sm:$0xff]
    %v118 = vld [vmem:[%s0 + $0x2d0] sm:$0xff]
    %v119 = vld [vmem:[%s0 + $0x2d8] sm:$0xff]
    %v120 = vld [vmem:[%s0 + $0x2e0] sm:$0xff]
    %v121 = vld [vmem:[%s0 + $0x2e8] sm:$0xff]
    %v122 = vld [vmem:[%s0 + $0x2f0] sm:$0xff]
    %v123 = vld [vmem:[%s0 + $0x2f8] sm:$0xff]
    %v124 = vld [vmem:[%s0 + $0x300] sm:$0xff]
    %v125 = vld [vmem:[%s0 + $0x308] sm:$0xff]
    %v126 = vld [vmem:[%s0 + $0x310] sm:$0xff]
    %v127 = vld [vmem:[%s0 + $0x318] sm:$0xff]
    %v128 = vld [vmem:[%s0 + $0x320] sm:$0xff]
    %v129 = vld [vmem:[%s0 + $0x328] sm:$0xff]
    %v130 = vld [vmem:[%s0 + $0x330] sm:$0xff]
    %v131 = vld [vmem:[%s0 + $0x338] sm:$0xff]
    %v132 = vld [vmem:[%s0 + $0x340] sm:$0xff]
    %v133 = vld [vmem:[%s0 + $0x348] sm:$0xff]
    %v134 = vld [vmem:[%s0 + $0x350] sm:$0xff]
    %v135 = vld [vmem:[%s0 + $0x358] sm:$0xff]
    %v136 = vld [vmem:[%s0 + $0x360] sm:$0xff]
    %v137 = vld [vmem:[%s0 + $0x368] sm:$0xff]
    %v138 = vld [vmem:[%s0 + $0x370] sm:$0xff]
    %v139 = vld [vmem:[%s0 + $0x378] sm:$0xff]
    %v140 = vld [vmem:[%s0 + $0x380] sm:$0xff]
    %v141 = vld [vmem:[%s0 + $0x388] sm:$0xff]
    %v142 = vld [vmem:[%s0 + $0x390] sm:$0xff]
    %v143 = vld [vmem:[%s0 + $0x398] sm:$0xff]
    %v144 = vld [vmem:[%s0 + $0x3a0] sm:$0xff]
    %v145 = vld [vmem:[%s0 + $0x3a8] sm:$0xff]
    %v146 = vld [vmem:[%s0 + $0x3b0] sm:$0xff]
    %v147 = vld [vmem:[%s0 + $0x3b8] sm:$0xff]
    %v148 = vld [vmem:[%s0 + $0x3c0] sm:$0xff]
    %v149 = vld [vmem:[%s0 + $0x3c8] sm:$0xff]
    %v150 = vld [vmem:[%s0 + $0x3d0] sm:$0xff]
    %v151 = vld [vmem:[%s0 + $0x3d8] sm:$0xff]
    %v152 = vld [vmem:[%s0 + $0x3e0] sm:$0xff]
    %v153 = vld [vmem:[%s0 + $0x3e8] sm:$0xff]
    %v154 = vld [vmem:[%s0 + $0x3f0] sm:$0xff]
    %v155 = vld [vmem:[%s0 + $0x3f8] sm:$0xff]
    %v156 = vld [vmem:[%s0 + $0x400] sm:$0xff]
    %v157 = vld [vmem:[%s0 + $0x408] sm:$0xff]
    %v158 = vld [vmem:[%s0 + $0x410] sm:$0xff]
    %v159 = vld [vmem:[%s0 + $0x418] sm:$0xff]
    %v160 = vld [vmem:[%s0 + $0x420] sm:$0xff]
    %v161 = vld [vmem:[%s0 + $0x428] sm:$0xff]
    %v162 = vld [vmem:[%s0 + $0x430] sm:$0xff]
    %v163 = vld [vmem:[%s0 + $0x438] sm:$0xff]
    %v164 = vld [vmem:[%s0 + $0x440] sm:$0xff]
    %v165 = vld [vmem:[%s0 + $0x448] sm:$0xff]
    %v166 = vld [vmem:[%s0 + $0x450] sm:$0xff]
    %v167 = vld [vmem:[%s0 + $0x458] sm:$0xff]
    %v168 = vld [vmem:[%s0 + $0x460] sm:$0xff]
    %v169 = vld [vmem:[%s0 + $0x468] sm:$0xff]
    %v170 = vld [vmem:[%s0 + $0x470] sm:$0xff]
    %v171 = vld [vmem:[%s0 + $0x478] sm:$0xff]
    %v172 = vld [vmem:[%s0 + $0x480] sm:$0xff]
    %v173 = vld [vmem:[%s0 + $0x488] sm:$0xff]
    %v174 = vld [vmem:[%s0 + $0x490] sm:$0xff]
    %v175 = vld [vmem:[%s0 + $0x498] sm:$0xff]
    %v176 = vld [vmem:[%s0 + $0x4a0] sm:$0xff]
    %v177 = vld [vmem:[%s0 + $0x4a8] sm:$0xff]
    %v178 = vld [vmem:[%s0 + $0x4b0] sm:$0xff]
    %v179 = vld [vmem:[%s0 + $0x4b8] sm:$0xff]
    %v180 = vld [vmem:[%s0 + $0x4c0] sm:$0xff]
    %v181 = vld [vmem:[%s0 + $0x4c8] sm:$0xff]
    %v182 = vld [vmem:[%s0 + $0x4d0] sm:$0xff]
    %v183 = vld [vmem:[%s0 + $0x4d8] sm:$0xff]
    %v184 = vld [vmem:[%s0 + $0x4e0] sm:$0xff]
    %v185 = vld [vmem:[%s0 + $0x4e8] sm:$0xff]
    %v186 = vld [vmem:[%s0 + $0x4f0] sm:$0xff]
    %v187 = vld [vmem:[%s0 + $0x4f8] sm:$0xff]
    %v188 = vld [vmem:[%s0 + $0x500] sm:$0xff]
    %v189 = vld [vmem:[%s0 + $0x508] sm:$0xff]
    %v190 = vld [vmem:[%s0 + $0x510] sm:$0xff]
    %v191 = vld [vmem:[%s0 + $0x518] sm:$0xff]
    %v192 = vld [vmem:[%s0 + $0x520] sm:$0xff]
    %v193 = vld [vmem:[%s0 + $0x528] sm:$0xff]
    %v194 = vld [vmem:[%s0 + $0x530] sm:$0xff]
    %v195 = vld [vmem:[%s0 + $0x538] sm:$0xff]
    %v196 = vld [vmem:[%s0 + $0x540] sm:$0xff]
    %v197 = vld [vmem:[%s0 + $0x548] sm:$0xff]
    %v198 = vld [vmem:[%s0 + $0x550] sm:$0xff]
    %v199 = vld [vmem:[%s0 + $0x558] sm:$0xff]
    %v200 = vld [vmem:[%s0 + $0x560] sm:$0xff]
    %v201 = vld [vmem:[%s0 + $0x568] sm:$0xff]
    %v202 = vld [vmem:[%s0 + $0x570] sm:$0xff]
    %v203 = vld [vmem:[%s0 + $0x578] sm:$0xff]
    %v204 = vld [vmem:[%s0 + $0x580] sm:$0xff]
    %v205 = vld [vmem:[%s0 + $0x588] sm:$0xff]
    %v206 = vld [vmem:[%s0 + $0x590] sm:$0xff]
    %v207 = vld [vmem:[%s0 + $0x598] sm:$0xff]
    %v208 = vld [vmem:[%s0 + $0x5a0] sm:$0xff]
    %v209 = vld [vmem:[%s0 + $0x5a8] sm:$0xff]
    %v210 = vld [vmem:[%s0 + $0x5b0] sm:$0xff]
    %v211 = vld [vmem:[%s0 + $0x5b8] sm:$0xff]
    %v212 = vld [vmem:[%s0 + $0x5c0] sm:$0xff]
    %v213 = vld [vmem:[%s0 + $0x5c8] sm:$0xff]
    %v214 = vld [vmem:[%s0 + $0x5d0] sm:$0xff]
    %v215 = vld [vmem:[%s0 + $0x5d8] sm:$0xff]
    %v216 = vld [vmem:[%s0 + $0x5e0] sm:$0xff]
    %v217 = vld [vmem:[%s0 + $0x5e8] sm:$0xff]
    %v218 = vld [vmem:[%s0 + $0x5f0] sm:$0xff]
    %v219 = vld [vmem:[%s0 + $0x5f8] sm:$0xff]
    %v220 = vld [vmem:[%s0 + $0x600] sm:$0xff]
    %v221 = vld [vmem:[%s0 + $0x608] sm:$0xff]
    %v222 = vld [vmem:[%s0 + $0x610] sm:$0xff]
    %v223 = vld [vmem:[%s0 + $0x618] sm:$0xff]
    %v224 = vld [vmem:[%s0 + $0x620] sm:$0xff]
    %v225 = vld [vmem:[%s0 + $0x628] sm:$0xff]
    %v226 = vld [vmem:[%s0 + $0x630] sm:$0xff]
    %v227 = vld [vmem:[%s0 + $0x638] sm:$0xff]
    %v228 = vld [vmem:[%s0 + $0x640] sm:$0xff]
    %v229 = vld [vmem:[%s0 + $0x648] sm:$0xff]
    %v230 = vld [vmem:[%s0 + $0x650] sm:$0xff]
    %v231 = vld [vmem:[%s0 + $0x658] sm:$0xff]
    %v232 = vld [vmem:[%s0 + $0x660] sm:$0xff]
    %v233 = vld [vmem:[%s0 + $0x668] sm:$0xff]
    %v234 = vld [vmem:[%s0 + $0x670] sm:$0xff]
    %v235 = vld [vmem:[%s0 + $0x678] sm:$0xff]
    %v236 = vld [vmem:[%s0 + $0x680] sm:$0xff]
    %v237 = vld [vmem:[%s0 + $0x688] sm:$0xff]
    %v238 = vld [vmem:[%s0 + $0x690] sm:$0xff]
    %v239 = vld [vmem:[%s0 + $0x698] sm:$0xff]
    %v240 = vld [vmem:[%s0 + $0x6a0] sm:$0xff]
    %v241 = vld [vmem:[%s0 + $0x6a8] sm:$0xff]
    %v242 = vld [vmem:[%s0 + $0x6b0] sm:$0xff]
    %v243 = vld [vmem:[%s0 + $0x6b8] sm:$0xff]
    %v244 = vld [vmem:[%s0 + $0x6c0] sm:$0xff]
    %v245 = vld [vmem:[%s0 + $0x6c8] sm:$0xff]
    %v246 = vld [vmem:[%s0 + $0x6d0] sm:$0xff]
    %v247 = vld [vmem:[%s0 + $0x6d8] sm:$0xff]
    %v248 = vld [vmem:[%s0 + $0x6e0] sm:$0xff]
    %v249 = vld [vmem:[%s0 + $0x6e8] sm:$0xff]
    %v250 = vld [vmem:[%s0 + $0x6f0] sm:$0xff]
    %v251 = vld [vmem:[%s0 + $0x6f8] sm:$0xff]
    %v252 = vld [vmem:[%s0 + $0x700] sm:$0xff]
    %v253 = vld [vmem:[%s0 + $0x708] sm:$0xff]
    %v254 = vld [vmem:[%s0 + $0x710] sm:$0xff]
    %v255 = vld [vmem:[%s0 + $0x718] sm:$0xff]
    %v256 = vld [vmem:[%s0 + $0x720] sm:$0xff]
    %v257 = vld [vmem:[%s0 + $0x728] sm:$0xff]
    %v258 = vld [vmem:[%s0 + $0x730] sm:$0xff]
    %v259 = vld [vmem:[%s0 + $0x738] sm:$0xff]
    %v260 = vld [vmem:[%s0 + $0x740] sm:$0xff]
    %v261 = vld [vmem:[%s0 + $0x748] sm:$0xff]
    %v262 = vld [vmem:[%s0 + $0x750] sm:$0xff]
    %v263 = vld [vmem:[%s0 + $0x758] sm:$0xff]
    %v264 = vld [vmem:[%s0 + $0x760] sm:$0xff]
    %v265 = vld [vmem:[%s0 + $0x768] sm:$0xff]
    %v266 = vld [vmem:[%s0 + $0x770] sm:$0xff]
    %v267 = vld [vmem:[%s0 + $0x778] sm:$0xff]
    %v268 = vld [vmem:[%s0 + $0x780] sm:$0xff]
    %v269 = vld [vmem:[%s0 + $0x788] sm:$0xff]
    %v270 = vld [vmem:[%s0 + $0x790] sm:$0xff]
    %v271 = vld [vmem:[%s0 + $0x798] sm:$0xff]
    %v272 = vld [vmem:[%s0 + $0x7a0] sm:$0xff]
    %v273 = vld [vmem:[%s0 + $0x7a8] sm:$0xff]
    %v274 = vld [vmem:[%s0 + $0x7b0] sm:$0xff]
    %v275 = vld [vmem:[%s0 + $0x7b8] sm:$0xff]
    %v276 = vld [vmem:[%s0 + $0x7c0] sm:$0xff]
    %v277 = vld [vmem:[%s0 + $0x7c8] sm:$0xff]
    %v278 = vld [vmem:[%s0 + $0x7d0] sm:$0xff]
    %v279 = vld [vmem:[%s0 + $0x7d8] sm:$0xff]
    %v280 = vld [vmem:[%s0 + $0x7e0] sm:$0xff]
    %v281 = vld [vmem:[%s0 + $0x7e8] sm:$0xff]
    %v282 = vld [vmem:[%s0 + $0x7f0] sm:$0xff]
    %v283 = vld [vmem:[%s0 + $0x7f8] sm:$0xff]
    %v540 = vcombine.low %v28, %v30
    %v541 = vcombine.high %v28, %v30
    %v542 = vcombine.low %v32, %v34
    %v543 = vcombine.high %v32, %v34
    %v545 = vunpack.c.l.s4 1983009808
    %v546 = vunpack.c.0.s8 %v545
    %v547 = vlaneseq
    %v548 = vshrl.u32 %v547, 7
    %v549 = vsub.s32 %v546, %v548
    %v550 = vrot.slane %v540, %v549
    %v552 = vunpack.c.l.s4 1983009808
    %v553 = vunpack.c.0.s8 %v552
    %v554 = vlaneseq
    %v555 = vshrl.u32 %v554, 7
    %v556 = vsub.s32 %v553, %v555
    %v557 = vrot.slane %v541, %v556
    %v559 = vunpack.c.l.s4 1983009808
    %v560 = vunpack.c.0.s8 %v559
    %v561 = vlaneseq
    %v562 = vshrl.u32 %v561, 7
    %v563 = vsub.s32 %v560, %v562
    %v564 = vrot.slane %v542, %v563
    %v566 = vunpack.c.l.s4 1983009808
    %v567 = vunpack.c.0.s8 %v566
    %v568 = vlaneseq
    %v569 = vshrl.u32 %v568, 7
    %v570 = vsub.s32 %v567, %v569
    %v571 = vrot.slane %v543, %v570
    %v572 = vcombine.low %v550, %v564
    %v573 = vcombine.high %v550, %v564
    %v574 = vcombine.low %v557, %v571
    %v575 = vcombine.high %v557, %v571
    %v576 = vcombine.low %v29, %v31
    %v577 = vcombine.high %v29, %v31
    %v578 = vcombine.low %v33, %v35
    %v579 = vcombine.high %v33, %v35
    %v581 = vunpack.c.l.s4 1983009808
    %v582 = vunpack.c.0.s8 %v581
    %v583 = vlaneseq
    %v584 = vshrl.u32 %v583, 7
    %v585 = vsub.s32 %v582, %v584
    %v586 = vrot.slane %v576, %v585
    %v588 = vunpack.c.l.s4 1983009808
    %v589 = vunpack.c.0.s8 %v588
    %v590 = vlaneseq
    %v591 = vshrl.u32 %v590, 7
    %v592 = vsub.s32 %v589, %v591
    %v593 = vrot.slane %v577, %v592
    %v595 = vunpack.c.l.s4 1983009808
    %v596 = vunpack.c.0.s8 %v595
    %v597 = vlaneseq
    %v598 = vshrl.u32 %v597, 7
    %v599 = vsub.s32 %v596, %v598
    %v600 = vrot.slane %v578, %v599
    %v602 = vunpack.c.l.s4 1983009808
    %v603 = vunpack.c.0.s8 %v602
    %v604 = vlaneseq
    %v605 = vshrl.u32 %v604, 7
    %v606 = vsub.s32 %v603, %v605
    %v607 = vrot.slane %v579, %v606
    %v608 = vcombine.low %v586, %v600
    %v609 = vcombine.high %v586, %v600
    %v610 = vcombine.low %v593, %v607
    %v611 = vcombine.high %v593, %v607
    %v612 = vcombine.low %v36, %v38
    %v613 = vcombine.high %v36, %v38
    %v614 = vcombine.low %v40, %v42
    %v615 = vcombine.high %v40, %v42
    %v617 = vunpack.c.l.s4 1983009808
    %v618 = vunpack.c.0.s8 %v617
    %v619 = vlaneseq
    %v620 = vshrl.u32 %v619, 7
    %v621 = vsub.s32 %v618, %v620
    %v622 = vrot.slane %v612, %v621
    %v624 = vunpack.c.l.s4 1983009808
    %v625 = vunpack.c.0.s8 %v624
    %v626 = vlaneseq
    %v627 = vshrl.u32 %v626, 7
    %v628 = vsub.s32 %v625, %v627
    %v629 = vrot.slane %v613, %v628
    %v631 = vunpack.c.l.s4 1983009808
    %v632 = vunpack.c.0.s8 %v631
    %v633 = vlaneseq
    %v634 = vshrl.u32 %v633, 7
    %v635 = vsub.s32 %v632, %v634
    %v636 = vrot.slane %v614, %v635
    %v638 = vunpack.c.l.s4 1983009808
    %v639 = vunpack.c.0.s8 %v638
    %v640 = vlaneseq
    %v641 = vshrl.u32 %v640, 7
    %v642 = vsub.s32 %v639, %v641
    %v643 = vrot.slane %v615, %v642
    %v644 = vcombine.low %v622, %v636
    %v645 = vcombine.high %v622, %v636
    %v646 = vcombine.low %v629, %v643
    %v647 = vcombine.high %v629, %v643
    %v648 = vcombine.low %v37, %v39
    %v649 = vcombine.high %v37, %v39
    %v650 = vcombine.low %v41, %v43
    %v651 = vcombine.high %v41, %v43
    %v653 = vunpack.c.l.s4 1983009808
    %v654 = vunpack.c.0.s8 %v653
    %v655 = vlaneseq
    %v656 = vshrl.u32 %v655, 7
    %v657 = vsub.s32 %v654, %v656
    %v658 = vrot.slane %v648, %v657
    %v660 = vunpack.c.l.s4 1983009808
    %v661 = vunpack.c.0.s8 %v660
    %v662 = vlaneseq
    %v663 = vshrl.u32 %v662, 7
    %v664 = vsub.s32 %v661, %v663
    %v665 = vrot.slane %v649, %v664
    %v667 = vunpack.c.l.s4 1983009808
    %v668 = vunpack.c.0.s8 %v667
    %v669 = vlaneseq
    %v670 = vshrl.u32 %v669, 7
    %v671 = vsub.s32 %v668, %v670
    %v672 = vrot.slane %v650, %v671
    %v674 = vunpack.c.l.s4 1983009808
    %v675 = vunpack.c.0.s8 %v674
    %v676 = vlaneseq
    %v677 = vshrl.u32 %v676, 7
    %v678 = vsub.s32 %v675, %v677
    %v679 = vrot.slane %v651, %v678
    %v680 = vcombine.low %v658, %v672
    %v681 = vcombine.high %v658, %v672
    %v682 = vcombine.low %v665, %v679
    %v683 = vcombine.high %v665, %v679
    %v684 = vcombine.low %v44, %v46
    %v685 = vcombine.high %v44, %v46
    %v686 = vcombine.low %v48, %v50
    %v687 = vcombine.high %v48, %v50
    %v689 = vunpack.c.l.s4 1983009808
    %v690 = vunpack.c.0.s8 %v689
    %v691 = vlaneseq
    %v692 = vshrl.u32 %v691, 7
    %v693 = vsub.s32 %v690, %v692
    %v694 = vrot.slane %v684, %v693
    %v696 = vunpack.c.l.s4 1983009808
    %v697 = vunpack.c.0.s8 %v696
    %v698 = vlaneseq
    %v699 = vshrl.u32 %v698, 7
    %v700 = vsub.s32 %v697, %v699
    %v701 = vrot.slane %v685, %v700
    %v703 = vunpack.c.l.s4 1983009808
    %v704 = vunpack.c.0.s8 %v703
    %v705 = vlaneseq
    %v706 = vshrl.u32 %v705, 7
    %v707 = vsub.s32 %v704, %v706
    %v708 = vrot.slane %v686, %v707
    %v710 = vunpack.c.l.s4 1983009808
    %v711 = vunpack.c.0.s8 %v710
    %v712 = vlaneseq
    %v713 = vshrl.u32 %v712, 7
    %v714 = vsub.s32 %v711, %v713
    %v715 = vrot.slane %v687, %v714
    %v716 = vcombine.low %v694, %v708
    %v717 = vcombine.high %v694, %v708
    %v718 = vcombine.low %v701, %v715
    %v719 = vcombine.high %v701, %v715
    %v720 = vcombine.low %v45, %v47
    %v721 = vcombine.high %v45, %v47
    %v722 = vcombine.low %v49, %v51
    %v723 = vcombine.high %v49, %v51
    %v725 = vunpack.c.l.s4 1983009808
    %v726 = vunpack.c.0.s8 %v725
    %v727 = vlaneseq
    %v728 = vshrl.u32 %v727, 7
    %v729 = vsub.s32 %v726, %v728
    %v730 = vrot.slane %v720, %v729
    %v732 = vunpack.c.l.s4 1983009808
    %v733 = vunpack.c.0.s8 %v732
    %v734 = vlaneseq
    %v735 = vshrl.u32 %v734, 7
    %v736 = vsub.s32 %v733, %v735
    %v737 = vrot.slane %v721, %v736
    %v739 = vunpack.c.l.s4 1983009808
    %v740 = vunpack.c.0.s8 %v739
    %v741 = vlaneseq
    %v742 = vshrl.u32 %v741, 7
    %v743 = vsub.s32 %v740, %v742
    %v744 = vrot.slane %v722, %v743
    %v746 = vunpack.c.l.s4 1983009808
    %v747 = vunpack.c.0.s8 %v746
    %v748 = vlaneseq
    %v749 = vshrl.u32 %v748, 7
    %v750 = vsub.s32 %v747, %v749
    %v751 = vrot.slane %v723, %v750
    %v752 = vcombine.low %v730, %v744
    %v753 = vcombine.high %v730, %v744
    %v754 = vcombine.low %v737, %v751
    %v755 = vcombine.high %v737, %v751
    %v756 = vcombine.low %v52, %v54
    %v757 = vcombine.high %v52, %v54
    %v758 = vcombine.low %v56, %v58
    %v759 = vcombine.high %v56, %v58
    %v761 = vunpack.c.l.s4 1983009808
    %v762 = vunpack.c.0.s8 %v761
    %v763 = vlaneseq
    %v764 = vshrl.u32 %v763, 7
    %v765 = vsub.s32 %v762, %v764
    %v766 = vrot.slane %v756, %v765
    %v768 = vunpack.c.l.s4 1983009808
    %v769 = vunpack.c.0.s8 %v768
    %v770 = vlaneseq
    %v771 = vshrl.u32 %v770, 7
    %v772 = vsub.s32 %v769, %v771
    %v773 = vrot.slane %v757, %v772
    %v775 = vunpack.c.l.s4 1983009808
    %v776 = vunpack.c.0.s8 %v775
    %v777 = vlaneseq
    %v778 = vshrl.u32 %v777, 7
    %v779 = vsub.s32 %v776, %v778
    %v780 = vrot.slane %v758, %v779
    %v782 = vunpack.c.l.s4 1983009808
    %v783 = vunpack.c.0.s8 %v782
    %v784 = vlaneseq
    %v785 = vshrl.u32 %v784, 7
    %v786 = vsub.s32 %v783, %v785
    %v787 = vrot.slane %v759, %v786
    %v788 = vcombine.low %v766, %v780
    %v789 = vcombine.high %v766, %v780
    %v790 = vcombine.low %v773, %v787
    %v791 = vcombine.high %v773, %v787
    %v792 = vcombine.low %v53, %v55
    %v793 = vcombine.high %v53, %v55
    %v794 = vcombine.low %v57, %v59
    %v795 = vcombine.high %v57, %v59
    %v797 = vunpack.c.l.s4 1983009808
    %v798 = vunpack.c.0.s8 %v797
    %v799 = vlaneseq
    %v800 = vshrl.u32 %v799, 7
    %v801 = vsub.s32 %v798, %v800
    %v802 = vrot.slane %v792, %v801
    %v804 = vunpack.c.l.s4 1983009808
    %v805 = vunpack.c.0.s8 %v804
    %v806 = vlaneseq
    %v807 = vshrl.u32 %v806, 7
    %v808 = vsub.s32 %v805, %v807
    %v809 = vrot.slane %v793, %v808
    %v811 = vunpack.c.l.s4 1983009808
    %v812 = vunpack.c.0.s8 %v811
    %v813 = vlaneseq
    %v814 = vshrl.u32 %v813, 7
    %v815 = vsub.s32 %v812, %v814
    %v816 = vrot.slane %v794, %v815
    %v818 = vunpack.c.l.s4 1983009808
    %v819 = vunpack.c.0.s8 %v818
    %v820 = vlaneseq
    %v821 = vshrl.u32 %v820, 7
    %v822 = vsub.s32 %v819, %v821
    %v823 = vrot.slane %v795, %v822
    %v824 = vcombine.low %v802, %v816
    %v825 = vcombine.high %v802, %v816
    %v826 = vcombine.low %v809, %v823
    %v827 = vcombine.high %v809, %v823
    %v828 = vcombine.low %v60, %v62
    %v829 = vcombine.high %v60, %v62
    %v830 = vcombine.low %v64, %v66
    %v831 = vcombine.high %v64, %v66
    %v833 = vunpack.c.l.s4 1983009808
    %v834 = vunpack.c.0.s8 %v833
    %v835 = vlaneseq
    %v836 = vshrl.u32 %v835, 7
    %v837 = vsub.s32 %v834, %v836
    %v838 = vrot.slane %v828, %v837
    %v840 = vunpack.c.l.s4 1983009808
    %v841 = vunpack.c.0.s8 %v840
    %v842 = vlaneseq
    %v843 = vshrl.u32 %v842, 7
    %v844 = vsub.s32 %v841, %v843
    %v845 = vrot.slane %v829, %v844
    %v847 = vunpack.c.l.s4 1983009808
    %v848 = vunpack.c.0.s8 %v847
    %v849 = vlaneseq
    %v850 = vshrl.u32 %v849, 7
    %v851 = vsub.s32 %v848, %v850
    %v852 = vrot.slane %v830, %v851
    %v854 = vunpack.c.l.s4 1983009808
    %v855 = vunpack.c.0.s8 %v854
    %v856 = vlaneseq
    %v857 = vshrl.u32 %v856, 7
    %v858 = vsub.s32 %v855, %v857
    %v859 = vrot.slane %v831, %v858
    %v860 = vcombine.low %v838, %v852
    %v861 = vcombine.high %v838, %v852
    %v862 = vcombine.low %v845, %v859
    %v863 = vcombine.high %v845, %v859
    %v864 = vcombine.low %v61, %v63
    %v865 = vcombine.high %v61, %v63
    %v866 = vcombine.low %v65, %v67
    %v867 = vcombine.high %v65, %v67
    %v869 = vunpack.c.l.s4 1983009808
    %v870 = vunpack.c.0.s8 %v869
    %v871 = vlaneseq
    %v872 = vshrl.u32 %v871, 7
    %v873 = vsub.s32 %v870, %v872
    %v874 = vrot.slane %v864, %v873
    %v876 = vunpack.c.l.s4 1983009808
    %v877 = vunpack.c.0.s8 %v876
    %v878 = vlaneseq
    %v879 = vshrl.u32 %v878, 7
    %v880 = vsub.s32 %v877, %v879
    %v881 = vrot.slane %v865, %v880
    %v883 = vunpack.c.l.s4 1983009808
    %v884 = vunpack.c.0.s8 %v883
    %v885 = vlaneseq
    %v886 = vshrl.u32 %v885, 7
    %v887 = vsub.s32 %v884, %v886
    %v888 = vrot.slane %v866, %v887
    %v890 = vunpack.c.l.s4 1983009808
    %v891 = vunpack.c.0.s8 %v890
    %v892 = vlaneseq
    %v893 = vshrl.u32 %v892, 7
    %v894 = vsub.s32 %v891, %v893
    %v895 = vrot.slane %v867, %v894
    %v896 = vcombine.low %v874, %v888
    %v897 = vcombine.high %v874, %v888
    %v898 = vcombine.low %v881, %v895
    %v899 = vcombine.high %v881, %v895
    %v900 = vcombine.low %v68, %v70
    %v901 = vcombine.high %v68, %v70
    %v902 = vcombine.low %v72, %v74
    %v903 = vcombine.high %v72, %v74
    %v905 = vunpack.c.l.s4 1983009808
    %v906 = vunpack.c.0.s8 %v905
    %v907 = vlaneseq
    %v908 = vshrl.u32 %v907, 7
    %v909 = vsub.s32 %v906, %v908
    %v910 = vrot.slane %v900, %v909
    %v912 = vunpack.c.l.s4 1983009808
    %v913 = vunpack.c.0.s8 %v912
    %v914 = vlaneseq
    %v915 = vshrl.u32 %v914, 7
    %v916 = vsub.s32 %v913, %v915
    %v917 = vrot.slane %v901, %v916
    %v919 = vunpack.c.l.s4 1983009808
    %v920 = vunpack.c.0.s8 %v919
    %v921 = vlaneseq
    %v922 = vshrl.u32 %v921, 7
    %v923 = vsub.s32 %v920, %v922
    %v924 = vrot.slane %v902, %v923
    %v926 = vunpack.c.l.s4 1983009808
    %v927 = vunpack.c.0.s8 %v926
    %v928 = vlaneseq
    %v929 = vshrl.u32 %v928, 7
    %v930 = vsub.s32 %v927, %v929
    %v931 = vrot.slane %v903, %v930
    %v932 = vcombine.low %v910, %v924
    %v933 = vcombine.high %v910, %v924
    %v934 = vcombine.low %v917, %v931
    %v935 = vcombine.high %v917, %v931
    %v936 = vcombine.low %v69, %v71
    %v937 = vcombine.high %v69, %v71
    %v938 = vcombine.low %v73, %v75
    %v939 = vcombine.high %v73, %v75
    %v941 = vunpack.c.l.s4 1983009808
    %v942 = vunpack.c.0.s8 %v941
    %v943 = vlaneseq
    %v944 = vshrl.u32 %v943, 7
    %v945 = vsub.s32 %v942, %v944
    %v946 = vrot.slane %v936, %v945
    %v948 = vunpack.c.l.s4 1983009808
    %v949 = vunpack.c.0.s8 %v948
    %v950 = vlaneseq
    %v951 = vshrl.u32 %v950, 7
    %v952 = vsub.s32 %v949, %v951
    %v953 = vrot.slane %v937, %v952
    %v955 = vunpack.c.l.s4 1983009808
    %v956 = vunpack.c.0.s8 %v955
    %v957 = vlaneseq
    %v958 = vshrl.u32 %v957, 7
    %v959 = vsub.s32 %v956, %v958
    %v960 = vrot.slane %v938, %v959
    %v962 = vunpack.c.l.s4 1983009808
    %v963 = vunpack.c.0.s8 %v962
    %v964 = vlaneseq
    %v965 = vshrl.u32 %v964, 7
    %v966 = vsub.s32 %v963, %v965
    %v967 = vrot.slane %v939, %v966
    %v968 = vcombine.low %v946, %v960
    %v969 = vcombine.high %v946, %v960
    %v970 = vcombine.low %v953, %v967
    %v971 = vcombine.high %v953, %v967
    %v972 = vcombine.low %v76, %v78
    %v973 = vcombine.high %v76, %v78
    %v974 = vcombine.low %v80, %v82
    %v975 = vcombine.high %v80, %v82
    %v977 = vunpack.c.l.s4 1983009808
    %v978 = vunpack.c.0.s8 %v977
    %v979 = vlaneseq
    %v980 = vshrl.u32 %v979, 7
    %v981 = vsub.s32 %v978, %v980
    %v982 = vrot.slane %v972, %v981
    %v984 = vunpack.c.l.s4 1983009808
    %v985 = vunpack.c.0.s8 %v984
    %v986 = vlaneseq
    %v987 = vshrl.u32 %v986, 7
    %v988 = vsub.s32 %v985, %v987
    %v989 = vrot.slane %v973, %v988
    %v991 = vunpack.c.l.s4 1983009808
    %v992 = vunpack.c.0.s8 %v991
    %v993 = vlaneseq
    %v994 = vshrl.u32 %v993, 7
    %v995 = vsub.s32 %v992, %v994
    %v996 = vrot.slane %v974, %v995
    %v998 = vunpack.c.l.s4 1983009808
    %v999 = vunpack.c.0.s8 %v998
    %v1000 = vlaneseq
    %v1001 = vshrl.u32 %v1000, 7
    %v1002 = vsub.s32 %v999, %v1001
    %v1003 = vrot.slane %v975, %v1002
    %v1004 = vcombine.low %v982, %v996
    %v1005 = vcombine.high %v982, %v996
    %v1006 = vcombine.low %v989, %v1003
    %v1007 = vcombine.high %v989, %v1003
    %v1008 = vcombine.low %v77, %v79
    %v1009 = vcombine.high %v77, %v79
    %v1010 = vcombine.low %v81, %v83
    %v1011 = vcombine.high %v81, %v83
    %v1013 = vunpack.c.l.s4 1983009808
    %v1014 = vunpack.c.0.s8 %v1013
    %v1015 = vlaneseq
    %v1016 = vshrl.u32 %v1015, 7
    %v1017 = vsub.s32 %v1014, %v1016
    %v1018 = vrot.slane %v1008, %v1017
    %v1020 = vunpack.c.l.s4 1983009808
    %v1021 = vunpack.c.0.s8 %v1020
    %v1022 = vlaneseq
    %v1023 = vshrl.u32 %v1022, 7
    %v1024 = vsub.s32 %v1021, %v1023
    %v1025 = vrot.slane %v1009, %v1024
    %v1027 = vunpack.c.l.s4 1983009808
    %v1028 = vunpack.c.0.s8 %v1027
    %v1029 = vlaneseq
    %v1030 = vshrl.u32 %v1029, 7
    %v1031 = vsub.s32 %v1028, %v1030
    %v1032 = vrot.slane %v1010, %v1031
    %v1034 = vunpack.c.l.s4 1983009808
    %v1035 = vunpack.c.0.s8 %v1034
    %v1036 = vlaneseq
    %v1037 = vshrl.u32 %v1036, 7
    %v1038 = vsub.s32 %v1035, %v1037
    %v1039 = vrot.slane %v1011, %v1038
    %v1040 = vcombine.low %v1018, %v1032
    %v1041 = vcombine.high %v1018, %v1032
    %v1042 = vcombine.low %v1025, %v1039
    %v1043 = vcombine.high %v1025, %v1039
    %v1044 = vcombine.low %v84, %v86
    %v1045 = vcombine.high %v84, %v86
    %v1046 = vcombine.low %v88, %v90
    %v1047 = vcombine.high %v88, %v90
    %v1049 = vunpack.c.l.s4 1983009808
    %v1050 = vunpack.c.0.s8 %v1049
    %v1051 = vlaneseq
    %v1052 = vshrl.u32 %v1051, 7
    %v1053 = vsub.s32 %v1050, %v1052
    %v1054 = vrot.slane %v1044, %v1053
    %v1056 = vunpack.c.l.s4 1983009808
    %v1057 = vunpack.c.0.s8 %v1056
    %v1058 = vlaneseq
    %v1059 = vshrl.u32 %v1058, 7
    %v1060 = vsub.s32 %v1057, %v1059
    %v1061 = vrot.slane %v1045, %v1060
    %v1063 = vunpack.c.l.s4 1983009808
    %v1064 = vunpack.c.0.s8 %v1063
    %v1065 = vlaneseq
    %v1066 = vshrl.u32 %v1065, 7
    %v1067 = vsub.s32 %v1064, %v1066
    %v1068 = vrot.slane %v1046, %v1067
    %v1070 = vunpack.c.l.s4 1983009808
    %v1071 = vunpack.c.0.s8 %v1070
    %v1072 = vlaneseq
    %v1073 = vshrl.u32 %v1072, 7
    %v1074 = vsub.s32 %v1071, %v1073
    %v1075 = vrot.slane %v1047, %v1074
    %v1076 = vcombine.low %v1054, %v1068
    %v1077 = vcombine.high %v1054, %v1068
    %v1078 = vcombine.low %v1061, %v1075
    %v1079 = vcombine.high %v1061, %v1075
    %v1080 = vcombine.low %v85, %v87
    %v1081 = vcombine.high %v85, %v87
    %v1082 = vcombine.low %v89, %v91
    %v1083 = vcombine.high %v89, %v91
    %v1085 = vunpack.c.l.s4 1983009808
    %v1086 = vunpack.c.0.s8 %v1085
    %v1087 = vlaneseq
    %v1088 = vshrl.u32 %v1087, 7
    %v1089 = vsub.s32 %v1086, %v1088
    %v1090 = vrot.slane %v1080, %v1089
    %v1092 = vunpack.c.l.s4 1983009808
    %v1093 = vunpack.c.0.s8 %v1092
    %v1094 = vlaneseq
    %v1095 = vshrl.u32 %v1094, 7
    %v1096 = vsub.s32 %v1093, %v1095
    %v1097 = vrot.slane %v1081, %v1096
    %v1099 = vunpack.c.l.s4 1983009808
    %v1100 = vunpack.c.0.s8 %v1099
    %v1101 = vlaneseq
    %v1102 = vshrl.u32 %v1101, 7
    %v1103 = vsub.s32 %v1100, %v1102
    %v1104 = vrot.slane %v1082, %v1103
    %v1106 = vunpack.c.l.s4 1983009808
    %v1107 = vunpack.c.0.s8 %v1106
    %v1108 = vlaneseq
    %v1109 = vshrl.u32 %v1108, 7
    %v1110 = vsub.s32 %v1107, %v1109
    %v1111 = vrot.slane %v1083, %v1110
    %v1112 = vcombine.low %v1090, %v1104
    %v1113 = vcombine.high %v1090, %v1104
    %v1114 = vcombine.low %v1097, %v1111
    %v1115 = vcombine.high %v1097, %v1111
    %v1116 = vcombine.low %v92, %v94
    %v1117 = vcombine.high %v92, %v94
    %v1118 = vcombine.low %v96, %v98
    %v1119 = vcombine.high %v96, %v98
    %v1121 = vunpack.c.l.s4 1983009808
    %v1122 = vunpack.c.0.s8 %v1121
    %v1123 = vlaneseq
    %v1124 = vshrl.u32 %v1123, 7
    %v1125 = vsub.s32 %v1122, %v1124
    %v1126 = vrot.slane %v1116, %v1125
    %v1128 = vunpack.c.l.s4 1983009808
    %v1129 = vunpack.c.0.s8 %v1128
    %v1130 = vlaneseq
    %v1131 = vshrl.u32 %v1130, 7
    %v1132 = vsub.s32 %v1129, %v1131
    %v1133 = vrot.slane %v1117, %v1132
    %v1135 = vunpack.c.l.s4 1983009808
    %v1136 = vunpack.c.0.s8 %v1135
    %v1137 = vlaneseq
    %v1138 = vshrl.u32 %v1137, 7
    %v1139 = vsub.s32 %v1136, %v1138
    %v1140 = vrot.slane %v1118, %v1139
    %v1142 = vunpack.c.l.s4 1983009808
    %v1143 = vunpack.c.0.s8 %v1142
    %v1144 = vlaneseq
    %v1145 = vshrl.u32 %v1144, 7
    %v1146 = vsub.s32 %v1143, %v1145
    %v1147 = vrot.slane %v1119, %v1146
    %v1148 = vcombine.low %v1126, %v1140
    %v1149 = vcombine.high %v1126, %v1140
    %v1150 = vcombine.low %v1133, %v1147
    %v1151 = vcombine.high %v1133, %v1147
    %v1152 = vcombine.low %v93, %v95
    %v1153 = vcombine.high %v93, %v95
    %v1154 = vcombine.low %v97, %v99
    %v1155 = vcombine.high %v97, %v99
    %v1157 = vunpack.c.l.s4 1983009808
    %v1158 = vunpack.c.0.s8 %v1157
    %v1159 = vlaneseq
    %v1160 = vshrl.u32 %v1159, 7
    %v1161 = vsub.s32 %v1158, %v1160
    %v1162 = vrot.slane %v1152, %v1161
    %v1164 = vunpack.c.l.s4 1983009808
    %v1165 = vunpack.c.0.s8 %v1164
    %v1166 = vlaneseq
    %v1167 = vshrl.u32 %v1166, 7
    %v1168 = vsub.s32 %v1165, %v1167
    %v1169 = vrot.slane %v1153, %v1168
    %v1171 = vunpack.c.l.s4 1983009808
    %v1172 = vunpack.c.0.s8 %v1171
    %v1173 = vlaneseq
    %v1174 = vshrl.u32 %v1173, 7
    %v1175 = vsub.s32 %v1172, %v1174
    %v1176 = vrot.slane %v1154, %v1175
    %v1178 = vunpack.c.l.s4 1983009808
    %v1179 = vunpack.c.0.s8 %v1178
    %v1180 = vlaneseq
    %v1181 = vshrl.u32 %v1180, 7
    %v1182 = vsub.s32 %v1179, %v1181
    %v1183 = vrot.slane %v1155, %v1182
    %v1184 = vcombine.low %v1162, %v1176
    %v1185 = vcombine.high %v1162, %v1176
    %v1186 = vcombine.low %v1169, %v1183
    %v1187 = vcombine.high %v1169, %v1183
    %v1188 = vcombine.low %v100, %v102
    %v1189 = vcombine.high %v100, %v102
    %v1190 = vcombine.low %v104, %v106
    %v1191 = vcombine.high %v104, %v106
    %v1193 = vunpack.c.l.s4 1983009808
    %v1194 = vunpack.c.0.s8 %v1193
    %v1195 = vlaneseq
    %v1196 = vshrl.u32 %v1195, 7
    %v1197 = vsub.s32 %v1194, %v1196
    %v1198 = vrot.slane %v1188, %v1197
    %v1200 = vunpack.c.l.s4 1983009808
    %v1201 = vunpack.c.0.s8 %v1200
    %v1202 = vlaneseq
    %v1203 = vshrl.u32 %v1202, 7
    %v1204 = vsub.s32 %v1201, %v1203
    %v1205 = vrot.slane %v1189, %v1204
    %v1207 = vunpack.c.l.s4 1983009808
    %v1208 = vunpack.c.0.s8 %v1207
    %v1209 = vlaneseq
    %v1210 = vshrl.u32 %v1209, 7
    %v1211 = vsub.s32 %v1208, %v1210
    %v1212 = vrot.slane %v1190, %v1211
    %v1214 = vunpack.c.l.s4 1983009808
    %v1215 = vunpack.c.0.s8 %v1214
    %v1216 = vlaneseq
    %v1217 = vshrl.u32 %v1216, 7
    %v1218 = vsub.s32 %v1215, %v1217
    %v1219 = vrot.slane %v1191, %v1218
    %v1220 = vcombine.low %v1198, %v1212
    %v1221 = vcombine.high %v1198, %v1212
    %v1222 = vcombine.low %v1205, %v1219
    %v1223 = vcombine.high %v1205, %v1219
    %v1224 = vcombine.low %v101, %v103
    %v1225 = vcombine.high %v101, %v103
    %v1226 = vcombine.low %v105, %v107
    %v1227 = vcombine.high %v105, %v107
    %v1229 = vunpack.c.l.s4 1983009808
    %v1230 = vunpack.c.0.s8 %v1229
    %v1231 = vlaneseq
    %v1232 = vshrl.u32 %v1231, 7
    %v1233 = vsub.s32 %v1230, %v1232
    %v1234 = vrot.slane %v1224, %v1233
    %v1236 = vunpack.c.l.s4 1983009808
    %v1237 = vunpack.c.0.s8 %v1236
    %v1238 = vlaneseq
    %v1239 = vshrl.u32 %v1238, 7
    %v1240 = vsub.s32 %v1237, %v1239
    %v1241 = vrot.slane %v1225, %v1240
    %v1243 = vunpack.c.l.s4 1983009808
    %v1244 = vunpack.c.0.s8 %v1243
    %v1245 = vlaneseq
    %v1246 = vshrl.u32 %v1245, 7
    %v1247 = vsub.s32 %v1244, %v1246
    %v1248 = vrot.slane %v1226, %v1247
    %v1250 = vunpack.c.l.s4 1983009808
    %v1251 = vunpack.c.0.s8 %v1250
    %v1252 = vlaneseq
    %v1253 = vshrl.u32 %v1252, 7
    %v1254 = vsub.s32 %v1251, %v1253
    %v1255 = vrot.slane %v1227, %v1254
    %v1256 = vcombine.low %v1234, %v1248
    %v1257 = vcombine.high %v1234, %v1248
    %v1258 = vcombine.low %v1241, %v1255
    %v1259 = vcombine.high %v1241, %v1255
    %v1260 = vcombine.low %v108, %v110
    %v1261 = vcombine.high %v108, %v110
    %v1262 = vcombine.low %v112, %v114
    %v1263 = vcombine.high %v112, %v114
    %v1265 = vunpack.c.l.s4 1983009808
    %v1266 = vunpack.c.0.s8 %v1265
    %v1267 = vlaneseq
    %v1268 = vshrl.u32 %v1267, 7
    %v1269 = vsub.s32 %v1266, %v1268
    %v1270 = vrot.slane %v1260, %v1269
    %v1272 = vunpack.c.l.s4 1983009808
    %v1273 = vunpack.c.0.s8 %v1272
    %v1274 = vlaneseq
    %v1275 = vshrl.u32 %v1274, 7
    %v1276 = vsub.s32 %v1273, %v1275
    %v1277 = vrot.slane %v1261, %v1276
    %v1279 = vunpack.c.l.s4 1983009808
    %v1280 = vunpack.c.0.s8 %v1279
    %v1281 = vlaneseq
    %v1282 = vshrl.u32 %v1281, 7
    %v1283 = vsub.s32 %v1280, %v1282
    %v1284 = vrot.slane %v1262, %v1283
    %v1286 = vunpack.c.l.s4 1983009808
    %v1287 = vunpack.c.0.s8 %v1286
    %v1288 = vlaneseq
    %v1289 = vshrl.u32 %v1288, 7
    %v1290 = vsub.s32 %v1287, %v1289
    %v1291 = vrot.slane %v1263, %v1290
    %v1292 = vcombine.low %v1270, %v1284
    %v1293 = vcombine.high %v1270, %v1284
    %v1294 = vcombine.low %v1277, %v1291
    %v1295 = vcombine.high %v1277, %v1291
    %v1296 = vcombine.low %v109, %v111
    %v1297 = vcombine.high %v109, %v111
    %v1298 = vcombine.low %v113, %v115
    %v1299 = vcombine.high %v113, %v115
    %v1301 = vunpack.c.l.s4 1983009808
    %v1302 = vunpack.c.0.s8 %v1301
    %v1303 = vlaneseq
    %v1304 = vshrl.u32 %v1303, 7
    %v1305 = vsub.s32 %v1302, %v1304
    %v1306 = vrot.slane %v1296, %v1305
    %v1308 = vunpack.c.l.s4 1983009808
    %v1309 = vunpack.c.0.s8 %v1308
    %v1310 = vlaneseq
    %v1311 = vshrl.u32 %v1310, 7
    %v1312 = vsub.s32 %v1309, %v1311
    %v1313 = vrot.slane %v1297, %v1312
    %v1315 = vunpack.c.l.s4 1983009808
    %v1316 = vunpack.c.0.s8 %v1315
    %v1317 = vlaneseq
    %v1318 = vshrl.u32 %v1317, 7
    %v1319 = vsub.s32 %v1316, %v1318
    %v1320 = vrot.slane %v1298, %v1319
    %v1322 = vunpack.c.l.s4 1983009808
    %v1323 = vunpack.c.0.s8 %v1322
    %v1324 = vlaneseq
    %v1325 = vshrl.u32 %v1324, 7
    %v1326 = vsub.s32 %v1323, %v1325
    %v1327 = vrot.slane %v1299, %v1326
    %v1328 = vcombine.low %v1306, %v1320
    %v1329 = vcombine.high %v1306, %v1320
    %v1330 = vcombine.low %v1313, %v1327
    %v1331 = vcombine.high %v1313, %v1327
    %v1332 = vcombine.low %v116, %v118
    %v1333 = vcombine.high %v116, %v118
    %v1334 = vcombine.low %v120, %v122
    %v1335 = vcombine.high %v120, %v122
    %v1337 = vunpack.c.l.s4 1983009808
    %v1338 = vunpack.c.0.s8 %v1337
    %v1339 = vlaneseq
    %v1340 = vshrl.u32 %v1339, 7
    %v1341 = vsub.s32 %v1338, %v1340
    %v1342 = vrot.slane %v1332, %v1341
    %v1344 = vunpack.c.l.s4 1983009808
    %v1345 = vunpack.c.0.s8 %v1344
    %v1346 = vlaneseq
    %v1347 = vshrl.u32 %v1346, 7
    %v1348 = vsub.s32 %v1345, %v1347
    %v1349 = vrot.slane %v1333, %v1348
    %v1351 = vunpack.c.l.s4 1983009808
    %v1352 = vunpack.c.0.s8 %v1351
    %v1353 = vlaneseq
    %v1354 = vshrl.u32 %v1353, 7
    %v1355 = vsub.s32 %v1352, %v1354
    %v1356 = vrot.slane %v1334, %v1355
    %v1358 = vunpack.c.l.s4 1983009808
    %v1359 = vunpack.c.0.s8 %v1358
    %v1360 = vlaneseq
    %v1361 = vshrl.u32 %v1360, 7
    %v1362 = vsub.s32 %v1359, %v1361
    %v1363 = vrot.slane %v1335, %v1362
    %v1364 = vcombine.low %v1342, %v1356
    %v1365 = vcombine.high %v1342, %v1356
    %v1366 = vcombine.low %v1349, %v1363
    %v1367 = vcombine.high %v1349, %v1363
    %v1368 = vcombine.low %v117, %v119
    %v1369 = vcombine.high %v117, %v119
    %v1370 = vcombine.low %v121, %v123
    %v1371 = vcombine.high %v121, %v123
    %v1373 = vunpack.c.l.s4 1983009808
    %v1374 = vunpack.c.0.s8 %v1373
    %v1375 = vlaneseq
    %v1376 = vshrl.u32 %v1375, 7
    %v1377 = vsub.s32 %v1374, %v1376
    %v1378 = vrot.slane %v1368, %v1377
    %v1380 = vunpack.c.l.s4 1983009808
    %v1381 = vunpack.c.0.s8 %v1380
    %v1382 = vlaneseq
    %v1383 = vshrl.u32 %v1382, 7
    %v1384 = vsub.s32 %v1381, %v1383
    %v1385 = vrot.slane %v1369, %v1384
    %v1387 = vunpack.c.l.s4 1983009808
    %v1388 = vunpack.c.0.s8 %v1387
    %v1389 = vlaneseq
    %v1390 = vshrl.u32 %v1389, 7
    %v1391 = vsub.s32 %v1388, %v1390
    %v1392 = vrot.slane %v1370, %v1391
    %v1394 = vunpack.c.l.s4 1983009808
    %v1395 = vunpack.c.0.s8 %v1394
    %v1396 = vlaneseq
    %v1397 = vshrl.u32 %v1396, 7
    %v1398 = vsub.s32 %v1395, %v1397
    %v1399 = vrot.slane %v1371, %v1398
    %v1400 = vcombine.low %v1378, %v1392
    %v1401 = vcombine.high %v1378, %v1392
    %v1402 = vcombine.low %v1385, %v1399
    %v1403 = vcombine.high %v1385, %v1399
    %v1404 = vcombine.low %v124, %v126
    %v1405 = vcombine.high %v124, %v126
    %v1406 = vcombine.low %v128, %v130
    %v1407 = vcombine.high %v128, %v130
    %v1409 = vunpack.c.l.s4 1983009808
    %v1410 = vunpack.c.0.s8 %v1409
    %v1411 = vlaneseq
    %v1412 = vshrl.u32 %v1411, 7
    %v1413 = vsub.s32 %v1410, %v1412
    %v1414 = vrot.slane %v1404, %v1413
    %v1416 = vunpack.c.l.s4 1983009808
    %v1417 = vunpack.c.0.s8 %v1416
    %v1418 = vlaneseq
    %v1419 = vshrl.u32 %v1418, 7
    %v1420 = vsub.s32 %v1417, %v1419
    %v1421 = vrot.slane %v1405, %v1420
    %v1423 = vunpack.c.l.s4 1983009808
    %v1424 = vunpack.c.0.s8 %v1423
    %v1425 = vlaneseq
    %v1426 = vshrl.u32 %v1425, 7
    %v1427 = vsub.s32 %v1424, %v1426
    %v1428 = vrot.slane %v1406, %v1427
    %v1430 = vunpack.c.l.s4 1983009808
    %v1431 = vunpack.c.0.s8 %v1430
    %v1432 = vlaneseq
    %v1433 = vshrl.u32 %v1432, 7
    %v1434 = vsub.s32 %v1431, %v1433
    %v1435 = vrot.slane %v1407, %v1434
    %v1436 = vcombine.low %v1414, %v1428
    %v1437 = vcombine.high %v1414, %v1428
    %v1438 = vcombine.low %v1421, %v1435
    %v1439 = vcombine.high %v1421, %v1435
    %v1440 = vcombine.low %v125, %v127
    %v1441 = vcombine.high %v125, %v127
    %v1442 = vcombine.low %v129, %v131
    %v1443 = vcombine.high %v129, %v131
    %v1445 = vunpack.c.l.s4 1983009808
    %v1446 = vunpack.c.0.s8 %v1445
    %v1447 = vlaneseq
    %v1448 = vshrl.u32 %v1447, 7
    %v1449 = vsub.s32 %v1446, %v1448
    %v1450 = vrot.slane %v1440, %v1449
    %v1452 = vunpack.c.l.s4 1983009808
    %v1453 = vunpack.c.0.s8 %v1452
    %v1454 = vlaneseq
    %v1455 = vshrl.u32 %v1454, 7
    %v1456 = vsub.s32 %v1453, %v1455
    %v1457 = vrot.slane %v1441, %v1456
    %v1459 = vunpack.c.l.s4 1983009808
    %v1460 = vunpack.c.0.s8 %v1459
    %v1461 = vlaneseq
    %v1462 = vshrl.u32 %v1461, 7
    %v1463 = vsub.s32 %v1460, %v1462
    %v1464 = vrot.slane %v1442, %v1463
    %v1466 = vunpack.c.l.s4 1983009808
    %v1467 = vunpack.c.0.s8 %v1466
    %v1468 = vlaneseq
    %v1469 = vshrl.u32 %v1468, 7
    %v1470 = vsub.s32 %v1467, %v1469
    %v1471 = vrot.slane %v1443, %v1470
    %v1472 = vcombine.low %v1450, %v1464
    %v1473 = vcombine.high %v1450, %v1464
    %v1474 = vcombine.low %v1457, %v1471
    %v1475 = vcombine.high %v1457, %v1471
    %v1476 = vcombine.low %v132, %v134
    %v1477 = vcombine.high %v132, %v134
    %v1478 = vcombine.low %v136, %v138
    %v1479 = vcombine.high %v136, %v138
    %v1481 = vunpack.c.l.s4 1983009808
    %v1482 = vunpack.c.0.s8 %v1481
    %v1483 = vlaneseq
    %v1484 = vshrl.u32 %v1483, 7
    %v1485 = vsub.s32 %v1482, %v1484
    %v1486 = vrot.slane %v1476, %v1485
    %v1488 = vunpack.c.l.s4 1983009808
    %v1489 = vunpack.c.0.s8 %v1488
    %v1490 = vlaneseq
    %v1491 = vshrl.u32 %v1490, 7
    %v1492 = vsub.s32 %v1489, %v1491
    %v1493 = vrot.slane %v1477, %v1492
    %v1495 = vunpack.c.l.s4 1983009808
    %v1496 = vunpack.c.0.s8 %v1495
    %v1497 = vlaneseq
    %v1498 = vshrl.u32 %v1497, 7
    %v1499 = vsub.s32 %v1496, %v1498
    %v1500 = vrot.slane %v1478, %v1499
    %v1502 = vunpack.c.l.s4 1983009808
    %v1503 = vunpack.c.0.s8 %v1502
    %v1504 = vlaneseq
    %v1505 = vshrl.u32 %v1504, 7
    %v1506 = vsub.s32 %v1503, %v1505
    %v1507 = vrot.slane %v1479, %v1506
    %v1508 = vcombine.low %v1486, %v1500
    %v1509 = vcombine.high %v1486, %v1500
    %v1510 = vcombine.low %v1493, %v1507
    %v1511 = vcombine.high %v1493, %v1507
    %v1512 = vcombine.low %v133, %v135
    %v1513 = vcombine.high %v133, %v135
    %v1514 = vcombine.low %v137, %v139
    %v1515 = vcombine.high %v137, %v139
    %v1517 = vunpack.c.l.s4 1983009808
    %v1518 = vunpack.c.0.s8 %v1517
    %v1519 = vlaneseq
    %v1520 = vshrl.u32 %v1519, 7
    %v1521 = vsub.s32 %v1518, %v1520
    %v1522 = vrot.slane %v1512, %v1521
    %v1524 = vunpack.c.l.s4 1983009808
    %v1525 = vunpack.c.0.s8 %v1524
    %v1526 = vlaneseq
    %v1527 = vshrl.u32 %v1526, 7
    %v1528 = vsub.s32 %v1525, %v1527
    %v1529 = vrot.slane %v1513, %v1528
    %v1531 = vunpack.c.l.s4 1983009808
    %v1532 = vunpack.c.0.s8 %v1531
    %v1533 = vlaneseq
    %v1534 = vshrl.u32 %v1533, 7
    %v1535 = vsub.s32 %v1532, %v1534
    %v1536 = vrot.slane %v1514, %v1535
    %v1538 = vunpack.c.l.s4 1983009808
    %v1539 = vunpack.c.0.s8 %v1538
    %v1540 = vlaneseq
    %v1541 = vshrl.u32 %v1540, 7
    %v1542 = vsub.s32 %v1539, %v1541
    %v1543 = vrot.slane %v1515, %v1542
    %v1544 = vcombine.low %v1522, %v1536
    %v1545 = vcombine.high %v1522, %v1536
    %v1546 = vcombine.low %v1529, %v1543
    %v1547 = vcombine.high %v1529, %v1543
    %v1548 = vcombine.low %v140, %v142
    %v1549 = vcombine.high %v140, %v142
    %v1550 = vcombine.low %v144, %v146
    %v1551 = vcombine.high %v144, %v146
    %v1553 = vunpack.c.l.s4 1983009808
    %v1554 = vunpack.c.0.s8 %v1553
    %v1555 = vlaneseq
    %v1556 = vshrl.u32 %v1555, 7
    %v1557 = vsub.s32 %v1554, %v1556
    %v1558 = vrot.slane %v1548, %v1557
    %v1560 = vunpack.c.l.s4 1983009808
    %v1561 = vunpack.c.0.s8 %v1560
    %v1562 = vlaneseq
    %v1563 = vshrl.u32 %v1562, 7
    %v1564 = vsub.s32 %v1561, %v1563
    %v1565 = vrot.slane %v1549, %v1564
    %v1567 = vunpack.c.l.s4 1983009808
    %v1568 = vunpack.c.0.s8 %v1567
    %v1569 = vlaneseq
    %v1570 = vshrl.u32 %v1569, 7
    %v1571 = vsub.s32 %v1568, %v1570
    %v1572 = vrot.slane %v1550, %v1571
    %v1574 = vunpack.c.l.s4 1983009808
    %v1575 = vunpack.c.0.s8 %v1574
    %v1576 = vlaneseq
    %v1577 = vshrl.u32 %v1576, 7
    %v1578 = vsub.s32 %v1575, %v1577
    %v1579 = vrot.slane %v1551, %v1578
    %v1580 = vcombine.low %v1558, %v1572
    %v1581 = vcombine.high %v1558, %v1572
    %v1582 = vcombine.low %v1565, %v1579
    %v1583 = vcombine.high %v1565, %v1579
    %v1584 = vcombine.low %v141, %v143
    %v1585 = vcombine.high %v141, %v143
    %v1586 = vcombine.low %v145, %v147
    %v1587 = vcombine.high %v145, %v147
    %v1589 = vunpack.c.l.s4 1983009808
    %v1590 = vunpack.c.0.s8 %v1589
    %v1591 = vlaneseq
    %v1592 = vshrl.u32 %v1591, 7
    %v1593 = vsub.s32 %v1590, %v1592
    %v1594 = vrot.slane %v1584, %v1593
    %v1596 = vunpack.c.l.s4 1983009808
    %v1597 = vunpack.c.0.s8 %v1596
    %v1598 = vlaneseq
    %v1599 = vshrl.u32 %v1598, 7
    %v1600 = vsub.s32 %v1597, %v1599
    %v1601 = vrot.slane %v1585, %v1600
    %v1603 = vunpack.c.l.s4 1983009808
    %v1604 = vunpack.c.0.s8 %v1603
    %v1605 = vlaneseq
    %v1606 = vshrl.u32 %v1605, 7
    %v1607 = vsub.s32 %v1604, %v1606
    %v1608 = vrot.slane %v1586, %v1607
    %v1610 = vunpack.c.l.s4 1983009808
    %v1611 = vunpack.c.0.s8 %v1610
    %v1612 = vlaneseq
    %v1613 = vshrl.u32 %v1612, 7
    %v1614 = vsub.s32 %v1611, %v1613
    %v1615 = vrot.slane %v1587, %v1614
    %v1616 = vcombine.low %v1594, %v1608
    %v1617 = vcombine.high %v1594, %v1608
    %v1618 = vcombine.low %v1601, %v1615
    %v1619 = vcombine.high %v1601, %v1615
    %v1620 = vcombine.low %v148, %v150
    %v1621 = vcombine.high %v148, %v150
    %v1622 = vcombine.low %v152, %v154
    %v1623 = vcombine.high %v152, %v154
    %v1625 = vunpack.c.l.s4 1983009808
    %v1626 = vunpack.c.0.s8 %v1625
    %v1627 = vlaneseq
    %v1628 = vshrl.u32 %v1627, 7
    %v1629 = vsub.s32 %v1626, %v1628
    %v1630 = vrot.slane %v1620, %v1629
    %v1632 = vunpack.c.l.s4 1983009808
    %v1633 = vunpack.c.0.s8 %v1632
    %v1634 = vlaneseq
    %v1635 = vshrl.u32 %v1634, 7
    %v1636 = vsub.s32 %v1633, %v1635
    %v1637 = vrot.slane %v1621, %v1636
    %v1639 = vunpack.c.l.s4 1983009808
    %v1640 = vunpack.c.0.s8 %v1639
    %v1641 = vlaneseq
    %v1642 = vshrl.u32 %v1641, 7
    %v1643 = vsub.s32 %v1640, %v1642
    %v1644 = vrot.slane %v1622, %v1643
    %v1646 = vunpack.c.l.s4 1983009808
    %v1647 = vunpack.c.0.s8 %v1646
    %v1648 = vlaneseq
    %v1649 = vshrl.u32 %v1648, 7
    %v1650 = vsub.s32 %v1647, %v1649
    %v1651 = vrot.slane %v1623, %v1650
    %v1652 = vcombine.low %v1630, %v1644
    %v1653 = vcombine.high %v1630, %v1644
    %v1654 = vcombine.low %v1637, %v1651
    %v1655 = vcombine.high %v1637, %v1651
    %v1656 = vcombine.low %v149, %v151
    %v1657 = vcombine.high %v149, %v151
    %v1658 = vcombine.low %v153, %v155
    %v1659 = vcombine.high %v153, %v155
    %v1661 = vunpack.c.l.s4 1983009808
    %v1662 = vunpack.c.0.s8 %v1661
    %v1663 = vlaneseq
    %v1664 = vshrl.u32 %v1663, 7
    %v1665 = vsub.s32 %v1662, %v1664
    %v1666 = vrot.slane %v1656, %v1665
    %v1668 = vunpack.c.l.s4 1983009808
    %v1669 = vunpack.c.0.s8 %v1668
    %v1670 = vlaneseq
    %v1671 = vshrl.u32 %v1670, 7
    %v1672 = vsub.s32 %v1669, %v1671
    %v1673 = vrot.slane %v1657, %v1672
    %v1675 = vunpack.c.l.s4 1983009808
    %v1676 = vunpack.c.0.s8 %v1675
    %v1677 = vlaneseq
    %v1678 = vshrl.u32 %v1677, 7
    %v1679 = vsub.s32 %v1676, %v1678
    %v1680 = vrot.slane %v1658, %v1679
    %v1682 = vunpack.c.l.s4 1983009808
    %v1683 = vunpack.c.0.s8 %v1682
    %v1684 = vlaneseq
    %v1685 = vshrl.u32 %v1684, 7
    %v1686 = vsub.s32 %v1683, %v1685
    %v1687 = vrot.slane %v1659, %v1686
    %v1688 = vcombine.low %v1666, %v1680
    %v1689 = vcombine.high %v1666, %v1680
    %v1690 = vcombine.low %v1673, %v1687
    %v1691 = vcombine.high %v1673, %v1687
    %v1692 = vcombine.low %v156, %v158
    %v1693 = vcombine.high %v156, %v158
    %v1694 = vcombine.low %v160, %v162
    %v1695 = vcombine.high %v160, %v162
    %v1697 = vunpack.c.l.s4 1983009808
    %v1698 = vunpack.c.0.s8 %v1697
    %v1699 = vlaneseq
    %v1700 = vshrl.u32 %v1699, 7
    %v1701 = vsub.s32 %v1698, %v1700
    %v1702 = vrot.slane %v1692, %v1701
    %v1704 = vunpack.c.l.s4 1983009808
    %v1705 = vunpack.c.0.s8 %v1704
    %v1706 = vlaneseq
    %v1707 = vshrl.u32 %v1706, 7
    %v1708 = vsub.s32 %v1705, %v1707
    %v1709 = vrot.slane %v1693, %v1708
    %v1711 = vunpack.c.l.s4 1983009808
    %v1712 = vunpack.c.0.s8 %v1711
    %v1713 = vlaneseq
    %v1714 = vshrl.u32 %v1713, 7
    %v1715 = vsub.s32 %v1712, %v1714
    %v1716 = vrot.slane %v1694, %v1715
    %v1718 = vunpack.c.l.s4 1983009808
    %v1719 = vunpack.c.0.s8 %v1718
    %v1720 = vlaneseq
    %v1721 = vshrl.u32 %v1720, 7
    %v1722 = vsub.s32 %v1719, %v1721
    %v1723 = vrot.slane %v1695, %v1722
    %v1724 = vcombine.low %v1702, %v1716
    %v1725 = vcombine.high %v1702, %v1716
    %v1726 = vcombine.low %v1709, %v1723
    %v1727 = vcombine.high %v1709, %v1723
    %v1728 = vcombine.low %v157, %v159
    %v1729 = vcombine.high %v157, %v159
    %v1730 = vcombine.low %v161, %v163
    %v1731 = vcombine.high %v161, %v163
    %v1733 = vunpack.c.l.s4 1983009808
    %v1734 = vunpack.c.0.s8 %v1733
    %v1735 = vlaneseq
    %v1736 = vshrl.u32 %v1735, 7
    %v1737 = vsub.s32 %v1734, %v1736
    %v1738 = vrot.slane %v1728, %v1737
    %v1740 = vunpack.c.l.s4 1983009808
    %v1741 = vunpack.c.0.s8 %v1740
    %v1742 = vlaneseq
    %v1743 = vshrl.u32 %v1742, 7
    %v1744 = vsub.s32 %v1741, %v1743
    %v1745 = vrot.slane %v1729, %v1744
    %v1747 = vunpack.c.l.s4 1983009808
    %v1748 = vunpack.c.0.s8 %v1747
    %v1749 = vlaneseq
    %v1750 = vshrl.u32 %v1749, 7
    %v1751 = vsub.s32 %v1748, %v1750
    %v1752 = vrot.slane %v1730, %v1751
    %v1754 = vunpack.c.l.s4 1983009808
    %v1755 = vunpack.c.0.s8 %v1754
    %v1756 = vlaneseq
    %v1757 = vshrl.u32 %v1756, 7
    %v1758 = vsub.s32 %v1755, %v1757
    %v1759 = vrot.slane %v1731, %v1758
    %v1760 = vcombine.low %v1738, %v1752
    %v1761 = vcombine.high %v1738, %v1752
    %v1762 = vcombine.low %v1745, %v1759
    %v1763 = vcombine.high %v1745, %v1759
    %v1764 = vcombine.low %v164, %v166
    %v1765 = vcombine.high %v164, %v166
    %v1766 = vcombine.low %v168, %v170
    %v1767 = vcombine.high %v168, %v170
    %v1769 = vunpack.c.l.s4 1983009808
    %v1770 = vunpack.c.0.s8 %v1769
    %v1771 = vlaneseq
    %v1772 = vshrl.u32 %v1771, 7
    %v1773 = vsub.s32 %v1770, %v1772
    %v1774 = vrot.slane %v1764, %v1773
    %v1776 = vunpack.c.l.s4 1983009808
    %v1777 = vunpack.c.0.s8 %v1776
    %v1778 = vlaneseq
    %v1779 = vshrl.u32 %v1778, 7
    %v1780 = vsub.s32 %v1777, %v1779
    %v1781 = vrot.slane %v1765, %v1780
    %v1783 = vunpack.c.l.s4 1983009808
    %v1784 = vunpack.c.0.s8 %v1783
    %v1785 = vlaneseq
    %v1786 = vshrl.u32 %v1785, 7
    %v1787 = vsub.s32 %v1784, %v1786
    %v1788 = vrot.slane %v1766, %v1787
    %v1790 = vunpack.c.l.s4 1983009808
    %v1791 = vunpack.c.0.s8 %v1790
    %v1792 = vlaneseq
    %v1793 = vshrl.u32 %v1792, 7
    %v1794 = vsub.s32 %v1791, %v1793
    %v1795 = vrot.slane %v1767, %v1794
    %v1796 = vcombine.low %v1774, %v1788
    %v1797 = vcombine.high %v1774, %v1788
    %v1798 = vcombine.low %v1781, %v1795
    %v1799 = vcombine.high %v1781, %v1795
    %v1800 = vcombine.low %v165, %v167
    %v1801 = vcombine.high %v165, %v167
    %v1802 = vcombine.low %v169, %v171
    %v1803 = vcombine.high %v169, %v171
    %v1805 = vunpack.c.l.s4 1983009808
    %v1806 = vunpack.c.0.s8 %v1805
    %v1807 = vlaneseq
    %v1808 = vshrl.u32 %v1807, 7
    %v1809 = vsub.s32 %v1806, %v1808
    %v1810 = vrot.slane %v1800, %v1809
    %v1812 = vunpack.c.l.s4 1983009808
    %v1813 = vunpack.c.0.s8 %v1812
    %v1814 = vlaneseq
    %v1815 = vshrl.u32 %v1814, 7
    %v1816 = vsub.s32 %v1813, %v1815
    %v1817 = vrot.slane %v1801, %v1816
    %v1819 = vunpack.c.l.s4 1983009808
    %v1820 = vunpack.c.0.s8 %v1819
    %v1821 = vlaneseq
    %v1822 = vshrl.u32 %v1821, 7
    %v1823 = vsub.s32 %v1820, %v1822
    %v1824 = vrot.slane %v1802, %v1823
    %v1826 = vunpack.c.l.s4 1983009808
    %v1827 = vunpack.c.0.s8 %v1826
    %v1828 = vlaneseq
    %v1829 = vshrl.u32 %v1828, 7
    %v1830 = vsub.s32 %v1827, %v1829
    %v1831 = vrot.slane %v1803, %v1830
    %v1832 = vcombine.low %v1810, %v1824
    %v1833 = vcombine.high %v1810, %v1824
    %v1834 = vcombine.low %v1817, %v1831
    %v1835 = vcombine.high %v1817, %v1831
    %v1836 = vcombine.low %v172, %v174
    %v1837 = vcombine.high %v172, %v174
    %v1838 = vcombine.low %v176, %v178
    %v1839 = vcombine.high %v176, %v178
    %v1841 = vunpack.c.l.s4 1983009808
    %v1842 = vunpack.c.0.s8 %v1841
    %v1843 = vlaneseq
    %v1844 = vshrl.u32 %v1843, 7
    %v1845 = vsub.s32 %v1842, %v1844
    %v1846 = vrot.slane %v1836, %v1845
    %v1848 = vunpack.c.l.s4 1983009808
    %v1849 = vunpack.c.0.s8 %v1848
    %v1850 = vlaneseq
    %v1851 = vshrl.u32 %v1850, 7
    %v1852 = vsub.s32 %v1849, %v1851
    %v1853 = vrot.slane %v1837, %v1852
    %v1855 = vunpack.c.l.s4 1983009808
    %v1856 = vunpack.c.0.s8 %v1855
    %v1857 = vlaneseq
    %v1858 = vshrl.u32 %v1857, 7
    %v1859 = vsub.s32 %v1856, %v1858
    %v1860 = vrot.slane %v1838, %v1859
    %v1862 = vunpack.c.l.s4 1983009808
    %v1863 = vunpack.c.0.s8 %v1862
    %v1864 = vlaneseq
    %v1865 = vshrl.u32 %v1864, 7
    %v1866 = vsub.s32 %v1863, %v1865
    %v1867 = vrot.slane %v1839, %v1866
    %v1868 = vcombine.low %v1846, %v1860
    %v1869 = vcombine.high %v1846, %v1860
    %v1870 = vcombine.low %v1853, %v1867
    %v1871 = vcombine.high %v1853, %v1867
    %v1872 = vcombine.low %v173, %v175
    %v1873 = vcombine.high %v173, %v175
    %v1874 = vcombine.low %v177, %v179
    %v1875 = vcombine.high %v177, %v179
    %v1877 = vunpack.c.l.s4 1983009808
    %v1878 = vunpack.c.0.s8 %v1877
    %v1879 = vlaneseq
    %v1880 = vshrl.u32 %v1879, 7
    %v1881 = vsub.s32 %v1878, %v1880
    %v1882 = vrot.slane %v1872, %v1881
    %v1884 = vunpack.c.l.s4 1983009808
    %v1885 = vunpack.c.0.s8 %v1884
    %v1886 = vlaneseq
    %v1887 = vshrl.u32 %v1886, 7
    %v1888 = vsub.s32 %v1885, %v1887
    %v1889 = vrot.slane %v1873, %v1888
    %v1891 = vunpack.c.l.s4 1983009808
    %v1892 = vunpack.c.0.s8 %v1891
    %v1893 = vlaneseq
    %v1894 = vshrl.u32 %v1893, 7
    %v1895 = vsub.s32 %v1892, %v1894
    %v1896 = vrot.slane %v1874, %v1895
    %v1898 = vunpack.c.l.s4 1983009808
    %v1899 = vunpack.c.0.s8 %v1898
    %v1900 = vlaneseq
    %v1901 = vshrl.u32 %v1900, 7
    %v1902 = vsub.s32 %v1899, %v1901
    %v1903 = vrot.slane %v1875, %v1902
    %v1904 = vcombine.low %v1882, %v1896
    %v1905 = vcombine.high %v1882, %v1896
    %v1906 = vcombine.low %v1889, %v1903
    %v1907 = vcombine.high %v1889, %v1903
    %v1908 = vcombine.low %v180, %v182
    %v1909 = vcombine.high %v180, %v182
    %v1910 = vcombine.low %v184, %v186
    %v1911 = vcombine.high %v184, %v186
    %v1913 = vunpack.c.l.s4 1983009808
    %v1914 = vunpack.c.0.s8 %v1913
    %v1915 = vlaneseq
    %v1916 = vshrl.u32 %v1915, 7
    %v1917 = vsub.s32 %v1914, %v1916
    %v1918 = vrot.slane %v1908, %v1917
    %v1920 = vunpack.c.l.s4 1983009808
    %v1921 = vunpack.c.0.s8 %v1920
    %v1922 = vlaneseq
    %v1923 = vshrl.u32 %v1922, 7
    %v1924 = vsub.s32 %v1921, %v1923
    %v1925 = vrot.slane %v1909, %v1924
    %v1927 = vunpack.c.l.s4 1983009808
    %v1928 = vunpack.c.0.s8 %v1927
    %v1929 = vlaneseq
    %v1930 = vshrl.u32 %v1929, 7
    %v1931 = vsub.s32 %v1928, %v1930
    %v1932 = vrot.slane %v1910, %v1931
    %v1934 = vunpack.c.l.s4 1983009808
    %v1935 = vunpack.c.0.s8 %v1934
    %v1936 = vlaneseq
    %v1937 = vshrl.u32 %v1936, 7
    %v1938 = vsub.s32 %v1935, %v1937
    %v1939 = vrot.slane %v1911, %v1938
    %v1940 = vcombine.low %v1918, %v1932
    %v1941 = vcombine.high %v1918, %v1932
    %v1942 = vcombine.low %v1925, %v1939
    %v1943 = vcombine.high %v1925, %v1939
    %v1944 = vcombine.low %v181, %v183
    %v1945 = vcombine.high %v181, %v183
    %v1946 = vcombine.low %v185, %v187
    %v1947 = vcombine.high %v185, %v187
    %v1949 = vunpack.c.l.s4 1983009808
    %v1950 = vunpack.c.0.s8 %v1949
    %v1951 = vlaneseq
    %v1952 = vshrl.u32 %v1951, 7
    %v1953 = vsub.s32 %v1950, %v1952
    %v1954 = vrot.slane %v1944, %v1953
    %v1956 = vunpack.c.l.s4 1983009808
    %v1957 = vunpack.c.0.s8 %v1956
    %v1958 = vlaneseq
    %v1959 = vshrl.u32 %v1958, 7
    %v1960 = vsub.s32 %v1957, %v1959
    %v1961 = vrot.slane %v1945, %v1960
    %v1963 = vunpack.c.l.s4 1983009808
    %v1964 = vunpack.c.0.s8 %v1963
    %v1965 = vlaneseq
    %v1966 = vshrl.u32 %v1965, 7
    %v1967 = vsub.s32 %v1964, %v1966
    %v1968 = vrot.slane %v1946, %v1967
    %v1970 = vunpack.c.l.s4 1983009808
    %v1971 = vunpack.c.0.s8 %v1970
    %v1972 = vlaneseq
    %v1973 = vshrl.u32 %v1972, 7
    %v1974 = vsub.s32 %v1971, %v1973
    %v1975 = vrot.slane %v1947, %v1974
    %v1976 = vcombine.low %v1954, %v1968
    %v1977 = vcombine.high %v1954, %v1968
    %v1978 = vcombine.low %v1961, %v1975
    %v1979 = vcombine.high %v1961, %v1975
    %v1980 = vcombine.low %v188, %v190
    %v1981 = vcombine.high %v188, %v190
    %v1982 = vcombine.low %v192, %v194
    %v1983 = vcombine.high %v192, %v194
    %v1985 = vunpack.c.l.s4 1983009808
    %v1986 = vunpack.c.0.s8 %v1985
    %v1987 = vlaneseq
    %v1988 = vshrl.u32 %v1987, 7
    %v1989 = vsub.s32 %v1986, %v1988
    %v1990 = vrot.slane %v1980, %v1989
    %v1992 = vunpack.c.l.s4 1983009808
    %v1993 = vunpack.c.0.s8 %v1992
    %v1994 = vlaneseq
    %v1995 = vshrl.u32 %v1994, 7
    %v1996 = vsub.s32 %v1993, %v1995
    %v1997 = vrot.slane %v1981, %v1996
    %v1999 = vunpack.c.l.s4 1983009808
    %v2000 = vunpack.c.0.s8 %v1999
    %v2001 = vlaneseq
    %v2002 = vshrl.u32 %v2001, 7
    %v2003 = vsub.s32 %v2000, %v2002
    %v2004 = vrot.slane %v1982, %v2003
    %v2006 = vunpack.c.l.s4 1983009808
    %v2007 = vunpack.c.0.s8 %v2006
    %v2008 = vlaneseq
    %v2009 = vshrl.u32 %v2008, 7
    %v2010 = vsub.s32 %v2007, %v2009
    %v2011 = vrot.slane %v1983, %v2010
    %v2012 = vcombine.low %v1990, %v2004
    %v2013 = vcombine.high %v1990, %v2004
    %v2014 = vcombine.low %v1997, %v2011
    %v2015 = vcombine.high %v1997, %v2011
    %v2016 = vcombine.low %v189, %v191
    %v2017 = vcombine.high %v189, %v191
    %v2018 = vcombine.low %v193, %v195
    %v2019 = vcombine.high %v193, %v195
    %v2021 = vunpack.c.l.s4 1983009808
    %v2022 = vunpack.c.0.s8 %v2021
    %v2023 = vlaneseq
    %v2024 = vshrl.u32 %v2023, 7
    %v2025 = vsub.s32 %v2022, %v2024
    %v2026 = vrot.slane %v2016, %v2025
    %v2028 = vunpack.c.l.s4 1983009808
    %v2029 = vunpack.c.0.s8 %v2028
    %v2030 = vlaneseq
    %v2031 = vshrl.u32 %v2030, 7
    %v2032 = vsub.s32 %v2029, %v2031
    %v2033 = vrot.slane %v2017, %v2032
    %v2035 = vunpack.c.l.s4 1983009808
    %v2036 = vunpack.c.0.s8 %v2035
    %v2037 = vlaneseq
    %v2038 = vshrl.u32 %v2037, 7
    %v2039 = vsub.s32 %v2036, %v2038
    %v2040 = vrot.slane %v2018, %v2039
    %v2042 = vunpack.c.l.s4 1983009808
    %v2043 = vunpack.c.0.s8 %v2042
    %v2044 = vlaneseq
    %v2045 = vshrl.u32 %v2044, 7
    %v2046 = vsub.s32 %v2043, %v2045
    %v2047 = vrot.slane %v2019, %v2046
    %v2048 = vcombine.low %v2026, %v2040
    %v2049 = vcombine.high %v2026, %v2040
    %v2050 = vcombine.low %v2033, %v2047
    %v2051 = vcombine.high %v2033, %v2047
    %v2052 = vcombine.low %v196, %v198
    %v2053 = vcombine.high %v196, %v198
    %v2054 = vcombine.low %v200, %v202
    %v2055 = vcombine.high %v200, %v202
    %v2057 = vunpack.c.l.s4 1983009808
    %v2058 = vunpack.c.0.s8 %v2057
    %v2059 = vlaneseq
    %v2060 = vshrl.u32 %v2059, 7
    %v2061 = vsub.s32 %v2058, %v2060
    %v2062 = vrot.slane %v2052, %v2061
    %v2064 = vunpack.c.l.s4 1983009808
    %v2065 = vunpack.c.0.s8 %v2064
    %v2066 = vlaneseq
    %v2067 = vshrl.u32 %v2066, 7
    %v2068 = vsub.s32 %v2065, %v2067
    %v2069 = vrot.slane %v2053, %v2068
    %v2071 = vunpack.c.l.s4 1983009808
    %v2072 = vunpack.c.0.s8 %v2071
    %v2073 = vlaneseq
    %v2074 = vshrl.u32 %v2073, 7
    %v2075 = vsub.s32 %v2072, %v2074
    %v2076 = vrot.slane %v2054, %v2075
    %v2078 = vunpack.c.l.s4 1983009808
    %v2079 = vunpack.c.0.s8 %v2078
    %v2080 = vlaneseq
    %v2081 = vshrl.u32 %v2080, 7
    %v2082 = vsub.s32 %v2079, %v2081
    %v2083 = vrot.slane %v2055, %v2082
    %v2084 = vcombine.low %v2062, %v2076
    %v2085 = vcombine.high %v2062, %v2076
    %v2086 = vcombine.low %v2069, %v2083
    %v2087 = vcombine.high %v2069, %v2083
    %v2088 = vcombine.low %v197, %v199
    %v2089 = vcombine.high %v197, %v199
    %v2090 = vcombine.low %v201, %v203
    %v2091 = vcombine.high %v201, %v203
    %v2093 = vunpack.c.l.s4 1983009808
    %v2094 = vunpack.c.0.s8 %v2093
    %v2095 = vlaneseq
    %v2096 = vshrl.u32 %v2095, 7
    %v2097 = vsub.s32 %v2094, %v2096
    %v2098 = vrot.slane %v2088, %v2097
    %v2100 = vunpack.c.l.s4 1983009808
    %v2101 = vunpack.c.0.s8 %v2100
    %v2102 = vlaneseq
    %v2103 = vshrl.u32 %v2102, 7
    %v2104 = vsub.s32 %v2101, %v2103
    %v2105 = vrot.slane %v2089, %v2104
    %v2107 = vunpack.c.l.s4 1983009808
    %v2108 = vunpack.c.0.s8 %v2107
    %v2109 = vlaneseq
    %v2110 = vshrl.u32 %v2109, 7
    %v2111 = vsub.s32 %v2108, %v2110
    %v2112 = vrot.slane %v2090, %v2111
    %v2114 = vunpack.c.l.s4 1983009808
    %v2115 = vunpack.c.0.s8 %v2114
    %v2116 = vlaneseq
    %v2117 = vshrl.u32 %v2116, 7
    %v2118 = vsub.s32 %v2115, %v2117
    %v2119 = vrot.slane %v2091, %v2118
    %v2120 = vcombine.low %v2098, %v2112
    %v2121 = vcombine.high %v2098, %v2112
    %v2122 = vcombine.low %v2105, %v2119
    %v2123 = vcombine.high %v2105, %v2119
    %v2124 = vcombine.low %v204, %v206
    %v2125 = vcombine.high %v204, %v206
    %v2126 = vcombine.low %v208, %v210
    %v2127 = vcombine.high %v208, %v210
    %v2129 = vunpack.c.l.s4 1983009808
    %v2130 = vunpack.c.0.s8 %v2129
    %v2131 = vlaneseq
    %v2132 = vshrl.u32 %v2131, 7
    %v2133 = vsub.s32 %v2130, %v2132
    %v2134 = vrot.slane %v2124, %v2133
    %v2136 = vunpack.c.l.s4 1983009808
    %v2137 = vunpack.c.0.s8 %v2136
    %v2138 = vlaneseq
    %v2139 = vshrl.u32 %v2138, 7
    %v2140 = vsub.s32 %v2137, %v2139
    %v2141 = vrot.slane %v2125, %v2140
    %v2143 = vunpack.c.l.s4 1983009808
    %v2144 = vunpack.c.0.s8 %v2143
    %v2145 = vlaneseq
    %v2146 = vshrl.u32 %v2145, 7
    %v2147 = vsub.s32 %v2144, %v2146
    %v2148 = vrot.slane %v2126, %v2147
    %v2150 = vunpack.c.l.s4 1983009808
    %v2151 = vunpack.c.0.s8 %v2150
    %v2152 = vlaneseq
    %v2153 = vshrl.u32 %v2152, 7
    %v2154 = vsub.s32 %v2151, %v2153
    %v2155 = vrot.slane %v2127, %v2154
    %v2156 = vcombine.low %v2134, %v2148
    %v2157 = vcombine.high %v2134, %v2148
    %v2158 = vcombine.low %v2141, %v2155
    %v2159 = vcombine.high %v2141, %v2155
    %v2160 = vcombine.low %v205, %v207
    %v2161 = vcombine.high %v205, %v207
    %v2162 = vcombine.low %v209, %v211
    %v2163 = vcombine.high %v209, %v211
    %v2165 = vunpack.c.l.s4 1983009808
    %v2166 = vunpack.c.0.s8 %v2165
    %v2167 = vlaneseq
    %v2168 = vshrl.u32 %v2167, 7
    %v2169 = vsub.s32 %v2166, %v2168
    %v2170 = vrot.slane %v2160, %v2169
    %v2172 = vunpack.c.l.s4 1983009808
    %v2173 = vunpack.c.0.s8 %v2172
    %v2174 = vlaneseq
    %v2175 = vshrl.u32 %v2174, 7
    %v2176 = vsub.s32 %v2173, %v2175
    %v2177 = vrot.slane %v2161, %v2176
    %v2179 = vunpack.c.l.s4 1983009808
    %v2180 = vunpack.c.0.s8 %v2179
    %v2181 = vlaneseq
    %v2182 = vshrl.u32 %v2181, 7
    %v2183 = vsub.s32 %v2180, %v2182
    %v2184 = vrot.slane %v2162, %v2183
    %v2186 = vunpack.c.l.s4 1983009808
    %v2187 = vunpack.c.0.s8 %v2186
    %v2188 = vlaneseq
    %v2189 = vshrl.u32 %v2188, 7
    %v2190 = vsub.s32 %v2187, %v2189
    %v2191 = vrot.slane %v2163, %v2190
    %v2192 = vcombine.low %v2170, %v2184
    %v2193 = vcombine.high %v2170, %v2184
    %v2194 = vcombine.low %v2177, %v2191
    %v2195 = vcombine.high %v2177, %v2191
    %v2196 = vcombine.low %v212, %v214
    %v2197 = vcombine.high %v212, %v214
    %v2198 = vcombine.low %v216, %v218
    %v2199 = vcombine.high %v216, %v218
    %v2201 = vunpack.c.l.s4 1983009808
    %v2202 = vunpack.c.0.s8 %v2201
    %v2203 = vlaneseq
    %v2204 = vshrl.u32 %v2203, 7
    %v2205 = vsub.s32 %v2202, %v2204
    %v2206 = vrot.slane %v2196, %v2205
    %v2208 = vunpack.c.l.s4 1983009808
    %v2209 = vunpack.c.0.s8 %v2208
    %v2210 = vlaneseq
    %v2211 = vshrl.u32 %v2210, 7
    %v2212 = vsub.s32 %v2209, %v2211
    %v2213 = vrot.slane %v2197, %v2212
    %v2215 = vunpack.c.l.s4 1983009808
    %v2216 = vunpack.c.0.s8 %v2215
    %v2217 = vlaneseq
    %v2218 = vshrl.u32 %v2217, 7
    %v2219 = vsub.s32 %v2216, %v2218
    %v2220 = vrot.slane %v2198, %v2219
    %v2222 = vunpack.c.l.s4 1983009808
    %v2223 = vunpack.c.0.s8 %v2222
    %v2224 = vlaneseq
    %v2225 = vshrl.u32 %v2224, 7
    %v2226 = vsub.s32 %v2223, %v2225
    %v2227 = vrot.slane %v2199, %v2226
    %v2228 = vcombine.low %v2206, %v2220
    %v2229 = vcombine.high %v2206, %v2220
    %v2230 = vcombine.low %v2213, %v2227
    %v2231 = vcombine.high %v2213, %v2227
    %v2232 = vcombine.low %v213, %v215
    %v2233 = vcombine.high %v213, %v215
    %v2234 = vcombine.low %v217, %v219
    %v2235 = vcombine.high %v217, %v219
    %v2237 = vunpack.c.l.s4 1983009808
    %v2238 = vunpack.c.0.s8 %v2237
    %v2239 = vlaneseq
    %v2240 = vshrl.u32 %v2239, 7
    %v2241 = vsub.s32 %v2238, %v2240
    %v2242 = vrot.slane %v2232, %v2241
    %v2244 = vunpack.c.l.s4 1983009808
    %v2245 = vunpack.c.0.s8 %v2244
    %v2246 = vlaneseq
    %v2247 = vshrl.u32 %v2246, 7
    %v2248 = vsub.s32 %v2245, %v2247
    %v2249 = vrot.slane %v2233, %v2248
    %v2251 = vunpack.c.l.s4 1983009808
    %v2252 = vunpack.c.0.s8 %v2251
    %v2253 = vlaneseq
    %v2254 = vshrl.u32 %v2253, 7
    %v2255 = vsub.s32 %v2252, %v2254
    %v2256 = vrot.slane %v2234, %v2255
    %v2258 = vunpack.c.l.s4 1983009808
    %v2259 = vunpack.c.0.s8 %v2258
    %v2260 = vlaneseq
    %v2261 = vshrl.u32 %v2260, 7
    %v2262 = vsub.s32 %v2259, %v2261
    %v2263 = vrot.slane %v2235, %v2262
    %v2264 = vcombine.low %v2242, %v2256
    %v2265 = vcombine.high %v2242, %v2256
    %v2266 = vcombine.low %v2249, %v2263
    %v2267 = vcombine.high %v2249, %v2263
    %v2268 = vcombine.low %v220, %v222
    %v2269 = vcombine.high %v220, %v222
    %v2270 = vcombine.low %v224, %v226
    %v2271 = vcombine.high %v224, %v226
    %v2273 = vunpack.c.l.s4 1983009808
    %v2274 = vunpack.c.0.s8 %v2273
    %v2275 = vlaneseq
    %v2276 = vshrl.u32 %v2275, 7
    %v2277 = vsub.s32 %v2274, %v2276
    %v2278 = vrot.slane %v2268, %v2277
    %v2280 = vunpack.c.l.s4 1983009808
    %v2281 = vunpack.c.0.s8 %v2280
    %v2282 = vlaneseq
    %v2283 = vshrl.u32 %v2282, 7
    %v2284 = vsub.s32 %v2281, %v2283
    %v2285 = vrot.slane %v2269, %v2284
    %v2287 = vunpack.c.l.s4 1983009808
    %v2288 = vunpack.c.0.s8 %v2287
    %v2289 = vlaneseq
    %v2290 = vshrl.u32 %v2289, 7
    %v2291 = vsub.s32 %v2288, %v2290
    %v2292 = vrot.slane %v2270, %v2291
    %v2294 = vunpack.c.l.s4 1983009808
    %v2295 = vunpack.c.0.s8 %v2294
    %v2296 = vlaneseq
    %v2297 = vshrl.u32 %v2296, 7
    %v2298 = vsub.s32 %v2295, %v2297
    %v2299 = vrot.slane %v2271, %v2298
    %v2300 = vcombine.low %v2278, %v2292
    %v2301 = vcombine.high %v2278, %v2292
    %v2302 = vcombine.low %v2285, %v2299
    %v2303 = vcombine.high %v2285, %v2299
    %v2304 = vcombine.low %v221, %v223
    %v2305 = vcombine.high %v221, %v223
    %v2306 = vcombine.low %v225, %v227
    %v2307 = vcombine.high %v225, %v227
    %v2309 = vunpack.c.l.s4 1983009808
    %v2310 = vunpack.c.0.s8 %v2309
    %v2311 = vlaneseq
    %v2312 = vshrl.u32 %v2311, 7
    %v2313 = vsub.s32 %v2310, %v2312
    %v2314 = vrot.slane %v2304, %v2313
    %v2316 = vunpack.c.l.s4 1983009808
    %v2317 = vunpack.c.0.s8 %v2316
    %v2318 = vlaneseq
    %v2319 = vshrl.u32 %v2318, 7
    %v2320 = vsub.s32 %v2317, %v2319
    %v2321 = vrot.slane %v2305, %v2320
    %v2323 = vunpack.c.l.s4 1983009808
    %v2324 = vunpack.c.0.s8 %v2323
    %v2325 = vlaneseq
    %v2326 = vshrl.u32 %v2325, 7
    %v2327 = vsub.s32 %v2324, %v2326
    %v2328 = vrot.slane %v2306, %v2327
    %v2330 = vunpack.c.l.s4 1983009808
    %v2331 = vunpack.c.0.s8 %v2330
    %v2332 = vlaneseq
    %v2333 = vshrl.u32 %v2332, 7
    %v2334 = vsub.s32 %v2331, %v2333
    %v2335 = vrot.slane %v2307, %v2334
    %v2336 = vcombine.low %v2314, %v2328
    %v2337 = vcombine.high %v2314, %v2328
    %v2338 = vcombine.low %v2321, %v2335
    %v2339 = vcombine.high %v2321, %v2335
    %v2340 = vcombine.low %v228, %v230
    %v2341 = vcombine.high %v228, %v230
    %v2342 = vcombine.low %v232, %v234
    %v2343 = vcombine.high %v232, %v234
    %v2345 = vunpack.c.l.s4 1983009808
    %v2346 = vunpack.c.0.s8 %v2345
    %v2347 = vlaneseq
    %v2348 = vshrl.u32 %v2347, 7
    %v2349 = vsub.s32 %v2346, %v2348
    %v2350 = vrot.slane %v2340, %v2349
    %v2352 = vunpack.c.l.s4 1983009808
    %v2353 = vunpack.c.0.s8 %v2352
    %v2354 = vlaneseq
    %v2355 = vshrl.u32 %v2354, 7
    %v2356 = vsub.s32 %v2353, %v2355
    %v2357 = vrot.slane %v2341, %v2356
    %v2359 = vunpack.c.l.s4 1983009808
    %v2360 = vunpack.c.0.s8 %v2359
    %v2361 = vlaneseq
    %v2362 = vshrl.u32 %v2361, 7
    %v2363 = vsub.s32 %v2360, %v2362
    %v2364 = vrot.slane %v2342, %v2363
    %v2366 = vunpack.c.l.s4 1983009808
    %v2367 = vunpack.c.0.s8 %v2366
    %v2368 = vlaneseq
    %v2369 = vshrl.u32 %v2368, 7
    %v2370 = vsub.s32 %v2367, %v2369
    %v2371 = vrot.slane %v2343, %v2370
    %v2372 = vcombine.low %v2350, %v2364
    %v2373 = vcombine.high %v2350, %v2364
    %v2374 = vcombine.low %v2357, %v2371
    %v2375 = vcombine.high %v2357, %v2371
    %v2376 = vcombine.low %v229, %v231
    %v2377 = vcombine.high %v229, %v231
    %v2378 = vcombine.low %v233, %v235
    %v2379 = vcombine.high %v233, %v235
    %v2381 = vunpack.c.l.s4 1983009808
    %v2382 = vunpack.c.0.s8 %v2381
    %v2383 = vlaneseq
    %v2384 = vshrl.u32 %v2383, 7
    %v2385 = vsub.s32 %v2382, %v2384
    %v2386 = vrot.slane %v2376, %v2385
    %v2388 = vunpack.c.l.s4 1983009808
    %v2389 = vunpack.c.0.s8 %v2388
    %v2390 = vlaneseq
    %v2391 = vshrl.u32 %v2390, 7
    %v2392 = vsub.s32 %v2389, %v2391
    %v2393 = vrot.slane %v2377, %v2392
    %v2395 = vunpack.c.l.s4 1983009808
    %v2396 = vunpack.c.0.s8 %v2395
    %v2397 = vlaneseq
    %v2398 = vshrl.u32 %v2397, 7
    %v2399 = vsub.s32 %v2396, %v2398
    %v2400 = vrot.slane %v2378, %v2399
    %v2402 = vunpack.c.l.s4 1983009808
    %v2403 = vunpack.c.0.s8 %v2402
    %v2404 = vlaneseq
    %v2405 = vshrl.u32 %v2404, 7
    %v2406 = vsub.s32 %v2403, %v2405
    %v2407 = vrot.slane %v2379, %v2406
    %v2408 = vcombine.low %v2386, %v2400
    %v2409 = vcombine.high %v2386, %v2400
    %v2410 = vcombine.low %v2393, %v2407
    %v2411 = vcombine.high %v2393, %v2407
    %v2412 = vcombine.low %v236, %v238
    %v2413 = vcombine.high %v236, %v238
    %v2414 = vcombine.low %v240, %v242
    %v2415 = vcombine.high %v240, %v242
    %v2417 = vunpack.c.l.s4 1983009808
    %v2418 = vunpack.c.0.s8 %v2417
    %v2419 = vlaneseq
    %v2420 = vshrl.u32 %v2419, 7
    %v2421 = vsub.s32 %v2418, %v2420
    %v2422 = vrot.slane %v2412, %v2421
    %v2424 = vunpack.c.l.s4 1983009808
    %v2425 = vunpack.c.0.s8 %v2424
    %v2426 = vlaneseq
    %v2427 = vshrl.u32 %v2426, 7
    %v2428 = vsub.s32 %v2425, %v2427
    %v2429 = vrot.slane %v2413, %v2428
    %v2431 = vunpack.c.l.s4 1983009808
    %v2432 = vunpack.c.0.s8 %v2431
    %v2433 = vlaneseq
    %v2434 = vshrl.u32 %v2433, 7
    %v2435 = vsub.s32 %v2432, %v2434
    %v2436 = vrot.slane %v2414, %v2435
    %v2438 = vunpack.c.l.s4 1983009808
    %v2439 = vunpack.c.0.s8 %v2438
    %v2440 = vlaneseq
    %v2441 = vshrl.u32 %v2440, 7
    %v2442 = vsub.s32 %v2439, %v2441
    %v2443 = vrot.slane %v2415, %v2442
    %v2444 = vcombine.low %v2422, %v2436
    %v2445 = vcombine.high %v2422, %v2436
    %v2446 = vcombine.low %v2429, %v2443
    %v2447 = vcombine.high %v2429, %v2443
    %v2448 = vcombine.low %v237, %v239
    %v2449 = vcombine.high %v237, %v239
    %v2450 = vcombine.low %v241, %v243
    %v2451 = vcombine.high %v241, %v243
    %v2453 = vunpack.c.l.s4 1983009808
    %v2454 = vunpack.c.0.s8 %v2453
    %v2455 = vlaneseq
    %v2456 = vshrl.u32 %v2455, 7
    %v2457 = vsub.s32 %v2454, %v2456
    %v2458 = vrot.slane %v2448, %v2457
    %v2460 = vunpack.c.l.s4 1983009808
    %v2461 = vunpack.c.0.s8 %v2460
    %v2462 = vlaneseq
    %v2463 = vshrl.u32 %v2462, 7
    %v2464 = vsub.s32 %v2461, %v2463
    %v2465 = vrot.slane %v2449, %v2464
    %v2467 = vunpack.c.l.s4 1983009808
    %v2468 = vunpack.c.0.s8 %v2467
    %v2469 = vlaneseq
    %v2470 = vshrl.u32 %v2469, 7
    %v2471 = vsub.s32 %v2468, %v2470
    %v2472 = vrot.slane %v2450, %v2471
    %v2474 = vunpack.c.l.s4 1983009808
    %v2475 = vunpack.c.0.s8 %v2474
    %v2476 = vlaneseq
    %v2477 = vshrl.u32 %v2476, 7
    %v2478 = vsub.s32 %v2475, %v2477
    %v2479 = vrot.slane %v2451, %v2478
    %v2480 = vcombine.low %v2458, %v2472
    %v2481 = vcombine.high %v2458, %v2472
    %v2482 = vcombine.low %v2465, %v2479
    %v2483 = vcombine.high %v2465, %v2479
    %v2484 = vcombine.low %v244, %v246
    %v2485 = vcombine.high %v244, %v246
    %v2486 = vcombine.low %v248, %v250
    %v2487 = vcombine.high %v248, %v250
    %v2489 = vunpack.c.l.s4 1983009808
    %v2490 = vunpack.c.0.s8 %v2489
    %v2491 = vlaneseq
    %v2492 = vshrl.u32 %v2491, 7
    %v2493 = vsub.s32 %v2490, %v2492
    %v2494 = vrot.slane %v2484, %v2493
    %v2496 = vunpack.c.l.s4 1983009808
    %v2497 = vunpack.c.0.s8 %v2496
    %v2498 = vlaneseq
    %v2499 = vshrl.u32 %v2498, 7
    %v2500 = vsub.s32 %v2497, %v2499
    %v2501 = vrot.slane %v2485, %v2500
    %v2503 = vunpack.c.l.s4 1983009808
    %v2504 = vunpack.c.0.s8 %v2503
    %v2505 = vlaneseq
    %v2506 = vshrl.u32 %v2505, 7
    %v2507 = vsub.s32 %v2504, %v2506
    %v2508 = vrot.slane %v2486, %v2507
    %v2510 = vunpack.c.l.s4 1983009808
    %v2511 = vunpack.c.0.s8 %v2510
    %v2512 = vlaneseq
    %v2513 = vshrl.u32 %v2512, 7
    %v2514 = vsub.s32 %v2511, %v2513
    %v2515 = vrot.slane %v2487, %v2514
    %v2516 = vcombine.low %v2494, %v2508
    %v2517 = vcombine.high %v2494, %v2508
    %v2518 = vcombine.low %v2501, %v2515
    %v2519 = vcombine.high %v2501, %v2515
    %v2520 = vcombine.low %v245, %v247
    %v2521 = vcombine.high %v245, %v247
    %v2522 = vcombine.low %v249, %v251
    %v2523 = vcombine.high %v249, %v251
    %v2525 = vunpack.c.l.s4 1983009808
    %v2526 = vunpack.c.0.s8 %v2525
    %v2527 = vlaneseq
    %v2528 = vshrl.u32 %v2527, 7
    %v2529 = vsub.s32 %v2526, %v2528
    %v2530 = vrot.slane %v2520, %v2529
    %v2532 = vunpack.c.l.s4 1983009808
    %v2533 = vunpack.c.0.s8 %v2532
    %v2534 = vlaneseq
    %v2535 = vshrl.u32 %v2534, 7
    %v2536 = vsub.s32 %v2533, %v2535
    %v2537 = vrot.slane %v2521, %v2536
    %v2539 = vunpack.c.l.s4 1983009808
    %v2540 = vunpack.c.0.s8 %v2539
    %v2541 = vlaneseq
    %v2542 = vshrl.u32 %v2541, 7
    %v2543 = vsub.s32 %v2540, %v2542
    %v2544 = vrot.slane %v2522, %v2543
    %v2546 = vunpack.c.l.s4 1983009808
    %v2547 = vunpack.c.0.s8 %v2546
    %v2548 = vlaneseq
    %v2549 = vshrl.u32 %v2548, 7
    %v2550 = vsub.s32 %v2547, %v2549
    %v2551 = vrot.slane %v2523, %v2550
    %v2552 = vcombine.low %v2530, %v2544
    %v2553 = vcombine.high %v2530, %v2544
    %v2554 = vcombine.low %v2537, %v2551
    %v2555 = vcombine.high %v2537, %v2551
    %v2556 = vcombine.low %v252, %v254
    %v2557 = vcombine.high %v252, %v254
    %v2558 = vcombine.low %v256, %v258
    %v2559 = vcombine.high %v256, %v258
    %v2561 = vunpack.c.l.s4 1983009808
    %v2562 = vunpack.c.0.s8 %v2561
    %v2563 = vlaneseq
    %v2564 = vshrl.u32 %v2563, 7
    %v2565 = vsub.s32 %v2562, %v2564
    %v2566 = vrot.slane %v2556, %v2565
    %v2568 = vunpack.c.l.s4 1983009808
    %v2569 = vunpack.c.0.s8 %v2568
    %v2570 = vlaneseq
    %v2571 = vshrl.u32 %v2570, 7
    %v2572 = vsub.s32 %v2569, %v2571
    %v2573 = vrot.slane %v2557, %v2572
    %v2575 = vunpack.c.l.s4 1983009808
    %v2576 = vunpack.c.0.s8 %v2575
    %v2577 = vlaneseq
    %v2578 = vshrl.u32 %v2577, 7
    %v2579 = vsub.s32 %v2576, %v2578
    %v2580 = vrot.slane %v2558, %v2579
    %v2582 = vunpack.c.l.s4 1983009808
    %v2583 = vunpack.c.0.s8 %v2582
    %v2584 = vlaneseq
    %v2585 = vshrl.u32 %v2584, 7
    %v2586 = vsub.s32 %v2583, %v2585
    %v2587 = vrot.slane %v2559, %v2586
    %v2588 = vcombine.low %v2566, %v2580
    %v2589 = vcombine.high %v2566, %v2580
    %v2590 = vcombine.low %v2573, %v2587
    %v2591 = vcombine.high %v2573, %v2587
    %v2592 = vcombine.low %v253, %v255
    %v2593 = vcombine.high %v253, %v255
    %v2594 = vcombine.low %v257, %v259
    %v2595 = vcombine.high %v257, %v259
    %v2597 = vunpack.c.l.s4 1983009808
    %v2598 = vunpack.c.0.s8 %v2597
    %v2599 = vlaneseq
    %v2600 = vshrl.u32 %v2599, 7
    %v2601 = vsub.s32 %v2598, %v2600
    %v2602 = vrot.slane %v2592, %v2601
    %v2604 = vunpack.c.l.s4 1983009808
    %v2605 = vunpack.c.0.s8 %v2604
    %v2606 = vlaneseq
    %v2607 = vshrl.u32 %v2606, 7
    %v2608 = vsub.s32 %v2605, %v2607
    %v2609 = vrot.slane %v2593, %v2608
    %v2611 = vunpack.c.l.s4 1983009808
    %v2612 = vunpack.c.0.s8 %v2611
    %v2613 = vlaneseq
    %v2614 = vshrl.u32 %v2613, 7
    %v2615 = vsub.s32 %v2612, %v2614
    %v2616 = vrot.slane %v2594, %v2615
    %v2618 = vunpack.c.l.s4 1983009808
    %v2619 = vunpack.c.0.s8 %v2618
    %v2620 = vlaneseq
    %v2621 = vshrl.u32 %v2620, 7
    %v2622 = vsub.s32 %v2619, %v2621
    %v2623 = vrot.slane %v2595, %v2622
    %v2624 = vcombine.low %v2602, %v2616
    %v2625 = vcombine.high %v2602, %v2616
    %v2626 = vcombine.low %v2609, %v2623
    %v2627 = vcombine.high %v2609, %v2623
    %v2628 = vcombine.low %v260, %v262
    %v2629 = vcombine.high %v260, %v262
    %v2630 = vcombine.low %v264, %v266
    %v2631 = vcombine.high %v264, %v266
    %v2633 = vunpack.c.l.s4 1983009808
    %v2634 = vunpack.c.0.s8 %v2633
    %v2635 = vlaneseq
    %v2636 = vshrl.u32 %v2635, 7
    %v2637 = vsub.s32 %v2634, %v2636
    %v2638 = vrot.slane %v2628, %v2637
    %v2640 = vunpack.c.l.s4 1983009808
    %v2641 = vunpack.c.0.s8 %v2640
    %v2642 = vlaneseq
    %v2643 = vshrl.u32 %v2642, 7
    %v2644 = vsub.s32 %v2641, %v2643
    %v2645 = vrot.slane %v2629, %v2644
    %v2647 = vunpack.c.l.s4 1983009808
    %v2648 = vunpack.c.0.s8 %v2647
    %v2649 = vlaneseq
    %v2650 = vshrl.u32 %v2649, 7
    %v2651 = vsub.s32 %v2648, %v2650
    %v2652 = vrot.slane %v2630, %v2651
    %v2654 = vunpack.c.l.s4 1983009808
    %v2655 = vunpack.c.0.s8 %v2654
    %v2656 = vlaneseq
    %v2657 = vshrl.u32 %v2656, 7
    %v2658 = vsub.s32 %v2655, %v2657
    %v2659 = vrot.slane %v2631, %v2658
    %v2660 = vcombine.low %v2638, %v2652
    %v2661 = vcombine.high %v2638, %v2652
    %v2662 = vcombine.low %v2645, %v2659
    %v2663 = vcombine.high %v2645, %v2659
    %v2664 = vcombine.low %v261, %v263
    %v2665 = vcombine.high %v261, %v263
    %v2666 = vcombine.low %v265, %v267
    %v2667 = vcombine.high %v265, %v267
    %v2669 = vunpack.c.l.s4 1983009808
    %v2670 = vunpack.c.0.s8 %v2669
    %v2671 = vlaneseq
    %v2672 = vshrl.u32 %v2671, 7
    %v2673 = vsub.s32 %v2670, %v2672
    %v2674 = vrot.slane %v2664, %v2673
    %v2676 = vunpack.c.l.s4 1983009808
    %v2677 = vunpack.c.0.s8 %v2676
    %v2678 = vlaneseq
    %v2679 = vshrl.u32 %v2678, 7
    %v2680 = vsub.s32 %v2677, %v2679
    %v2681 = vrot.slane %v2665, %v2680
    %v2683 = vunpack.c.l.s4 1983009808
    %v2684 = vunpack.c.0.s8 %v2683
    %v2685 = vlaneseq
    %v2686 = vshrl.u32 %v2685, 7
    %v2687 = vsub.s32 %v2684, %v2686
    %v2688 = vrot.slane %v2666, %v2687
    %v2690 = vunpack.c.l.s4 1983009808
    %v2691 = vunpack.c.0.s8 %v2690
    %v2692 = vlaneseq
    %v2693 = vshrl.u32 %v2692, 7
    %v2694 = vsub.s32 %v2691, %v2693
    %v2695 = vrot.slane %v2667, %v2694
    %v2696 = vcombine.low %v2674, %v2688
    %v2697 = vcombine.high %v2674, %v2688
    %v2698 = vcombine.low %v2681, %v2695
    %v2699 = vcombine.high %v2681, %v2695
    %v2700 = vcombine.low %v268, %v270
    %v2701 = vcombine.high %v268, %v270
    %v2702 = vcombine.low %v272, %v274
    %v2703 = vcombine.high %v272, %v274
    %v2705 = vunpack.c.l.s4 1983009808
    %v2706 = vunpack.c.0.s8 %v2705
    %v2707 = vlaneseq
    %v2708 = vshrl.u32 %v2707, 7
    %v2709 = vsub.s32 %v2706, %v2708
    %v2710 = vrot.slane %v2700, %v2709
    %v2712 = vunpack.c.l.s4 1983009808
    %v2713 = vunpack.c.0.s8 %v2712
    %v2714 = vlaneseq
    %v2715 = vshrl.u32 %v2714, 7
    %v2716 = vsub.s32 %v2713, %v2715
    %v2717 = vrot.slane %v2701, %v2716
    %v2719 = vunpack.c.l.s4 1983009808
    %v2720 = vunpack.c.0.s8 %v2719
    %v2721 = vlaneseq
    %v2722 = vshrl.u32 %v2721, 7
    %v2723 = vsub.s32 %v2720, %v2722
    %v2724 = vrot.slane %v2702, %v2723
    %v2726 = vunpack.c.l.s4 1983009808
    %v2727 = vunpack.c.0.s8 %v2726
    %v2728 = vlaneseq
    %v2729 = vshrl.u32 %v2728, 7
    %v2730 = vsub.s32 %v2727, %v2729
    %v2731 = vrot.slane %v2703, %v2730
    %v2732 = vcombine.low %v2710, %v2724
    %v2733 = vcombine.high %v2710, %v2724
    %v2734 = vcombine.low %v2717, %v2731
    %v2735 = vcombine.high %v2717, %v2731
    %v2736 = vcombine.low %v269, %v271
    %v2737 = vcombine.high %v269, %v271
    %v2738 = vcombine.low %v273, %v275
    %v2739 = vcombine.high %v273, %v275
    %v2741 = vunpack.c.l.s4 1983009808
    %v2742 = vunpack.c.0.s8 %v2741
    %v2743 = vlaneseq
    %v2744 = vshrl.u32 %v2743, 7
    %v2745 = vsub.s32 %v2742, %v2744
    %v2746 = vrot.slane %v2736, %v2745
    %v2748 = vunpack.c.l.s4 1983009808
    %v2749 = vunpack.c.0.s8 %v2748
    %v2750 = vlaneseq
    %v2751 = vshrl.u32 %v2750, 7
    %v2752 = vsub.s32 %v2749, %v2751
    %v2753 = vrot.slane %v2737, %v2752
    %v2755 = vunpack.c.l.s4 1983009808
    %v2756 = vunpack.c.0.s8 %v2755
    %v2757 = vlaneseq
    %v2758 = vshrl.u32 %v2757, 7
    %v2759 = vsub.s32 %v2756, %v2758
    %v2760 = vrot.slane %v2738, %v2759
    %v2762 = vunpack.c.l.s4 1983009808
    %v2763 = vunpack.c.0.s8 %v2762
    %v2764 = vlaneseq
    %v2765 = vshrl.u32 %v2764, 7
    %v2766 = vsub.s32 %v2763, %v2765
    %v2767 = vrot.slane %v2739, %v2766
    %v2768 = vcombine.low %v2746, %v2760
    %v2769 = vcombine.high %v2746, %v2760
    %v2770 = vcombine.low %v2753, %v2767
    %v2771 = vcombine.high %v2753, %v2767
    %v2772 = vcombine.low %v276, %v278
    %v2773 = vcombine.high %v276, %v278
    %v2774 = vcombine.low %v280, %v282
    %v2775 = vcombine.high %v280, %v282
    %v2777 = vunpack.c.l.s4 1983009808
    %v2778 = vunpack.c.0.s8 %v2777
    %v2779 = vlaneseq
    %v2780 = vshrl.u32 %v2779, 7
    %v2781 = vsub.s32 %v2778, %v2780
    %v2782 = vrot.slane %v2772, %v2781
    %v2784 = vunpack.c.l.s4 1983009808
    %v2785 = vunpack.c.0.s8 %v2784
    %v2786 = vlaneseq
    %v2787 = vshrl.u32 %v2786, 7
    %v2788 = vsub.s32 %v2785, %v2787
    %v2789 = vrot.slane %v2773, %v2788
    %v2791 = vunpack.c.l.s4 1983009808
    %v2792 = vunpack.c.0.s8 %v2791
    %v2793 = vlaneseq
    %v2794 = vshrl.u32 %v2793, 7
    %v2795 = vsub.s32 %v2792, %v2794
    %v2796 = vrot.slane %v2774, %v2795
    %v2798 = vunpack.c.l.s4 1983009808
    %v2799 = vunpack.c.0.s8 %v2798
    %v2800 = vlaneseq
    %v2801 = vshrl.u32 %v2800, 7
    %v2802 = vsub.s32 %v2799, %v2801
    %v2803 = vrot.slane %v2775, %v2802
    %v2804 = vcombine.low %v2782, %v2796
    %v2805 = vcombine.high %v2782, %v2796
    %v2806 = vcombine.low %v2789, %v2803
    %v2807 = vcombine.high %v2789, %v2803
    %v2808 = vcombine.low %v277, %v279
    %v2809 = vcombine.high %v277, %v279
    %v2810 = vcombine.low %v281, %v283
    %v2811 = vcombine.high %v281, %v283
    %v2813 = vunpack.c.l.s4 1983009808
    %v2814 = vunpack.c.0.s8 %v2813
    %v2815 = vlaneseq
    %v2816 = vshrl.u32 %v2815, 7
    %v2817 = vsub.s32 %v2814, %v2816
    %v2818 = vrot.slane %v2808, %v2817
    %v2820 = vunpack.c.l.s4 1983009808
    %v2821 = vunpack.c.0.s8 %v2820
    %v2822 = vlaneseq
    %v2823 = vshrl.u32 %v2822, 7
    %v2824 = vsub.s32 %v2821, %v2823
    %v2825 = vrot.slane %v2809, %v2824
    %v2827 = vunpack.c.l.s4 1983009808
    %v2828 = vunpack.c.0.s8 %v2827
    %v2829 = vlaneseq
    %v2830 = vshrl.u32 %v2829, 7
    %v2831 = vsub.s32 %v2828, %v2830
    %v2832 = vrot.slane %v2810, %v2831
    %v2834 = vunpack.c.l.s4 1983009808
    %v2835 = vunpack.c.0.s8 %v2834
    %v2836 = vlaneseq
    %v2837 = vshrl.u32 %v2836, 7
    %v2838 = vsub.s32 %v2835, %v2837
    %v2839 = vrot.slane %v2811, %v2838
    %v2840 = vcombine.low %v2818, %v2832
    %v2841 = vcombine.high %v2818, %v2832
    %v2842 = vcombine.low %v2825, %v2839
    %v2843 = vcombine.high %v2825, %v2839
    %v3100 = vpack.c.bf16 %v644, %v572
    %v3101 = vpack.c.bf16 %v645, %v573
    %v3102 = vpack.c.bf16 %v646, %v574
    %v3103 = vpack.c.bf16 %v647, %v575
    %v3104 = vpack.c.bf16 %v680, %v608
    %v3105 = vpack.c.bf16 %v681, %v609
    %v3106 = vpack.c.bf16 %v682, %v610
    %v3107 = vpack.c.bf16 %v683, %v611
    %v3108 = vpack.c.bf16 %v788, %v716
    %v3109 = vpack.c.bf16 %v789, %v717
    %v3110 = vpack.c.bf16 %v790, %v718
    %v3111 = vpack.c.bf16 %v791, %v719
    %v3112 = vpack.c.bf16 %v824, %v752
    %v3113 = vpack.c.bf16 %v825, %v753
    %v3114 = vpack.c.bf16 %v826, %v754
    %v3115 = vpack.c.bf16 %v827, %v755
    %v3116 = vpack.c.bf16 %v932, %v860
    %v3117 = vpack.c.bf16 %v933, %v861
    %v3118 = vpack.c.bf16 %v934, %v862
    %v3119 = vpack.c.bf16 %v935, %v863
    %v3120 = vpack.c.bf16 %v968, %v896
    %v3121 = vpack.c.bf16 %v969, %v897
    %v3122 = vpack.c.bf16 %v970, %v898
    %v3123 = vpack.c.bf16 %v971, %v899
    %v3124 = vpack.c.bf16 %v1076, %v1004
    %v3125 = vpack.c.bf16 %v1077, %v1005
    %v3126 = vpack.c.bf16 %v1078, %v1006
    %v3127 = vpack.c.bf16 %v1079, %v1007
    %v3128 = vpack.c.bf16 %v1112, %v1040
    %v3129 = vpack.c.bf16 %v1113, %v1041
    %v3130 = vpack.c.bf16 %v1114, %v1042
    %v3131 = vpack.c.bf16 %v1115, %v1043
    %v3132 = vpack.c.bf16 %v1220, %v1148
    %v3133 = vpack.c.bf16 %v1221, %v1149
    %v3134 = vpack.c.bf16 %v1222, %v1150
    %v3135 = vpack.c.bf16 %v1223, %v1151
    %v3136 = vpack.c.bf16 %v1256, %v1184
    %v3137 = vpack.c.bf16 %v1257, %v1185
    %v3138 = vpack.c.bf16 %v1258, %v1186
    %v3139 = vpack.c.bf16 %v1259, %v1187
    %v3140 = vpack.c.bf16 %v1364, %v1292
    %v3141 = vpack.c.bf16 %v1365, %v1293
    %v3142 = vpack.c.bf16 %v1366, %v1294
    %v3143 = vpack.c.bf16 %v1367, %v1295
    %v3144 = vpack.c.bf16 %v1400, %v1328
    %v3145 = vpack.c.bf16 %v1401, %v1329
    %v3146 = vpack.c.bf16 %v1402, %v1330
    %v3147 = vpack.c.bf16 %v1403, %v1331
    %v3148 = vpack.c.bf16 %v1508, %v1436
    %v3149 = vpack.c.bf16 %v1509, %v1437
    %v3150 = vpack.c.bf16 %v1510, %v1438
    %v3151 = vpack.c.bf16 %v1511, %v1439
    %v3152 = vpack.c.bf16 %v1544, %v1472
    %v3153 = vpack.c.bf16 %v1545, %v1473
    %v3154 = vpack.c.bf16 %v1546, %v1474
    %v3155 = vpack.c.bf16 %v1547, %v1475
    %v3156 = vpack.c.bf16 %v1652, %v1580
    %v3157 = vpack.c.bf16 %v1653, %v1581
    %v3158 = vpack.c.bf16 %v1654, %v1582
    %v3159 = vpack.c.bf16 %v1655, %v1583
    %v3160 = vpack.c.bf16 %v1688, %v1616
    %v3161 = vpack.c.bf16 %v1689, %v1617
    %v3162 = vpack.c.bf16 %v1690, %v1618
    %v3163 = vpack.c.bf16 %v1691, %v1619
    %v3164 = vpack.c.bf16 %v1796, %v1724
    %v3165 = vpack.c.bf16 %v1797, %v1725
    %v3166 = vpack.c.bf16 %v1798, %v1726
    %v3167 = vpack.c.bf16 %v1799, %v1727
    %v3168 = vpack.c.bf16 %v1832, %v1760
    %v3169 = vpack.c.bf16 %v1833, %v1761
    %v3170 = vpack.c.bf16 %v1834, %v1762
    %v3171 = vpack.c.bf16 %v1835, %v1763
    %v3172 = vpack.c.bf16 %v1940, %v1868
    %v3173 = vpack.c.bf16 %v1941, %v1869
    %v3174 = vpack.c.bf16 %v1942, %v1870
    %v3175 = vpack.c.bf16 %v1943, %v1871
    %v3176 = vpack.c.bf16 %v1976, %v1904
    %v3177 = vpack.c.bf16 %v1977, %v1905
    %v3178 = vpack.c.bf16 %v1978, %v1906
    %v3179 = vpack.c.bf16 %v1979, %v1907
    %v3180 = vpack.c.bf16 %v2084, %v2012
    %v3181 = vpack.c.bf16 %v2085, %v2013
    %v3182 = vpack.c.bf16 %v2086, %v2014
    %v3183 = vpack.c.bf16 %v2087, %v2015
    %v3184 = vpack.c.bf16 %v2120, %v2048
    %v3185 = vpack.c.bf16 %v2121, %v2049
    %v3186 = vpack.c.bf16 %v2122, %v2050
    %v3187 = vpack.c.bf16 %v2123, %v2051
    %v3188 = vpack.c.bf16 %v2228, %v2156
    %v3189 = vpack.c.bf16 %v2229, %v2157
    %v3190 = vpack.c.bf16 %v2230, %v2158
    %v3191 = vpack.c.bf16 %v2231, %v2159
    %v3192 = vpack.c.bf16 %v2264, %v2192
    %v3193 = vpack.c.bf16 %v2265, %v2193
    %v3194 = vpack.c.bf16 %v2266, %v2194
    %v3195 = vpack.c.bf16 %v2267, %v2195
    %v3196 = vpack.c.bf16 %v2372, %v2300
    %v3197 = vpack.c.bf16 %v2373, %v2301
    %v3198 = vpack.c.bf16 %v2374, %v2302
    %v3199 = vpack.c.bf16 %v2375, %v2303
    %v3200 = vpack.c.bf16 %v2408, %v2336
    %v3201 = vpack.c.bf16 %v2409, %v2337
    %v3202 = vpack.c.bf16 %v2410, %v2338
    %v3203 = vpack.c.bf16 %v2411, %v2339
    %v3204 = vpack.c.bf16 %v2516, %v2444
    %v3205 = vpack.c.bf16 %v2517, %v2445
    %v3206 = vpack.c.bf16 %v2518, %v2446
    %v3207 = vpack.c.bf16 %v2519, %v2447
    %v3208 = vpack.c.bf16 %v2552, %v2480
    %v3209 = vpack.c.bf16 %v2553, %v2481
    %v3210 = vpack.c.bf16 %v2554, %v2482
    %v3211 = vpack.c.bf16 %v2555, %v2483
    %v3212 = vpack.c.bf16 %v2660, %v2588
    %v3213 = vpack.c.bf16 %v2661, %v2589
    %v3214 = vpack.c.bf16 %v2662, %v2590
    %v3215 = vpack.c.bf16 %v2663, %v2591
    %v3216 = vpack.c.bf16 %v2696, %v2624
    %v3217 = vpack.c.bf16 %v2697, %v2625
    %v3218 = vpack.c.bf16 %v2698, %v2626
    %v3219 = vpack.c.bf16 %v2699, %v2627
    %v3220 = vpack.c.bf16 %v2804, %v2732
    %v3221 = vpack.c.bf16 %v2805, %v2733
    %v3222 = vpack.c.bf16 %v2806, %v2734
    %v3223 = vpack.c.bf16 %v2807, %v2735
    %v3224 = vpack.c.bf16 %v2840, %v2768
    %v3225 = vpack.c.bf16 %v2841, %v2769
    %v3226 = vpack.c.bf16 %v2842, %v2770
    %v3227 = vpack.c.bf16 %v2843, %v2771
    %v3228 = vld [vmem:[%s1] sm:$0xf]
    %v3229 = vld [vmem:[%s1 + $0x4] sm:$0xf]
    %v3230 = vld [vmem:[%s1 + $0x8] sm:$0xf]
    %v3231 = vld [vmem:[%s1 + $0xc] sm:$0xf]
    %v3232 = vld [vmem:[%s1 + $0x10] sm:$0xf]
    %v3233 = vld [vmem:[%s1 + $0x14] sm:$0xf]
    %v3234 = vld [vmem:[%s1 + $0x18] sm:$0xf]
    %v3235 = vld [vmem:[%s1 + $0x1c] sm:$0xf]
    %v3236 = vld [vmem:[%s1 + $0x20] sm:$0xf]
    %v3237 = vld [vmem:[%s1 + $0x24] sm:$0xf]
    %v3238 = vld [vmem:[%s1 + $0x28] sm:$0xf]
    %v3239 = vld [vmem:[%s1 + $0x2c] sm:$0xf]
    %v3240 = vld [vmem:[%s1 + $0x30] sm:$0xf]
    %v3241 = vld [vmem:[%s1 + $0x34] sm:$0xf]
    %v3242 = vld [vmem:[%s1 + $0x38] sm:$0xf]
    %v3243 = vld [vmem:[%s1 + $0x3c] sm:$0xf]
    %v3244 = vld [vmem:[%s1 + $0x40] sm:$0xf]
    %v3245 = vld [vmem:[%s1 + $0x44] sm:$0xf]
    %v3246 = vld [vmem:[%s1 + $0x48] sm:$0xf]
    %v3247 = vld [vmem:[%s1 + $0x4c] sm:$0xf]
    %v3248 = vld [vmem:[%s1 + $0x50] sm:$0xf]
    %v3249 = vld [vmem:[%s1 + $0x54] sm:$0xf]
    %v3250 = vld [vmem:[%s1 + $0x58] sm:$0xf]
    %v3251 = vld [vmem:[%s1 + $0x5c] sm:$0xf]
    %v3252 = vld [vmem:[%s1 + $0x60] sm:$0xf]
    %v3253 = vld [vmem:[%s1 + $0x64] sm:$0xf]
    %v3254 = vld [vmem:[%s1 + $0x68] sm:$0xf]
    %v3255 = vld [vmem:[%s1 + $0x6c] sm:$0xf]
    %v3256 = vld [vmem:[%s1 + $0x70] sm:$0xf]
    %v3257 = vld [vmem:[%s1 + $0x74] sm:$0xf]
    %v3258 = vld [vmem:[%s1 + $0x78] sm:$0xf]
    %v3259 = vld [vmem:[%s1 + $0x7c] sm:$0xf]
    %v3260 = vld [vmem:[%s1 + $0x80] sm:$0xf]
    %v3261 = vld [vmem:[%s1 + $0x84] sm:$0xf]
    %v3262 = vld [vmem:[%s1 + $0x88] sm:$0xf]
    %v3263 = vld [vmem:[%s1 + $0x8c] sm:$0xf]
    %v3264 = vld [vmem:[%s1 + $0x90] sm:$0xf]
    %v3265 = vld [vmem:[%s1 + $0x94] sm:$0xf]
    %v3266 = vld [vmem:[%s1 + $0x98] sm:$0xf]
    %v3267 = vld [vmem:[%s1 + $0x9c] sm:$0xf]
    %v3268 = vld [vmem:[%s1 + $0xa0] sm:$0xf]
    %v3269 = vld [vmem:[%s1 + $0xa4] sm:$0xf]
    %v3270 = vld [vmem:[%s1 + $0xa8] sm:$0xf]
    %v3271 = vld [vmem:[%s1 + $0xac] sm:$0xf]
    %v3272 = vld [vmem:[%s1 + $0xb0] sm:$0xf]
    %v3273 = vld [vmem:[%s1 + $0xb4] sm:$0xf]
    %v3274 = vld [vmem:[%s1 + $0xb8] sm:$0xf]
    %v3275 = vld [vmem:[%s1 + $0xbc] sm:$0xf]
    %v3276 = vld [vmem:[%s1 + $0xc0] sm:$0xf]
    %v3277 = vld [vmem:[%s1 + $0xc4] sm:$0xf]
    %v3278 = vld [vmem:[%s1 + $0xc8] sm:$0xf]
    %v3279 = vld [vmem:[%s1 + $0xcc] sm:$0xf]
    %v3280 = vld [vmem:[%s1 + $0xd0] sm:$0xf]
    %v3281 = vld [vmem:[%s1 + $0xd4] sm:$0xf]
    %v3282 = vld [vmem:[%s1 + $0xd8] sm:$0xf]
    %v3283 = vld [vmem:[%s1 + $0xdc] sm:$0xf]
    %v3284 = vld [vmem:[%s1 + $0xe0] sm:$0xf]
    %v3285 = vld [vmem:[%s1 + $0xe4] sm:$0xf]
    %v3286 = vld [vmem:[%s1 + $0xe8] sm:$0xf]
    %v3287 = vld [vmem:[%s1 + $0xec] sm:$0xf]
    %v3288 = vld [vmem:[%s1 + $0xf0] sm:$0xf]
    %v3289 = vld [vmem:[%s1 + $0xf4] sm:$0xf]
    %v3290 = vld [vmem:[%s1 + $0xf8] sm:$0xf]
    %v3291 = vld [vmem:[%s1 + $0xfc] sm:$0xf]
    %v3292 = vld [vmem:[%s1 + $0x100] sm:$0xf]
    %v3293 = vld [vmem:[%s1 + $0x104] sm:$0xf]
    %v3294 = vld [vmem:[%s1 + $0x108] sm:$0xf]
    %v3295 = vld [vmem:[%s1 + $0x10c] sm:$0xf]
    %v3296 = vld [vmem:[%s1 + $0x110] sm:$0xf]
    %v3297 = vld [vmem:[%s1 + $0x114] sm:$0xf]
    %v3298 = vld [vmem:[%s1 + $0x118] sm:$0xf]
    %v3299 = vld [vmem:[%s1 + $0x11c] sm:$0xf]
    %v3300 = vld [vmem:[%s1 + $0x120] sm:$0xf]
    %v3301 = vld [vmem:[%s1 + $0x124] sm:$0xf]
    %v3302 = vld [vmem:[%s1 + $0x128] sm:$0xf]
    %v3303 = vld [vmem:[%s1 + $0x12c] sm:$0xf]
    %v3304 = vld [vmem:[%s1 + $0x130] sm:$0xf]
    %v3305 = vld [vmem:[%s1 + $0x134] sm:$0xf]
    %v3306 = vld [vmem:[%s1 + $0x138] sm:$0xf]
    %v3307 = vld [vmem:[%s1 + $0x13c] sm:$0xf]
    %v3308 = vld [vmem:[%s1 + $0x140] sm:$0xf]
    %v3309 = vld [vmem:[%s1 + $0x144] sm:$0xf]
    %v3310 = vld [vmem:[%s1 + $0x148] sm:$0xf]
    %v3311 = vld [vmem:[%s1 + $0x14c] sm:$0xf]
    %v3312 = vld [vmem:[%s1 + $0x150] sm:$0xf]
    %v3313 = vld [vmem:[%s1 + $0x154] sm:$0xf]
    %v3314 = vld [vmem:[%s1 + $0x158] sm:$0xf]
    %v3315 = vld [vmem:[%s1 + $0x15c] sm:$0xf]
    %v3316 = vld [vmem:[%s1 + $0x160] sm:$0xf]
    %v3317 = vld [vmem:[%s1 + $0x164] sm:$0xf]
    %v3318 = vld [vmem:[%s1 + $0x168] sm:$0xf]
    %v3319 = vld [vmem:[%s1 + $0x16c] sm:$0xf]
    %v3320 = vld [vmem:[%s1 + $0x170] sm:$0xf]
    %v3321 = vld [vmem:[%s1 + $0x174] sm:$0xf]
    %v3322 = vld [vmem:[%s1 + $0x178] sm:$0xf]
    %v3323 = vld [vmem:[%s1 + $0x17c] sm:$0xf]
    %v3324 = vld [vmem:[%s1 + $0x180] sm:$0xf]
    %v3325 = vld [vmem:[%s1 + $0x184] sm:$0xf]
    %v3326 = vld [vmem:[%s1 + $0x188] sm:$0xf]
    %v3327 = vld [vmem:[%s1 + $0x18c] sm:$0xf]
    %v3328 = vld [vmem:[%s1 + $0x190] sm:$0xf]
    %v3329 = vld [vmem:[%s1 + $0x194] sm:$0xf]
    %v3330 = vld [vmem:[%s1 + $0x198] sm:$0xf]
    %v3331 = vld [vmem:[%s1 + $0x19c] sm:$0xf]
    %v3332 = vld [vmem:[%s1 + $0x1a0] sm:$0xf]
    %v3333 = vld [vmem:[%s1 + $0x1a4] sm:$0xf]
    %v3334 = vld [vmem:[%s1 + $0x1a8] sm:$0xf]
    %v3335 = vld [vmem:[%s1 + $0x1ac] sm:$0xf]
    %v3336 = vld [vmem:[%s1 + $0x1b0] sm:$0xf]
    %v3337 = vld [vmem:[%s1 + $0x1b4] sm:$0xf]
    %v3338 = vld [vmem:[%s1 + $0x1b8] sm:$0xf]
    %v3339 = vld [vmem:[%s1 + $0x1bc] sm:$0xf]
    %v3340 = vld [vmem:[%s1 + $0x1c0] sm:$0xf]
    %v3341 = vld [vmem:[%s1 + $0x1c4] sm:$0xf]
    %v3342 = vld [vmem:[%s1 + $0x1c8] sm:$0xf]
    %v3343 = vld [vmem:[%s1 + $0x1cc] sm:$0xf]
    %v3344 = vld [vmem:[%s1 + $0x1d0] sm:$0xf]
    %v3345 = vld [vmem:[%s1 + $0x1d4] sm:$0xf]
    %v3346 = vld [vmem:[%s1 + $0x1d8] sm:$0xf]
    %v3347 = vld [vmem:[%s1 + $0x1dc] sm:$0xf]
    %v3348 = vld [vmem:[%s1 + $0x1e0] sm:$0xf]
    %v3349 = vld [vmem:[%s1 + $0x1e4] sm:$0xf]
    %v3350 = vld [vmem:[%s1 + $0x1e8] sm:$0xf]
    %v3351 = vld [vmem:[%s1 + $0x1ec] sm:$0xf]
    %v3352 = vld [vmem:[%s1 + $0x1f0] sm:$0xf]
    %v3353 = vld [vmem:[%s1 + $0x1f4] sm:$0xf]
    %v3354 = vld [vmem:[%s1 + $0x1f8] sm:$0xf]
    %v3355 = vld [vmem:[%s1 + $0x1fc] sm:$0xf]
    %v3356 = vld [vmem:[%s2] sm:$0x1]
    %v3358 = vlaneseq
    %v3359 = vshrl.u32 %v3358, 7
    %v3360 = vsub.s32 0, %v3359
    %v3361 = vrot.slane %v3356, %v3360
    %v3491 = vunpack.c.l.b16 %v3228
    %v3492 = vunpack.c.l.b16 %v3229
    %v3493 = vunpack.c.l.b16 %v3230
    %v3494 = vunpack.c.l.b16 %v3231
    %v3495 = vunpack.c.l.b16 %v3232
    %v3496 = vunpack.c.l.b16 %v3233
    %v3497 = vunpack.c.l.b16 %v3234
    %v3498 = vunpack.c.l.b16 %v3235
    %v3499 = vunpack.c.l.b16 %v3236
    %v3500 = vunpack.c.l.b16 %v3237
    %v3501 = vunpack.c.l.b16 %v3238
    %v3502 = vunpack.c.l.b16 %v3239
    %v3503 = vunpack.c.l.b16 %v3240
    %v3504 = vunpack.c.l.b16 %v3241
    %v3505 = vunpack.c.l.b16 %v3242
    %v3506 = vunpack.c.l.b16 %v3243
    %v3507 = vunpack.c.l.b16 %v3244
    %v3508 = vunpack.c.l.b16 %v3245
    %v3509 = vunpack.c.l.b16 %v3246
    %v3510 = vunpack.c.l.b16 %v3247
    %v3511 = vunpack.c.l.b16 %v3248
    %v3512 = vunpack.c.l.b16 %v3249
    %v3513 = vunpack.c.l.b16 %v3250
    %v3514 = vunpack.c.l.b16 %v3251
    %v3515 = vunpack.c.l.b16 %v3252
    %v3516 = vunpack.c.l.b16 %v3253
    %v3517 = vunpack.c.l.b16 %v3254
    %v3518 = vunpack.c.l.b16 %v3255
    %v3519 = vunpack.c.l.b16 %v3256
    %v3520 = vunpack.c.l.b16 %v3257
    %v3521 = vunpack.c.l.b16 %v3258
    %v3522 = vunpack.c.l.b16 %v3259
    %v3523 = vunpack.c.l.b16 %v3260
    %v3524 = vunpack.c.l.b16 %v3261
    %v3525 = vunpack.c.l.b16 %v3262
    %v3526 = vunpack.c.l.b16 %v3263
    %v3527 = vunpack.c.l.b16 %v3264
    %v3528 = vunpack.c.l.b16 %v3265
    %v3529 = vunpack.c.l.b16 %v3266
    %v3530 = vunpack.c.l.b16 %v3267
    %v3531 = vunpack.c.l.b16 %v3268
    %v3532 = vunpack.c.l.b16 %v3269
    %v3533 = vunpack.c.l.b16 %v3270
    %v3534 = vunpack.c.l.b16 %v3271
    %v3535 = vunpack.c.l.b16 %v3272
    %v3536 = vunpack.c.l.b16 %v3273
    %v3537 = vunpack.c.l.b16 %v3274
    %v3538 = vunpack.c.l.b16 %v3275
    %v3539 = vunpack.c.l.b16 %v3276
    %v3540 = vunpack.c.l.b16 %v3277
    %v3541 = vunpack.c.l.b16 %v3278
    %v3542 = vunpack.c.l.b16 %v3279
    %v3543 = vunpack.c.l.b16 %v3280
    %v3544 = vunpack.c.l.b16 %v3281
    %v3545 = vunpack.c.l.b16 %v3282
    %v3546 = vunpack.c.l.b16 %v3283
    %v3547 = vunpack.c.l.b16 %v3284
    %v3548 = vunpack.c.l.b16 %v3285
    %v3549 = vunpack.c.l.b16 %v3286
    %v3550 = vunpack.c.l.b16 %v3287
    %v3551 = vunpack.c.l.b16 %v3288
    %v3552 = vunpack.c.l.b16 %v3289
    %v3553 = vunpack.c.l.b16 %v3290
    %v3554 = vunpack.c.l.b16 %v3291
    %v3555 = vunpack.c.l.b16 %v3292
    %v3556 = vunpack.c.l.b16 %v3293
    %v3557 = vunpack.c.l.b16 %v3294
    %v3558 = vunpack.c.l.b16 %v3295
    %v3559 = vunpack.c.l.b16 %v3296
    %v3560 = vunpack.c.l.b16 %v3297
    %v3561 = vunpack.c.l.b16 %v3298
    %v3562 = vunpack.c.l.b16 %v3299
    %v3563 = vunpack.c.l.b16 %v3300
    %v3564 = vunpack.c.l.b16 %v3301
    %v3565 = vunpack.c.l.b16 %v3302
    %v3566 = vunpack.c.l.b16 %v3303
    %v3567 = vunpack.c.l.b16 %v3304
    %v3568 = vunpack.c.l.b16 %v3305
    %v3569 = vunpack.c.l.b16 %v3306
    %v3570 = vunpack.c.l.b16 %v3307
    %v3571 = vunpack.c.l.b16 %v3308
    %v3572 = vunpack.c.l.b16 %v3309
    %v3573 = vunpack.c.l.b16 %v3310
    %v3574 = vunpack.c.l.b16 %v3311
    %v3575 = vunpack.c.l.b16 %v3312
    %v3576 = vunpack.c.l.b16 %v3313
    %v3577 = vunpack.c.l.b16 %v3314
    %v3578 = vunpack.c.l.b16 %v3315
    %v3579 = vunpack.c.l.b16 %v3316
    %v3580 = vunpack.c.l.b16 %v3317
    %v3581 = vunpack.c.l.b16 %v3318
    %v3582 = vunpack.c.l.b16 %v3319
    %v3583 = vunpack.c.l.b16 %v3320
    %v3584 = vunpack.c.l.b16 %v3321
    %v3585 = vunpack.c.l.b16 %v3322
    %v3586 = vunpack.c.l.b16 %v3323
    %v3587 = vunpack.c.l.b16 %v3324
    %v3588 = vunpack.c.l.b16 %v3325
    %v3589 = vunpack.c.l.b16 %v3326
    %v3590 = vunpack.c.l.b16 %v3327
    %v3591 = vunpack.c.l.b16 %v3328
    %v3592 = vunpack.c.l.b16 %v3329
    %v3593 = vunpack.c.l.b16 %v3330
    %v3594 = vunpack.c.l.b16 %v3331
    %v3595 = vunpack.c.l.b16 %v3332
    %v3596 = vunpack.c.l.b16 %v3333
    %v3597 = vunpack.c.l.b16 %v3334
    %v3598 = vunpack.c.l.b16 %v3335
    %v3599 = vunpack.c.l.b16 %v3336
    %v3600 = vunpack.c.l.b16 %v3337
    %v3601 = vunpack.c.l.b16 %v3338
    %v3602 = vunpack.c.l.b16 %v3339
    %v3603 = vunpack.c.l.b16 %v3340
    %v3604 = vunpack.c.l.b16 %v3341
    %v3605 = vunpack.c.l.b16 %v3342
    %v3606 = vunpack.c.l.b16 %v3343
    %v3607 = vunpack.c.l.b16 %v3344
    %v3608 = vunpack.c.l.b16 %v3345
    %v3609 = vunpack.c.l.b16 %v3346
    %v3610 = vunpack.c.l.b16 %v3347
    %v3611 = vunpack.c.l.b16 %v3348
    %v3612 = vunpack.c.l.b16 %v3349
    %v3613 = vunpack.c.l.b16 %v3350
    %v3614 = vunpack.c.l.b16 %v3351
    %v3615 = vunpack.c.l.b16 %v3352
    %v3616 = vunpack.c.l.b16 %v3353
    %v3617 = vunpack.c.l.b16 %v3354
    %v3618 = vunpack.c.l.b16 %v3355
    %v3619 = vpack.c.b16 %v3492, %v3491
    %v3620 = vpack.c.b16 %v3494, %v3493
    %v3621 = vpack.c.b16 %v3496, %v3495
    %v3622 = vpack.c.b16 %v3498, %v3497
    %v3623 = vpack.c.b16 %v3500, %v3499
    %v3624 = vpack.c.b16 %v3502, %v3501
    %v3625 = vpack.c.b16 %v3504, %v3503
    %v3626 = vpack.c.b16 %v3506, %v3505
    %v3627 = vpack.c.b16 %v3508, %v3507
    %v3628 = vpack.c.b16 %v3510, %v3509
    %v3629 = vpack.c.b16 %v3512, %v3511
    %v3630 = vpack.c.b16 %v3514, %v3513
    %v3631 = vpack.c.b16 %v3516, %v3515
    %v3632 = vpack.c.b16 %v3518, %v3517
    %v3633 = vpack.c.b16 %v3520, %v3519
    %v3634 = vpack.c.b16 %v3522, %v3521
    %v3635 = vpack.c.b16 %v3524, %v3523
    %v3636 = vpack.c.b16 %v3526, %v3525
    %v3637 = vpack.c.b16 %v3528, %v3527
    %v3638 = vpack.c.b16 %v3530, %v3529
    %v3639 = vpack.c.b16 %v3532, %v3531
    %v3640 = vpack.c.b16 %v3534, %v3533
    %v3641 = vpack.c.b16 %v3536, %v3535
    %v3642 = vpack.c.b16 %v3538, %v3537
    %v3643 = vpack.c.b16 %v3540, %v3539
    %v3644 = vpack.c.b16 %v3542, %v3541
    %v3645 = vpack.c.b16 %v3544, %v3543
    %v3646 = vpack.c.b16 %v3546, %v3545
    %v3647 = vpack.c.b16 %v3548, %v3547
    %v3648 = vpack.c.b16 %v3550, %v3549
    %v3649 = vpack.c.b16 %v3552, %v3551
    %v3650 = vpack.c.b16 %v3554, %v3553
    %v3651 = vpack.c.b16 %v3556, %v3555
    %v3652 = vpack.c.b16 %v3558, %v3557
    %v3653 = vpack.c.b16 %v3560, %v3559
    %v3654 = vpack.c.b16 %v3562, %v3561
    %v3655 = vpack.c.b16 %v3564, %v3563
    %v3656 = vpack.c.b16 %v3566, %v3565
    %v3657 = vpack.c.b16 %v3568, %v3567
    %v3658 = vpack.c.b16 %v3570, %v3569
    %v3659 = vpack.c.b16 %v3572, %v3571
    %v3660 = vpack.c.b16 %v3574, %v3573
    %v3661 = vpack.c.b16 %v3576, %v3575
    %v3662 = vpack.c.b16 %v3578, %v3577
    %v3663 = vpack.c.b16 %v3580, %v3579
    %v3664 = vpack.c.b16 %v3582, %v3581
    %v3665 = vpack.c.b16 %v3584, %v3583
    %v3666 = vpack.c.b16 %v3586, %v3585
    %v3667 = vpack.c.b16 %v3588, %v3587
    %v3668 = vpack.c.b16 %v3590, %v3589
    %v3669 = vpack.c.b16 %v3592, %v3591
    %v3670 = vpack.c.b16 %v3594, %v3593
    %v3671 = vpack.c.b16 %v3596, %v3595
    %v3672 = vpack.c.b16 %v3598, %v3597
    %v3673 = vpack.c.b16 %v3600, %v3599
    %v3674 = vpack.c.b16 %v3602, %v3601
    %v3675 = vpack.c.b16 %v3604, %v3603
    %v3676 = vpack.c.b16 %v3606, %v3605
    %v3677 = vpack.c.b16 %v3608, %v3607
    %v3678 = vpack.c.b16 %v3610, %v3609
    %v3679 = vpack.c.b16 %v3612, %v3611
    %v3680 = vpack.c.b16 %v3614, %v3613
    %v3681 = vpack.c.b16 %v3616, %v3615
    %v3682 = vpack.c.b16 %v3618, %v3617
    %3747 = vmatprep.subr.bf16.mxu0 0
    %3748 = vmatpush1.bf16.msra.mxu0 %v3619
    %3749 = vmatprep.subr.bf16.mxu0 0
    %3750 = vmatpush1.bf16.msra.mxu0 %v3620
    %3751 = vmatprep.subr.bf16.mxu0 0
    %3752 = vmatpush1.bf16.msra.mxu0 %v3621
    %3753 = vmatprep.subr.bf16.mxu0 0
    %3754 = vmatpush1.bf16.msra.mxu0 %v3622
    %3755 = vmatprep.subr.bf16.mxu0 0
    %3756 = vmatpush1.bf16.msra.mxu0 %v3623
    %3757 = vmatprep.subr.bf16.mxu0 0
    %3758 = vmatpush1.bf16.msra.mxu0 %v3624
    %3759 = vmatprep.subr.bf16.mxu0 0
    %3760 = vmatpush1.bf16.msra.mxu0 %v3625
    %3761 = vmatprep.subr.bf16.mxu0 0
    %3762 = vmatpush1.bf16.msra.mxu0 %v3626
    %3763 = vmatprep.subr.bf16.mxu0 0
    %3764 = vmatpush1.bf16.msra.mxu0 %v3627
    %3765 = vmatprep.subr.bf16.mxu0 0
    %3766 = vmatpush1.bf16.msra.mxu0 %v3628
    %3767 = vmatprep.subr.bf16.mxu0 0
    %3768 = vmatpush1.bf16.msra.mxu0 %v3629
    %3769 = vmatprep.subr.bf16.mxu0 0
    %3770 = vmatpush1.bf16.msra.mxu0 %v3630
    %3771 = vmatprep.subr.bf16.mxu0 0
    %3772 = vmatpush1.bf16.msra.mxu0 %v3631
    %3773 = vmatprep.subr.bf16.mxu0 0
    %3774 = vmatpush1.bf16.msra.mxu0 %v3632
    %3775 = vmatprep.subr.bf16.mxu0 0
    %3776 = vmatpush1.bf16.msra.mxu0 %v3633
    %3777 = vmatprep.subr.bf16.mxu0 0
    %3778 = vmatpush1.bf16.msra.mxu0 %v3634
    %3779 = vmatprep.mubr.bf16.mxu0 %v3101
    %3780 = vmatmul.mubr.bf16.gmra.mrb[0].mxu0 %v3100
    %v3781 = vpop.f32.mrb[0].mxu0
    %v3782 = vadd.f32 %v3361, %v3781
    %v3783 = vpop.f32.mrb[0].mxu0
    %v3784 = vpop.f32.mrb[0].mxu0
    %v3785 = vadd.f32 %v3361, %v3784
    %v3786 = vpop.f32.mrb[0].mxu0
    %3787 = vmatprep.mubr.bf16.mxu0 %v3109
    %3788 = vmatmul.mubr.bf16.gmra.mrb[0].mxu0 %v3108
    %v3789 = vpop.f32.mrb[0].mxu0
    %v3790 = vadd.f32 %v3361, %v3789
    %v3791 = vpop.f32.mrb[0].mxu0
    %v3792 = vpop.f32.mrb[0].mxu0
    %v3793 = vadd.f32 %v3361, %v3792
    %v3794 = vpop.f32.mrb[0].mxu0
    %3795 = vmatprep.mubr.bf16.mxu0 %v3117
    %3796 = vmatmul.mubr.bf16.gmra.mrb[0].mxu0 %v3116
    %v3797 = vpop.f32.mrb[0].mxu0
    %v3798 = vadd.f32 %v3361, %v3797
    %v3799 = vpop.f32.mrb[0].mxu0
    %v3800 = vpop.f32.mrb[0].mxu0
    %v3801 = vadd.f32 %v3361, %v3800
    %v3802 = vpop.f32.mrb[0].mxu0
    %3803 = vmatprep.mubr.bf16.mxu0 %v3125
    %3804 = vmatmul.mubr.bf16.gmra.mrb[0].mxu0 %v3124
    %v3805 = vpop.f32.mrb[0].mxu0
    %v3806 = vadd.f32 %v3361, %v3805
    %v3807 = vpop.f32.mrb[0].mxu0
    %v3808 = vpop.f32.mrb[0].mxu0
    %v3809 = vadd.f32 %v3361, %v3808
    %v3810 = vpop.f32.mrb[0].mxu0
    %3811 = vmatprep.mubr.bf16.mxu0 %v3133
    %3812 = vmatmul.mubr.bf16.gmra.mrb[0].mxu0 %v3132
    %v3813 = vpop.f32.mrb[0].mxu0
    %v3814 = vadd.f32 %v3361, %v3813
    %v3815 = vpop.f32.mrb[0].mxu0
    %v3816 = vpop.f32.mrb[0].mxu0
    %v3817 = vadd.f32 %v3361, %v3816
    %v3818 = vpop.f32.mrb[0].mxu0
    %3819 = vmatprep.mubr.bf16.mxu0 %v3141
    %3820 = vmatmul.mubr.bf16.gmra.mrb[0].mxu0 %v3140
    %v3821 = vpop.f32.mrb[0].mxu0
    %v3822 = vadd.f32 %v3361, %v3821
    %v3823 = vpop.f32.mrb[0].mxu0
    %v3824 = vpop.f32.mrb[0].mxu0
    %v3825 = vadd.f32 %v3361, %v3824
    %v3826 = vpop.f32.mrb[0].mxu0
    %3827 = vmatprep.mubr.bf16.mxu0 %v3149
    %3828 = vmatmul.mubr.bf16.gmra.mrb[0].mxu0 %v3148
    %v3829 = vpop.f32.mrb[0].mxu0
    %v3830 = vadd.f32 %v3361, %v3829
    %v3831 = vpop.f32.mrb[0].mxu0
    %v3832 = vpop.f32.mrb[0].mxu0
    %v3833 = vadd.f32 %v3361, %v3832
    %v3834 = vpop.f32.mrb[0].mxu0
    %3835 = vmatprep.mubr.bf16.mxu0 %v3157
    %3836 = vmatmul.mubr.bf16.gmra.mrb[0].mxu0 %v3156
    %v3837 = vpop.f32.mrb[0].mxu0
    %v3838 = vadd.f32 %v3361, %v3837
    %v3839 = vpop.f32.mrb[0].mxu0
    %v3840 = vpop.f32.mrb[0].mxu0
    %v3841 = vadd.f32 %v3361, %v3840
    %v3842 = vpop.f32.mrb[0].mxu0
    %3843 = vmatprep.mubr.bf16.mxu0 %v3165
    %3844 = vmatmul.mubr.bf16.gmra.mrb[0].mxu0 %v3164
    %v3845 = vpop.f32.mrb[0].mxu0
    %v3846 = vadd.f32 %v3361, %v3845
    %v3847 = vpop.f32.mrb[0].mxu0
    %v3848 = vpop.f32.mrb[0].mxu0
    %v3849 = vadd.f32 %v3361, %v3848
    %v3850 = vpop.f32.mrb[0].mxu0
    %3851 = vmatprep.mubr.bf16.mxu0 %v3173
    %3852 = vmatmul.mubr.bf16.gmra.mrb[0].mxu0 %v3172
    %v3853 = vpop.f32.mrb[0].mxu0
    %v3854 = vadd.f32 %v3361, %v3853
    %v3855 = vpop.f32.mrb[0].mxu0
    %v3856 = vpop.f32.mrb[0].mxu0
    %v3857 = vadd.f32 %v3361, %v3856
    %v3858 = vpop.f32.mrb[0].mxu0
    %3859 = vmatprep.mubr.bf16.mxu0 %v3181
    %3860 = vmatmul.mubr.bf16.gmra.mrb[0].mxu0 %v3180
    %v3861 = vpop.f32.mrb[0].mxu0
    %v3862 = vadd.f32 %v3361, %v3861
    %v3863 = vpop.f32.mrb[0].mxu0
    %v3864 = vpop.f32.mrb[0].mxu0
    %v3865 = vadd.f32 %v3361, %v3864
    %v3866 = vpop.f32.mrb[0].mxu0
    %3867 = vmatprep.mubr.bf16.mxu0 %v3189
    %3868 = vmatmul.mubr.bf16.gmra.mrb[0].mxu0 %v3188
    %v3869 = vpop.f32.mrb[0].mxu0
    %v3870 = vadd.f32 %v3361, %v3869
    %v3871 = vpop.f32.mrb[0].mxu0
    %v3872 = vpop.f32.mrb[0].mxu0
    %v3873 = vadd.f32 %v3361, %v3872
    %v3874 = vpop.f32.mrb[0].mxu0
    %3875 = vmatprep.mubr.bf16.mxu0 %v3197
    %3876 = vmatmul.mubr.bf16.gmra.mrb[0].mxu0 %v3196
    %v3877 = vpop.f32.mrb[0].mxu0
    %v3878 = vadd.f32 %v3361, %v3877
    %v3879 = vpop.f32.mrb[0].mxu0
    %v3880 = vpop.f32.mrb[0].mxu0
    %v3881 = vadd.f32 %v3361, %v3880
    %v3882 = vpop.f32.mrb[0].mxu0
    %3883 = vmatprep.mubr.bf16.mxu0 %v3205
    %3884 = vmatmul.mubr.bf16.gmra.mrb[0].mxu0 %v3204
    %v3885 = vpop.f32.mrb[0].mxu0
    %v3886 = vadd.f32 %v3361, %v3885
    %v3887 = vpop.f32.mrb[0].mxu0
    %v3888 = vpop.f32.mrb[0].mxu0
    %v3889 = vadd.f32 %v3361, %v3888
    %v3890 = vpop.f32.mrb[0].mxu0
    %3891 = vmatprep.mubr.bf16.mxu0 %v3213
    %3892 = vmatmul.mubr.bf16.gmra.mrb[0].mxu0 %v3212
    %v3893 = vpop.f32.mrb[0].mxu0
    %v3894 = vadd.f32 %v3361, %v3893
    %v3895 = vpop.f32.mrb[0].mxu0
    %v3896 = vpop.f32.mrb[0].mxu0
    %v3897 = vadd.f32 %v3361, %v3896
    %v3898 = vpop.f32.mrb[0].mxu0
    %3899 = vmatprep.mubr.bf16.mxu0 %v3221
    %3900 = vmatmul.mubr.bf16.gmra.mrb[0].mxu0 %v3220
    %v3901 = vpop.f32.mrb[0].mxu0
    %v3902 = vadd.f32 %v3361, %v3901
    %v3903 = vpop.f32.mrb[0].mxu0
    %v3904 = vpop.f32.mrb[0].mxu0
    %v3905 = vadd.f32 %v3361, %v3904
    %v3906 = vpop.f32.mrb[0].mxu0
    %3907 = vdwg.mxu0
    %3908 = vmatprep.subr.bf16.mxu0 0
    %3909 = vmatpush1.bf16.msra.mxu0 %v3635
    %3910 = vmatprep.subr.bf16.mxu0 0
    %3911 = vmatpush1.bf16.msra.mxu0 %v3636
    %3912 = vmatprep.subr.bf16.mxu0 0
    %3913 = vmatpush1.bf16.msra.mxu0 %v3637
    %3914 = vmatprep.subr.bf16.mxu0 0
    %3915 = vmatpush1.bf16.msra.mxu0 %v3638
    %3916 = vmatprep.subr.bf16.mxu0 0
    %3917 = vmatpush1.bf16.msra.mxu0 %v3639
    %3918 = vmatprep.subr.bf16.mxu0 0
    %3919 = vmatpush1.bf16.msra.mxu0 %v3640
    %3920 = vmatprep.subr.bf16.mxu0 0
    %3921 = vmatpush1.bf16.msra.mxu0 %v3641
    %3922 = vmatprep.subr.bf16.mxu0 0
    %3923 = vmatpush1.bf16.msra.mxu0 %v3642
    %3924 = vmatprep.subr.bf16.mxu0 0
    %3925 = vmatpush1.bf16.msra.mxu0 %v3643
    %3926 = vmatprep.subr.bf16.mxu0 0
    %3927 = vmatpush1.bf16.msra.mxu0 %v3644
    %3928 = vmatprep.subr.bf16.mxu0 0
    %3929 = vmatpush1.bf16.msra.mxu0 %v3645
    %3930 = vmatprep.subr.bf16.mxu0 0
    %3931 = vmatpush1.bf16.msra.mxu0 %v3646
    %3932 = vmatprep.subr.bf16.mxu0 0
    %3933 = vmatpush1.bf16.msra.mxu0 %v3647
    %3934 = vmatprep.subr.bf16.mxu0 0
    %3935 = vmatpush1.bf16.msra.mxu0 %v3648
    %3936 = vmatprep.subr.bf16.mxu0 0
    %3937 = vmatpush1.bf16.msra.mxu0 %v3649
    %3938 = vmatprep.subr.bf16.mxu0 0
    %3939 = vmatpush1.bf16.msra.mxu0 %v3650
    %3940 = vmatprep.mubr.bf16.mxu0 %v3103
    %3941 = vmatmul.mubr.bf16.gmra.mrb[0].mxu0 %v3102
    %v3942 = vpop.f32.mrb[0].mxu0
    %v3943 = vadd.f32 %v3782, %v3942
    %v3944 = vpop.f32.mrb[0].mxu0
    %v3945 = vpop.f32.mrb[0].mxu0
    %v3946 = vadd.f32 %v3785, %v3945
    %v3947 = vpop.f32.mrb[0].mxu0
    %3948 = vmatprep.mubr.bf16.mxu0 %v3111
    %3949 = vmatmul.mubr.bf16.gmra.mrb[0].mxu0 %v3110
    %v3950 = vpop.f32.mrb[0].mxu0
    %v3951 = vadd.f32 %v3790, %v3950
    %v3952 = vpop.f32.mrb[0].mxu0
    %v3953 = vpop.f32.mrb[0].mxu0
    %v3954 = vadd.f32 %v3793, %v3953
    %v3955 = vpop.f32.mrb[0].mxu0
    %3956 = vmatprep.mubr.bf16.mxu0 %v3119
    %3957 = vmatmul.mubr.bf16.gmra.mrb[0].mxu0 %v3118
    %v3958 = vpop.f32.mrb[0].mxu0
    %v3959 = vadd.f32 %v3798, %v3958
    %v3960 = vpop.f32.mrb[0].mxu0
    %v3961 = vpop.f32.mrb[0].mxu0
    %v3962 = vadd.f32 %v3801, %v3961
    %v3963 = vpop.f32.mrb[0].mxu0
    %3964 = vmatprep.mubr.bf16.mxu0 %v3127
    %3965 = vmatmul.mubr.bf16.gmra.mrb[0].mxu0 %v3126
    %v3966 = vpop.f32.mrb[0].mxu0
    %v3967 = vadd.f32 %v3806, %v3966
    %v3968 = vpop.f32.mrb[0].mxu0
    %v3969 = vpop.f32.mrb[0].mxu0
    %v3970 = vadd.f32 %v3809, %v3969
    %v3971 = vpop.f32.mrb[0].mxu0
    %3972 = vmatprep.mubr.bf16.mxu0 %v3135
    %3973 = vmatmul.mubr.bf16.gmra.mrb[0].mxu0 %v3134
    %v3974 = vpop.f32.mrb[0].mxu0
    %v3975 = vadd.f32 %v3814, %v3974
    %v3976 = vpop.f32.mrb[0].mxu0
    %v3977 = vpop.f32.mrb[0].mxu0
    %v3978 = vadd.f32 %v3817, %v3977
    %v3979 = vpop.f32.mrb[0].mxu0
    %3980 = vmatprep.mubr.bf16.mxu0 %v3143
    %3981 = vmatmul.mubr.bf16.gmra.mrb[0].mxu0 %v3142
    %v3982 = vpop.f32.mrb[0].mxu0
    %v3983 = vadd.f32 %v3822, %v3982
    %v3984 = vpop.f32.mrb[0].mxu0
    %v3985 = vpop.f32.mrb[0].mxu0
    %v3986 = vadd.f32 %v3825, %v3985
    %v3987 = vpop.f32.mrb[0].mxu0
    %3988 = vmatprep.mubr.bf16.mxu0 %v3151
    %3989 = vmatmul.mubr.bf16.gmra.mrb[0].mxu0 %v3150
    %v3990 = vpop.f32.mrb[0].mxu0
    %v3991 = vadd.f32 %v3830, %v3990
    %v3992 = vpop.f32.mrb[0].mxu0
    %v3993 = vpop.f32.mrb[0].mxu0
    %v3994 = vadd.f32 %v3833, %v3993
    %v3995 = vpop.f32.mrb[0].mxu0
    %3996 = vmatprep.mubr.bf16.mxu0 %v3159
    %3997 = vmatmul.mubr.bf16.gmra.mrb[0].mxu0 %v3158
    %v3998 = vpop.f32.mrb[0].mxu0
    %v3999 = vadd.f32 %v3838, %v3998
    %v4000 = vpop.f32.mrb[0].mxu0
    %v4001 = vpop.f32.mrb[0].mxu0
    %v4002 = vadd.f32 %v3841, %v4001
    %v4003 = vpop.f32.mrb[0].mxu0
    %4004 = vmatprep.mubr.bf16.mxu0 %v3167
    %4005 = vmatmul.mubr.bf16.gmra.mrb[0].mxu0 %v3166
    %v4006 = vpop.f32.mrb[0].mxu0
    %v4007 = vadd.f32 %v3846, %v4006
    %v4008 = vpop.f32.mrb[0].mxu0
    %v4009 = vpop.f32.mrb[0].mxu0
    %v4010 = vadd.f32 %v3849, %v4009
    %v4011 = vpop.f32.mrb[0].mxu0
    %4012 = vmatprep.mubr.bf16.mxu0 %v3175
    %4013 = vmatmul.mubr.bf16.gmra.mrb[0].mxu0 %v3174
    %v4014 = vpop.f32.mrb[0].mxu0
    %v4015 = vadd.f32 %v3854, %v4014
    %v4016 = vpop.f32.mrb[0].mxu0
    %v4017 = vpop.f32.mrb[0].mxu0
    %v4018 = vadd.f32 %v3857, %v4017
    %v4019 = vpop.f32.mrb[0].mxu0
    %4020 = vmatprep.mubr.bf16.mxu0 %v3183
    %4021 = vmatmul.mubr.bf16.gmra.mrb[0].mxu0 %v3182
    %v4022 = vpop.f32.mrb[0].mxu0
    %v4023 = vadd.f32 %v3862, %v4022
    %v4024 = vpop.f32.mrb[0].mxu0
    %v4025 = vpop.f32.mrb[0].mxu0
    %v4026 = vadd.f32 %v3865, %v4025
    %v4027 = vpop.f32.mrb[0].mxu0
    %4028 = vmatprep.mubr.bf16.mxu0 %v3191
    %4029 = vmatmul.mubr.bf16.gmra.mrb[0].mxu0 %v3190
    %v4030 = vpop.f32.mrb[0].mxu0
    %v4031 = vadd.f32 %v3870, %v4030
    %v4032 = vpop.f32.mrb[0].mxu0
    %v4033 = vpop.f32.mrb[0].mxu0
    %v4034 = vadd.f32 %v3873, %v4033
    %v4035 = vpop.f32.mrb[0].mxu0
    %4036 = vmatprep.mubr.bf16.mxu0 %v3199
    %4037 = vmatmul.mubr.bf16.gmra.mrb[0].mxu0 %v3198
    %v4038 = vpop.f32.mrb[0].mxu0
    %v4039 = vadd.f32 %v3878, %v4038
    %v4040 = vpop.f32.mrb[0].mxu0
    %v4041 = vpop.f32.mrb[0].mxu0
    %v4042 = vadd.f32 %v3881, %v4041
    %v4043 = vpop.f32.mrb[0].mxu0
    %4044 = vmatprep.mubr.bf16.mxu0 %v3207
    %4045 = vmatmul.mubr.bf16.gmra.mrb[0].mxu0 %v3206
    %v4046 = vpop.f32.mrb[0].mxu0
    %v4047 = vadd.f32 %v3886, %v4046
    %v4048 = vpop.f32.mrb[0].mxu0
    %v4049 = vpop.f32.mrb[0].mxu0
    %v4050 = vadd.f32 %v3889, %v4049
    %v4051 = vpop.f32.mrb[0].mxu0
    %4052 = vmatprep.mubr.bf16.mxu0 %v3215
    %4053 = vmatmul.mubr.bf16.gmra.mrb[0].mxu0 %v3214
    %v4054 = vpop.f32.mrb[0].mxu0
    %v4055 = vadd.f32 %v3894, %v4054
    %v4056 = vpop.f32.mrb[0].mxu0
    %v4057 = vpop.f32.mrb[0].mxu0
    %v4058 = vadd.f32 %v3897, %v4057
    %v4059 = vpop.f32.mrb[0].mxu0
    %4060 = vmatprep.mubr.bf16.mxu0 %v3223
    %4061 = vmatmul.mubr.bf16.gmra.mrb[0].mxu0 %v3222
    %v4062 = vpop.f32.mrb[0].mxu0
    %v4063 = vadd.f32 %v3902, %v4062
    %v4064 = vpop.f32.mrb[0].mxu0
    %v4065 = vpop.f32.mrb[0].mxu0
    %v4066 = vadd.f32 %v3905, %v4065
    %v4067 = vpop.f32.mrb[0].mxu0
    %4068 = vdwg.mxu0
    %4069 = vmatprep.subr.bf16.mxu0 0
    %4070 = vmatpush1.bf16.msra.mxu0 %v3651
    %4071 = vmatprep.subr.bf16.mxu0 0
    %4072 = vmatpush1.bf16.msra.mxu0 %v3652
    %4073 = vmatprep.subr.bf16.mxu0 0
    %4074 = vmatpush1.bf16.msra.mxu0 %v3653
    %4075 = vmatprep.subr.bf16.mxu0 0
    %4076 = vmatpush1.bf16.msra.mxu0 %v3654
    %4077 = vmatprep.subr.bf16.mxu0 0
    %4078 = vmatpush1.bf16.msra.mxu0 %v3655
    %4079 = vmatprep.subr.bf16.mxu0 0
    %4080 = vmatpush1.bf16.msra.mxu0 %v3656
    %4081 = vmatprep.subr.bf16.mxu0 0
    %4082 = vmatpush1.bf16.msra.mxu0 %v3657
    %4083 = vmatprep.subr.bf16.mxu0 0
    %4084 = vmatpush1.bf16.msra.mxu0 %v3658
    %4085 = vmatprep.subr.bf16.mxu0 0
    %4086 = vmatpush1.bf16.msra.mxu0 %v3659
    %4087 = vmatprep.subr.bf16.mxu0 0
    %4088 = vmatpush1.bf16.msra.mxu0 %v3660
    %4089 = vmatprep.subr.bf16.mxu0 0
    %4090 = vmatpush1.bf16.msra.mxu0 %v3661
    %4091 = vmatprep.subr.bf16.mxu0 0
    %4092 = vmatpush1.bf16.msra.mxu0 %v3662
    %4093 = vmatprep.subr.bf16.mxu0 0
    %4094 = vmatpush1.bf16.msra.mxu0 %v3663
    %4095 = vmatprep.subr.bf16.mxu0 0
    %4096 = vmatpush1.bf16.msra.mxu0 %v3664
    %4097 = vmatprep.subr.bf16.mxu0 0
    %4098 = vmatpush1.bf16.msra.mxu0 %v3665
    %4099 = vmatprep.subr.bf16.mxu0 0
    %4100 = vmatpush1.bf16.msra.mxu0 %v3666
    %4101 = vmatprep.mubr.bf16.mxu0 %v3105
    %4102 = vmatmul.mubr.bf16.gmra.mrb[0].mxu0 %v3104
    %v4103 = vpop.f32.mrb[0].mxu0
    %v4104 = vadd.f32 %v3943, %v4103
    %v4105 = vpop.f32.mrb[0].mxu0
    %v4106 = vpop.f32.mrb[0].mxu0
    %v4107 = vadd.f32 %v3946, %v4106
    %v4108 = vpop.f32.mrb[0].mxu0
    %4109 = vmatprep.mubr.bf16.mxu0 %v3113
    %4110 = vmatmul.mubr.bf16.gmra.mrb[0].mxu0 %v3112
    %v4111 = vpop.f32.mrb[0].mxu0
    %v4112 = vadd.f32 %v3951, %v4111
    %v4113 = vpop.f32.mrb[0].mxu0
    %v4114 = vpop.f32.mrb[0].mxu0
    %v4115 = vadd.f32 %v3954, %v4114
    %v4116 = vpop.f32.mrb[0].mxu0
    %4117 = vmatprep.mubr.bf16.mxu0 %v3121
    %4118 = vmatmul.mubr.bf16.gmra.mrb[0].mxu0 %v3120
    %v4119 = vpop.f32.mrb[0].mxu0
    %v4120 = vadd.f32 %v3959, %v4119
    %v4121 = vpop.f32.mrb[0].mxu0
    %v4122 = vpop.f32.mrb[0].mxu0
    %v4123 = vadd.f32 %v3962, %v4122
    %v4124 = vpop.f32.mrb[0].mxu0
    %4125 = vmatprep.mubr.bf16.mxu0 %v3129
    %4126 = vmatmul.mubr.bf16.gmra.mrb[0].mxu0 %v3128
    %v4127 = vpop.f32.mrb[0].mxu0
    %v4128 = vadd.f32 %v3967, %v4127
    %v4129 = vpop.f32.mrb[0].mxu0
    %v4130 = vpop.f32.mrb[0].mxu0
    %v4131 = vadd.f32 %v3970, %v4130
    %v4132 = vpop.f32.mrb[0].mxu0
    %4133 = vmatprep.mubr.bf16.mxu0 %v3137
    %4134 = vmatmul.mubr.bf16.gmra.mrb[0].mxu0 %v3136
    %v4135 = vpop.f32.mrb[0].mxu0
    %v4136 = vadd.f32 %v3975, %v4135
    %v4137 = vpop.f32.mrb[0].mxu0
    %v4138 = vpop.f32.mrb[0].mxu0
    %v4139 = vadd.f32 %v3978, %v4138
    %v4140 = vpop.f32.mrb[0].mxu0
    %4141 = vmatprep.mubr.bf16.mxu0 %v3145
    %4142 = vmatmul.mubr.bf16.gmra.mrb[0].mxu0 %v3144
    %v4143 = vpop.f32.mrb[0].mxu0
    %v4144 = vadd.f32 %v3983, %v4143
    %v4145 = vpop.f32.mrb[0].mxu0
    %v4146 = vpop.f32.mrb[0].mxu0
    %v4147 = vadd.f32 %v3986, %v4146
    %v4148 = vpop.f32.mrb[0].mxu0
    %4149 = vmatprep.mubr.bf16.mxu0 %v3153
    %4150 = vmatmul.mubr.bf16.gmra.mrb[0].mxu0 %v3152
    %v4151 = vpop.f32.mrb[0].mxu0
    %v4152 = vadd.f32 %v3991, %v4151
    %v4153 = vpop.f32.mrb[0].mxu0
    %v4154 = vpop.f32.mrb[0].mxu0
    %v4155 = vadd.f32 %v3994, %v4154
    %v4156 = vpop.f32.mrb[0].mxu0
    %4157 = vmatprep.mubr.bf16.mxu0 %v3161
    %4158 = vmatmul.mubr.bf16.gmra.mrb[0].mxu0 %v3160
    %v4159 = vpop.f32.mrb[0].mxu0
    %v4160 = vadd.f32 %v3999, %v4159
    %v4161 = vpop.f32.mrb[0].mxu0
    %v4162 = vpop.f32.mrb[0].mxu0
    %v4163 = vadd.f32 %v4002, %v4162
    %v4164 = vpop.f32.mrb[0].mxu0
    %4165 = vmatprep.mubr.bf16.mxu0 %v3169
    %4166 = vmatmul.mubr.bf16.gmra.mrb[0].mxu0 %v3168
    %v4167 = vpop.f32.mrb[0].mxu0
    %v4168 = vadd.f32 %v4007, %v4167
    %v4169 = vpop.f32.mrb[0].mxu0
    %v4170 = vpop.f32.mrb[0].mxu0
    %v4171 = vadd.f32 %v4010, %v4170
    %v4172 = vpop.f32.mrb[0].mxu0
    %4173 = vmatprep.mubr.bf16.mxu0 %v3177
    %4174 = vmatmul.mubr.bf16.gmra.mrb[0].mxu0 %v3176
    %v4175 = vpop.f32.mrb[0].mxu0
    %v4176 = vadd.f32 %v4015, %v4175
    %v4177 = vpop.f32.mrb[0].mxu0
    %v4178 = vpop.f32.mrb[0].mxu0
    %v4179 = vadd.f32 %v4018, %v4178
    %v4180 = vpop.f32.mrb[0].mxu0
    %4181 = vmatprep.mubr.bf16.mxu0 %v3185
    %4182 = vmatmul.mubr.bf16.gmra.mrb[0].mxu0 %v3184
    %v4183 = vpop.f32.mrb[0].mxu0
    %v4184 = vadd.f32 %v4023, %v4183
    %v4185 = vpop.f32.mrb[0].mxu0
    %v4186 = vpop.f32.mrb[0].mxu0
    %v4187 = vadd.f32 %v4026, %v4186
    %v4188 = vpop.f32.mrb[0].mxu0
    %4189 = vmatprep.mubr.bf16.mxu0 %v3193
    %4190 = vmatmul.mubr.bf16.gmra.mrb[0].mxu0 %v3192
    %v4191 = vpop.f32.mrb[0].mxu0
    %v4192 = vadd.f32 %v4031, %v4191
    %v4193 = vpop.f32.mrb[0].mxu0
    %v4194 = vpop.f32.mrb[0].mxu0
    %v4195 = vadd.f32 %v4034, %v4194
    %v4196 = vpop.f32.mrb[0].mxu0
    %4197 = vmatprep.mubr.bf16.mxu0 %v3201
    %4198 = vmatmul.mubr.bf16.gmra.mrb[0].mxu0 %v3200
    %v4199 = vpop.f32.mrb[0].mxu0
    %v4200 = vadd.f32 %v4039, %v4199
    %v4201 = vpop.f32.mrb[0].mxu0
    %v4202 = vpop.f32.mrb[0].mxu0
    %v4203 = vadd.f32 %v4042, %v4202
    %v4204 = vpop.f32.mrb[0].mxu0
    %4205 = vmatprep.mubr.bf16.mxu0 %v3209
    %4206 = vmatmul.mubr.bf16.gmra.mrb[0].mxu0 %v3208
    %v4207 = vpop.f32.mrb[0].mxu0
    %v4208 = vadd.f32 %v4047, %v4207
    %v4209 = vpop.f32.mrb[0].mxu0
    %v4210 = vpop.f32.mrb[0].mxu0
    %v4211 = vadd.f32 %v4050, %v4210
    %v4212 = vpop.f32.mrb[0].mxu0
    %4213 = vmatprep.mubr.bf16.mxu0 %v3217
    %4214 = vmatmul.mubr.bf16.gmra.mrb[0].mxu0 %v3216
    %v4215 = vpop.f32.mrb[0].mxu0
    %v4216 = vadd.f32 %v4055, %v4215
    %v4217 = vpop.f32.mrb[0].mxu0
    %v4218 = vpop.f32.mrb[0].mxu0
    %v4219 = vadd.f32 %v4058, %v4218
    %v4220 = vpop.f32.mrb[0].mxu0
    %4221 = vmatprep.mubr.bf16.mxu0 %v3225
    %4222 = vmatmul.mubr.bf16.gmra.mrb[0].mxu0 %v3224
    %v4223 = vpop.f32.mrb[0].mxu0
    %v4224 = vadd.f32 %v4063, %v4223
    %v4225 = vpop.f32.mrb[0].mxu0
    %v4226 = vpop.f32.mrb[0].mxu0
    %v4227 = vadd.f32 %v4066, %v4226
    %v4228 = vpop.f32.mrb[0].mxu0
    %4229 = vdwg.mxu0
    %4230 = vmatprep.subr.bf16.mxu0 0
    %4231 = vmatpush1.bf16.msra.mxu0 %v3667
    %4232 = vmatprep.subr.bf16.mxu0 0
    %4233 = vmatpush1.bf16.msra.mxu0 %v3668
    %4234 = vmatprep.subr.bf16.mxu0 0
    %4235 = vmatpush1.bf16.msra.mxu0 %v3669
    %4236 = vmatprep.subr.bf16.mxu0 0
    %4237 = vmatpush1.bf16.msra.mxu0 %v3670
    %4238 = vmatprep.subr.bf16.mxu0 0
    %4239 = vmatpush1.bf16.msra.mxu0 %v3671
    %4240 = vmatprep.subr.bf16.mxu0 0
    %4241 = vmatpush1.bf16.msra.mxu0 %v3672
    %4242 = vmatprep.subr.bf16.mxu0 0
    %4243 = vmatpush1.bf16.msra.mxu0 %v3673
    %4244 = vmatprep.subr.bf16.mxu0 0
    %4245 = vmatpush1.bf16.msra.mxu0 %v3674
    %4246 = vmatprep.subr.bf16.mxu0 0
    %4247 = vmatpush1.bf16.msra.mxu0 %v3675
    %4248 = vmatprep.subr.bf16.mxu0 0
    %4249 = vmatpush1.bf16.msra.mxu0 %v3676
    %4250 = vmatprep.subr.bf16.mxu0 0
    %4251 = vmatpush1.bf16.msra.mxu0 %v3677
    %4252 = vmatprep.subr.bf16.mxu0 0
    %4253 = vmatpush1.bf16.msra.mxu0 %v3678
    %4254 = vmatprep.subr.bf16.mxu0 0
    %4255 = vmatpush1.bf16.msra.mxu0 %v3679
    %4256 = vmatprep.subr.bf16.mxu0 0
    %4257 = vmatpush1.bf16.msra.mxu0 %v3680
    %4258 = vmatprep.subr.bf16.mxu0 0
    %4259 = vmatpush1.bf16.msra.mxu0 %v3681
    %4260 = vmatprep.subr.bf16.mxu0 0
    %4261 = vmatpush1.bf16.msra.mxu0 %v3682
    %4262 = vmatprep.mubr.bf16.mxu0 %v3107
    %4263 = vmatmul.mubr.bf16.gmra.mrb[0].mxu0 %v3106
    %v4264 = vpop.f32.mrb[0].mxu0
    %v4265 = vadd.f32 %v4104, %v4264
    %v4266 = vpop.f32.mrb[0].mxu0
    %v4267 = vpop.f32.mrb[0].mxu0
    %v4268 = vadd.f32 %v4107, %v4267
    %v4269 = vpop.f32.mrb[0].mxu0
    %4270 = vmatprep.mubr.bf16.mxu0 %v3115
    %4271 = vmatmul.mubr.bf16.gmra.mrb[0].mxu0 %v3114
    %v4272 = vpop.f32.mrb[0].mxu0
    %v4273 = vadd.f32 %v4112, %v4272
    %v4274 = vpop.f32.mrb[0].mxu0
    %v4275 = vpop.f32.mrb[0].mxu0
    %v4276 = vadd.f32 %v4115, %v4275
    %v4277 = vpop.f32.mrb[0].mxu0
    %4278 = vmatprep.mubr.bf16.mxu0 %v3123
    %4279 = vmatmul.mubr.bf16.gmra.mrb[0].mxu0 %v3122
    %v4280 = vpop.f32.mrb[0].mxu0
    %v4281 = vadd.f32 %v4120, %v4280
    %v4282 = vpop.f32.mrb[0].mxu0
    %v4283 = vpop.f32.mrb[0].mxu0
    %v4284 = vadd.f32 %v4123, %v4283
    %v4285 = vpop.f32.mrb[0].mxu0
    %4286 = vmatprep.mubr.bf16.mxu0 %v3131
    %4287 = vmatmul.mubr.bf16.gmra.mrb[0].mxu0 %v3130
    %v4288 = vpop.f32.mrb[0].mxu0
    %v4289 = vadd.f32 %v4128, %v4288
    %v4290 = vpop.f32.mrb[0].mxu0
    %v4291 = vpop.f32.mrb[0].mxu0
    %v4292 = vadd.f32 %v4131, %v4291
    %v4293 = vpop.f32.mrb[0].mxu0
    %4294 = vmatprep.mubr.bf16.mxu0 %v3139
    %4295 = vmatmul.mubr.bf16.gmra.mrb[0].mxu0 %v3138
    %v4296 = vpop.f32.mrb[0].mxu0
    %v4297 = vadd.f32 %v4136, %v4296
    %v4298 = vpop.f32.mrb[0].mxu0
    %v4299 = vpop.f32.mrb[0].mxu0
    %v4300 = vadd.f32 %v4139, %v4299
    %v4301 = vpop.f32.mrb[0].mxu0
    %4302 = vmatprep.mubr.bf16.mxu0 %v3147
    %4303 = vmatmul.mubr.bf16.gmra.mrb[0].mxu0 %v3146
    %v4304 = vpop.f32.mrb[0].mxu0
    %v4305 = vadd.f32 %v4144, %v4304
    %v4306 = vpop.f32.mrb[0].mxu0
    %v4307 = vpop.f32.mrb[0].mxu0
    %v4308 = vadd.f32 %v4147, %v4307
    %v4309 = vpop.f32.mrb[0].mxu0
    %4310 = vmatprep.mubr.bf16.mxu0 %v3155
    %4311 = vmatmul.mubr.bf16.gmra.mrb[0].mxu0 %v3154
    %v4312 = vpop.f32.mrb[0].mxu0
    %v4313 = vadd.f32 %v4152, %v4312
    %v4314 = vpop.f32.mrb[0].mxu0
    %v4315 = vpop.f32.mrb[0].mxu0
    %v4316 = vadd.f32 %v4155, %v4315
    %v4317 = vpop.f32.mrb[0].mxu0
    %4318 = vmatprep.mubr.bf16.mxu0 %v3163
    %4319 = vmatmul.mubr.bf16.gmra.mrb[0].mxu0 %v3162
    %v4320 = vpop.f32.mrb[0].mxu0
    %v4321 = vadd.f32 %v4160, %v4320
    %v4322 = vpop.f32.mrb[0].mxu0
    %v4323 = vpop.f32.mrb[0].mxu0
    %v4324 = vadd.f32 %v4163, %v4323
    %v4325 = vpop.f32.mrb[0].mxu0
    %4326 = vmatprep.mubr.bf16.mxu0 %v3171
    %4327 = vmatmul.mubr.bf16.gmra.mrb[0].mxu0 %v3170
    %v4328 = vpop.f32.mrb[0].mxu0
    %v4329 = vadd.f32 %v4168, %v4328
    %v4330 = vpop.f32.mrb[0].mxu0
    %v4331 = vpop.f32.mrb[0].mxu0
    %v4332 = vadd.f32 %v4171, %v4331
    %v4333 = vpop.f32.mrb[0].mxu0
    %4334 = vmatprep.mubr.bf16.mxu0 %v3179
    %4335 = vmatmul.mubr.bf16.gmra.mrb[0].mxu0 %v3178
    %v4336 = vpop.f32.mrb[0].mxu0
    %v4337 = vadd.f32 %v4176, %v4336
    %v4338 = vpop.f32.mrb[0].mxu0
    %v4339 = vpop.f32.mrb[0].mxu0
    %v4340 = vadd.f32 %v4179, %v4339
    %v4341 = vpop.f32.mrb[0].mxu0
    %4342 = vmatprep.mubr.bf16.mxu0 %v3187
    %4343 = vmatmul.mubr.bf16.gmra.mrb[0].mxu0 %v3186
    %v4344 = vpop.f32.mrb[0].mxu0
    %v4345 = vadd.f32 %v4184, %v4344
    %v4346 = vpop.f32.mrb[0].mxu0
    %v4347 = vpop.f32.mrb[0].mxu0
    %v4348 = vadd.f32 %v4187, %v4347
    %v4349 = vpop.f32.mrb[0].mxu0
    %4350 = vmatprep.mubr.bf16.mxu0 %v3195
    %4351 = vmatmul.mubr.bf16.gmra.mrb[0].mxu0 %v3194
    %v4352 = vpop.f32.mrb[0].mxu0
    %v4353 = vadd.f32 %v4192, %v4352
    %v4354 = vpop.f32.mrb[0].mxu0
    %v4355 = vpop.f32.mrb[0].mxu0
    %v4356 = vadd.f32 %v4195, %v4355
    %v4357 = vpop.f32.mrb[0].mxu0
    %4358 = vmatprep.mubr.bf16.mxu0 %v3203
    %4359 = vmatmul.mubr.bf16.gmra.mrb[0].mxu0 %v3202
    %v4360 = vpop.f32.mrb[0].mxu0
    %v4361 = vadd.f32 %v4200, %v4360
    %v4362 = vpop.f32.mrb[0].mxu0
    %v4363 = vpop.f32.mrb[0].mxu0
    %v4364 = vadd.f32 %v4203, %v4363
    %v4365 = vpop.f32.mrb[0].mxu0
    %4366 = vmatprep.mubr.bf16.mxu0 %v3211
    %4367 = vmatmul.mubr.bf16.gmra.mrb[0].mxu0 %v3210
    %v4368 = vpop.f32.mrb[0].mxu0
    %v4369 = vadd.f32 %v4208, %v4368
    %v4370 = vpop.f32.mrb[0].mxu0
    %v4371 = vpop.f32.mrb[0].mxu0
    %v4372 = vadd.f32 %v4211, %v4371
    %v4373 = vpop.f32.mrb[0].mxu0
    %4374 = vmatprep.mubr.bf16.mxu0 %v3219
    %4375 = vmatmul.mubr.bf16.gmra.mrb[0].mxu0 %v3218
    %v4376 = vpop.f32.mrb[0].mxu0
    %v4377 = vadd.f32 %v4216, %v4376
    %v4378 = vpop.f32.mrb[0].mxu0
    %v4379 = vpop.f32.mrb[0].mxu0
    %v4380 = vadd.f32 %v4219, %v4379
    %v4381 = vpop.f32.mrb[0].mxu0
    %4382 = vmatprep.mubr.bf16.mxu0 %v3227
    %4383 = vmatmul.mubr.bf16.gmra.mrb[0].mxu0 %v3226
    %v4384 = vpop.f32.mrb[0].mxu0
    %v4385 = vadd.f32 %v4224, %v4384
    %v4386 = vpop.f32.mrb[0].mxu0
    %v4387 = vpop.f32.mrb[0].mxu0
    %v4388 = vadd.f32 %v4227, %v4387
    %v4389 = vpop.f32.mrb[0].mxu0
    %4390 = vdwg.mxu0
    %v4391 = vmax.f32 %v4265, 0.0
    %v4392 = vmax.f32 %v4268, 0.0
    %v4393 = vmax.f32 %v4273, 0.0
    %v4394 = vmax.f32 %v4276, 0.0
    %v4395 = vmax.f32 %v4281, 0.0
    %v4396 = vmax.f32 %v4284, 0.0
    %v4397 = vmax.f32 %v4289, 0.0
    %v4398 = vmax.f32 %v4292, 0.0
    %v4399 = vmax.f32 %v4297, 0.0
    %v4400 = vmax.f32 %v4300, 0.0
    %v4401 = vmax.f32 %v4305, 0.0
    %v4402 = vmax.f32 %v4308, 0.0
    %v4403 = vmax.f32 %v4313, 0.0
    %v4404 = vmax.f32 %v4316, 0.0
    %v4405 = vmax.f32 %v4321, 0.0
    %v4406 = vmax.f32 %v4324, 0.0
    %v4407 = vmax.f32 %v4329, 0.0
    %v4408 = vmax.f32 %v4332, 0.0
    %v4409 = vmax.f32 %v4337, 0.0
    %v4410 = vmax.f32 %v4340, 0.0
    %v4411 = vmax.f32 %v4345, 0.0
    %v4412 = vmax.f32 %v4348, 0.0
    %v4413 = vmax.f32 %v4353, 0.0
    %v4414 = vmax.f32 %v4356, 0.0
    %v4415 = vmax.f32 %v4361, 0.0
    %v4416 = vmax.f32 %v4364, 0.0
    %v4417 = vmax.f32 %v4369, 0.0
    %v4418 = vmax.f32 %v4372, 0.0
    %v4419 = vmax.f32 %v4377, 0.0
    %v4420 = vmax.f32 %v4380, 0.0
    %v4421 = vmax.f32 %v4385, 0.0
    %v4422 = vmax.f32 %v4388, 0.0
    %v4423 = vpack.c.bf16 %v4392, %v4391
    %v4424 = vpack.c.bf16 %v4394, %v4393
    %v4425 = vpack.c.bf16 %v4396, %v4395
    %v4426 = vpack.c.bf16 %v4398, %v4397
    %v4427 = vpack.c.bf16 %v4400, %v4399
    %v4428 = vpack.c.bf16 %v4402, %v4401
    %v4429 = vpack.c.bf16 %v4404, %v4403
    %v4430 = vpack.c.bf16 %v4406, %v4405
    %v4431 = vpack.c.bf16 %v4408, %v4407
    %v4432 = vpack.c.bf16 %v4410, %v4409
    %v4433 = vpack.c.bf16 %v4412, %v4411
    %v4434 = vpack.c.bf16 %v4414, %v4413
    %v4435 = vpack.c.bf16 %v4416, %v4415
    %v4436 = vpack.c.bf16 %v4418, %v4417
    %v4437 = vpack.c.bf16 %v4420, %v4419
    %v4438 = vpack.c.bf16 %v4422, %v4421
    %v4439 = vld [vmem:[%s3] sm:$0xf]
    %v4440 = vld [vmem:[%s3 + $0x4] sm:$0xf]
    %v4441 = vld [vmem:[%s3 + $0x8] sm:$0xf]
    %v4442 = vld [vmem:[%s3 + $0xc] sm:$0xf]
    %v4443 = vld [vmem:[%s3 + $0x10] sm:$0xf]
    %v4444 = vld [vmem:[%s3 + $0x14] sm:$0xf]
    %v4445 = vld [vmem:[%s3 + $0x18] sm:$0xf]
    %v4446 = vld [vmem:[%s3 + $0x1c] sm:$0xf]
    %v4447 = vld [vmem:[%s3 + $0x20] sm:$0xf]
    %v4448 = vld [vmem:[%s3 + $0x24] sm:$0xf]
    %v4449 = vld [vmem:[%s3 + $0x28] sm:$0xf]
    %v4450 = vld [vmem:[%s3 + $0x2c] sm:$0xf]
    %v4451 = vld [vmem:[%s3 + $0x30] sm:$0xf]
    %v4452 = vld [vmem:[%s3 + $0x34] sm:$0xf]
    %v4453 = vld [vmem:[%s3 + $0x38] sm:$0xf]
    %v4454 = vld [vmem:[%s3 + $0x3c] sm:$0xf]
    %v4455 = vld [vmem:[%s4] sm:$0x1]
    %v4457 = vlaneseq
    %v4458 = vshrl.u32 %v4457, 7
    %v4459 = vsub.s32 0, %v4458
    %v4460 = vrot.slane %v4455, %v4459
    %v4478 = vunpack.c.l.b16 %v4439
    %v4479 = vunpack.c.l.b16 %v4440
    %v4480 = vunpack.c.l.b16 %v4441
    %v4481 = vunpack.c.l.b16 %v4442
    %v4482 = vunpack.c.l.b16 %v4443
    %v4483 = vunpack.c.l.b16 %v4444
    %v4484 = vunpack.c.l.b16 %v4445
    %v4485 = vunpack.c.l.b16 %v4446
    %v4486 = vunpack.c.l.b16 %v4447
    %v4487 = vunpack.c.l.b16 %v4448
    %v4488 = vunpack.c.l.b16 %v4449
    %v4489 = vunpack.c.l.b16 %v4450
    %v4490 = vunpack.c.l.b16 %v4451
    %v4491 = vunpack.c.l.b16 %v4452
    %v4492 = vunpack.c.l.b16 %v4453
    %v4493 = vunpack.c.l.b16 %v4454
    %v4494 = vpack.c.b16 %v4479, %v4478
    %v4495 = vpack.c.b16 %v4481, %v4480
    %v4496 = vpack.c.b16 %v4483, %v4482
    %v4497 = vpack.c.b16 %v4485, %v4484
    %v4498 = vpack.c.b16 %v4487, %v4486
    %v4499 = vpack.c.b16 %v4489, %v4488
    %v4500 = vpack.c.b16 %v4491, %v4490
    %v4501 = vpack.c.b16 %v4493, %v4492
    %4510 = vmatprep.subr.bf16.mxu0 0
    %4511 = vmatpush1.bf16.msra.mxu0 %v4494
    %4512 = vmatprep.subr.bf16.mxu0 0
    %4513 = vmatpush1.bf16.msra.mxu0 %v4495
    %4514 = vmatprep.subr.bf16.mxu0 0
    %4515 = vmatpush1.bf16.msra.mxu0 %v4496
    %4516 = vmatprep.subr.bf16.mxu0 0
    %4517 = vmatpush1.bf16.msra.mxu0 %v4497
    %4518 = vmatprep.subr.bf16.mxu0 0
    %4519 = vmatpush1.bf16.msra.mxu0 %v4498
    %4520 = vmatprep.subr.bf16.mxu0 0
    %4521 = vmatpush1.bf16.msra.mxu0 %v4499
    %4522 = vmatprep.subr.bf16.mxu0 0
    %4523 = vmatpush1.bf16.msra.mxu0 %v4500
    %4524 = vmatprep.subr.bf16.mxu0 0
    %4525 = vmatpush1.bf16.msra.mxu0 %v4501
    %4526 = vmatprep.subr.bf16.mxu0 0
    %4527 = vmatpush1.bf16.msra.mxu0 0
    %4528 = vmatprep.subr.bf16.mxu0 0
    %4529 = vmatpush1.bf16.msra.mxu0 0
    %4530 = vmatprep.subr.bf16.mxu0 0
    %4531 = vmatpush1.bf16.msra.mxu0 0
    %4532 = vmatprep.subr.bf16.mxu0 0
    %4533 = vmatpush1.bf16.msra.mxu0 0
    %4534 = vmatprep.subr.bf16.mxu0 0
    %4535 = vmatpush1.bf16.msra.mxu0 0
    %4536 = vmatprep.subr.bf16.mxu0 0
    %4537 = vmatpush1.bf16.msra.mxu0 0
    %4538 = vmatprep.subr.bf16.mxu0 0
    %4539 = vmatpush1.bf16.msra.mxu0 0
    %4540 = vmatprep.subr.bf16.mxu0 0
    %4541 = vmatpush1.bf16.msra.mxu0 0
    %4542 = vmatprep.mubr.bf16.mxu0 0
    %4543 = vmatmul.mubr.bf16.gmra.mrb[0].mxu0 %v4423
    %v4544 = vpop.f32.mrb[0].mxu0
    %v4545 = vadd.f32 %v4460, %v4544
    %v4546 = vpop.f32.mrb[0].mxu0
    %v4547 = vpop.f32.mrb[0].mxu0
    %v4548 = vadd.f32 %v4460, %v4547
    %v4549 = vpop.f32.mrb[0].mxu0
    %4550 = vmatprep.mubr.bf16.mxu0 0
    %4551 = vmatmul.mubr.bf16.gmra.mrb[0].mxu0 %v4424
    %v4552 = vpop.f32.mrb[0].mxu0
    %v4553 = vadd.f32 %v4460, %v4552
    %v4554 = vpop.f32.mrb[0].mxu0
    %v4555 = vpop.f32.mrb[0].mxu0
    %v4556 = vadd.f32 %v4460, %v4555
    %v4557 = vpop.f32.mrb[0].mxu0
    %4558 = vmatprep.mubr.bf16.mxu0 0
    %4559 = vmatmul.mubr.bf16.gmra.mrb[0].mxu0 %v4425
    %v4560 = vpop.f32.mrb[0].mxu0
    %v4561 = vadd.f32 %v4460, %v4560
    %v4562 = vpop.f32.mrb[0].mxu0
    %v4563 = vpop.f32.mrb[0].mxu0
    %v4564 = vadd.f32 %v4460, %v4563
    %v4565 = vpop.f32.mrb[0].mxu0
    %4566 = vmatprep.mubr.bf16.mxu0 0
    %4567 = vmatmul.mubr.bf16.gmra.mrb[0].mxu0 %v4426
    %v4568 = vpop.f32.mrb[0].mxu0
    %v4569 = vadd.f32 %v4460, %v4568
    %v4570 = vpop.f32.mrb[0].mxu0
    %v4571 = vpop.f32.mrb[0].mxu0
    %v4572 = vadd.f32 %v4460, %v4571
    %v4573 = vpop.f32.mrb[0].mxu0
    %4574 = vmatprep.mubr.bf16.mxu0 0
    %4575 = vmatmul.mubr.bf16.gmra.mrb[0].mxu0 %v4427
    %v4576 = vpop.f32.mrb[0].mxu0
    %v4577 = vadd.f32 %v4460, %v4576
    %v4578 = vpop.f32.mrb[0].mxu0
    %v4579 = vpop.f32.mrb[0].mxu0
    %v4580 = vadd.f32 %v4460, %v4579
    %v4581 = vpop.f32.mrb[0].mxu0
    %4582 = vmatprep.mubr.bf16.mxu0 0
    %4583 = vmatmul.mubr.bf16.gmra.mrb[0].mxu0 %v4428
    %v4584 = vpop.f32.mrb[0].mxu0
    %v4585 = vadd.f32 %v4460, %v4584
    %v4586 = vpop.f32.mrb[0].mxu0
    %v4587 = vpop.f32.mrb[0].mxu0
    %v4588 = vadd.f32 %v4460, %v4587
    %v4589 = vpop.f32.mrb[0].mxu0
    %4590 = vmatprep.mubr.bf16.mxu0 0
    %4591 = vmatmul.mubr.bf16.gmra.mrb[0].mxu0 %v4429
    %v4592 = vpop.f32.mrb[0].mxu0
    %v4593 = vadd.f32 %v4460, %v4592
    %v4594 = vpop.f32.mrb[0].mxu0
    %v4595 = vpop.f32.mrb[0].mxu0
    %v4596 = vadd.f32 %v4460, %v4595
    %v4597 = vpop.f32.mrb[0].mxu0
    %4598 = vmatprep.mubr.bf16.mxu0 0
    %4599 = vmatmul.mubr.bf16.gmra.mrb[0].mxu0 %v4430
    %v4600 = vpop.f32.mrb[0].mxu0
    %v4601 = vadd.f32 %v4460, %v4600
    %v4602 = vpop.f32.mrb[0].mxu0
    %v4603 = vpop.f32.mrb[0].mxu0
    %v4604 = vadd.f32 %v4460, %v4603
    %v4605 = vpop.f32.mrb[0].mxu0
    %4606 = vmatprep.mubr.bf16.mxu0 0
    %4607 = vmatmul.mubr.bf16.gmra.mrb[0].mxu0 %v4431
    %v4608 = vpop.f32.mrb[0].mxu0
    %v4609 = vadd.f32 %v4460, %v4608
    %v4610 = vpop.f32.mrb[0].mxu0
    %v4611 = vpop.f32.mrb[0].mxu0
    %v4612 = vadd.f32 %v4460, %v4611
    %v4613 = vpop.f32.mrb[0].mxu0
    %4614 = vmatprep.mubr.bf16.mxu0 0
    %4615 = vmatmul.mubr.bf16.gmra.mrb[0].mxu0 %v4432
    %v4616 = vpop.f32.mrb[0].mxu0
    %v4617 = vadd.f32 %v4460, %v4616
    %v4618 = vpop.f32.mrb[0].mxu0
    %v4619 = vpop.f32.mrb[0].mxu0
    %v4620 = vadd.f32 %v4460, %v4619
    %v4621 = vpop.f32.mrb[0].mxu0
    %4622 = vmatprep.mubr.bf16.mxu0 0
    %4623 = vmatmul.mubr.bf16.gmra.mrb[0].mxu0 %v4433
    %v4624 = vpop.f32.mrb[0].mxu0
    %v4625 = vadd.f32 %v4460, %v4624
    %v4626 = vpop.f32.mrb[0].mxu0
    %v4627 = vpop.f32.mrb[0].mxu0
    %v4628 = vadd.f32 %v4460, %v4627
    %v4629 = vpop.f32.mrb[0].mxu0
    %4630 = vmatprep.mubr.bf16.mxu0 0
    %4631 = vmatmul.mubr.bf16.gmra.mrb[0].mxu0 %v4434
    %v4632 = vpop.f32.mrb[0].mxu0
    %v4633 = vadd.f32 %v4460, %v4632
    %v4634 = vpop.f32.mrb[0].mxu0
    %v4635 = vpop.f32.mrb[0].mxu0
    %v4636 = vadd.f32 %v4460, %v4635
    %v4637 = vpop.f32.mrb[0].mxu0
    %4638 = vmatprep.mubr.bf16.mxu0 0
    %4639 = vmatmul.mubr.bf16.gmra.mrb[0].mxu0 %v4435
    %v4640 = vpop.f32.mrb[0].mxu0
    %v4641 = vadd.f32 %v4460, %v4640
    %v4642 = vpop.f32.mrb[0].mxu0
    %v4643 = vpop.f32.mrb[0].mxu0
    %v4644 = vadd.f32 %v4460, %v4643
    %v4645 = vpop.f32.mrb[0].mxu0
    %4646 = vmatprep.mubr.bf16.mxu0 0
    %4647 = vmatmul.mubr.bf16.gmra.mrb[0].mxu0 %v4436
    %v4648 = vpop.f32.mrb[0].mxu0
    %v4649 = vadd.f32 %v4460, %v4648
    %v4650 = vpop.f32.mrb[0].mxu0
    %v4651 = vpop.f32.mrb[0].mxu0
    %v4652 = vadd.f32 %v4460, %v4651
    %v4653 = vpop.f32.mrb[0].mxu0
    %4654 = vmatprep.mubr.bf16.mxu0 0
    %4655 = vmatmul.mubr.bf16.gmra.mrb[0].mxu0 %v4437
    %v4656 = vpop.f32.mrb[0].mxu0
    %v4657 = vadd.f32 %v4460, %v4656
    %v4658 = vpop.f32.mrb[0].mxu0
    %v4659 = vpop.f32.mrb[0].mxu0
    %v4660 = vadd.f32 %v4460, %v4659
    %v4661 = vpop.f32.mrb[0].mxu0
    %4662 = vmatprep.mubr.bf16.mxu0 0
    %4663 = vmatmul.mubr.bf16.gmra.mrb[0].mxu0 %v4438
    %v4664 = vpop.f32.mrb[0].mxu0
    %v4665 = vadd.f32 %v4460, %v4664
    %v4666 = vpop.f32.mrb[0].mxu0
    %v4667 = vpop.f32.mrb[0].mxu0
    %v4668 = vadd.f32 %v4460, %v4667
    %v4669 = vpop.f32.mrb[0].mxu0
    %4670 = vdwg.mxu0
    %v4671 = vmax.f32 %v4545, 0.0
    %v4672 = vmax.f32 %v4548, 0.0
    %v4673 = vmax.f32 %v4553, 0.0
    %v4674 = vmax.f32 %v4556, 0.0
    %v4675 = vmax.f32 %v4561, 0.0
    %v4676 = vmax.f32 %v4564, 0.0
    %v4677 = vmax.f32 %v4569, 0.0
    %v4678 = vmax.f32 %v4572, 0.0
    %v4679 = vmax.f32 %v4577, 0.0
    %v4680 = vmax.f32 %v4580, 0.0
    %v4681 = vmax.f32 %v4585, 0.0
    %v4682 = vmax.f32 %v4588, 0.0
    %v4683 = vmax.f32 %v4593, 0.0
    %v4684 = vmax.f32 %v4596, 0.0
    %v4685 = vmax.f32 %v4601, 0.0
    %v4686 = vmax.f32 %v4604, 0.0
    %v4687 = vmax.f32 %v4609, 0.0
    %v4688 = vmax.f32 %v4612, 0.0
    %v4689 = vmax.f32 %v4617, 0.0
    %v4690 = vmax.f32 %v4620, 0.0
    %v4691 = vmax.f32 %v4625, 0.0
    %v4692 = vmax.f32 %v4628, 0.0
    %v4693 = vmax.f32 %v4633, 0.0
    %v4694 = vmax.f32 %v4636, 0.0
    %v4695 = vmax.f32 %v4641, 0.0
    %v4696 = vmax.f32 %v4644, 0.0
    %v4697 = vmax.f32 %v4649, 0.0
    %v4698 = vmax.f32 %v4652, 0.0
    %v4699 = vmax.f32 %v4657, 0.0
    %v4700 = vmax.f32 %v4660, 0.0
    %v4701 = vmax.f32 %v4665, 0.0
    %v4702 = vmax.f32 %v4668, 0.0
    %v4703 = vpack.c.bf16 %v4672, %v4671
    %v4704 = vpack.c.bf16 %v4674, %v4673
    %v4705 = vpack.c.bf16 %v4676, %v4675
    %v4706 = vpack.c.bf16 %v4678, %v4677
    %v4707 = vpack.c.bf16 %v4680, %v4679
    %v4708 = vpack.c.bf16 %v4682, %v4681
    %v4709 = vpack.c.bf16 %v4684, %v4683
    %v4710 = vpack.c.bf16 %v4686, %v4685
    %v4711 = vpack.c.bf16 %v4688, %v4687
    %v4712 = vpack.c.bf16 %v4690, %v4689
    %v4713 = vpack.c.bf16 %v4692, %v4691
    %v4714 = vpack.c.bf16 %v4694, %v4693
    %v4715 = vpack.c.bf16 %v4696, %v4695
    %v4716 = vpack.c.bf16 %v4698, %v4697
    %v4717 = vpack.c.bf16 %v4700, %v4699
    %v4718 = vpack.c.bf16 %v4702, %v4701
    %v4719 = vld [vmem:[%s5] sm:$0xf]
    %v4720 = vld [vmem:[%s5 + $0x4] sm:$0xf]
    %v4721 = vld [vmem:[%s5 + $0x8] sm:$0xf]
    %v4722 = vld [vmem:[%s5 + $0xc] sm:$0xf]
    %v4723 = vld [vmem:[%s5 + $0x10] sm:$0xf]
    %v4724 = vld [vmem:[%s5 + $0x14] sm:$0xf]
    %v4725 = vld [vmem:[%s5 + $0x18] sm:$0xf]
    %v4726 = vld [vmem:[%s5 + $0x1c] sm:$0xf]
    %v4727 = vld [vmem:[%s6] sm:$0x1]
    %v4729 = vlaneseq
    %v4730 = vshrl.u32 %v4729, 7
    %v4731 = vsub.s32 0, %v4730
    %v4732 = vrot.slane %v4727, %v4731
    %v4742 = vunpack.c.l.b16 %v4719
    %v4743 = vunpack.c.l.b16 %v4720
    %v4744 = vunpack.c.l.b16 %v4721
    %v4745 = vunpack.c.l.b16 %v4722
    %v4746 = vunpack.c.l.b16 %v4723
    %v4747 = vunpack.c.l.b16 %v4724
    %v4748 = vunpack.c.l.b16 %v4725
    %v4749 = vunpack.c.l.b16 %v4726
    %v4750 = vpack.c.b16 %v4743, %v4742
    %v4751 = vpack.c.b16 %v4745, %v4744
    %v4752 = vpack.c.b16 %v4747, %v4746
    %v4753 = vpack.c.b16 %v4749, %v4748
    %vm4758 = vcmask 523264
    %v4760 = vsel %vm4758, %v4703, 0
    %v4763 = vsel %vm4758, %v4704, 0
    %v4766 = vsel %vm4758, %v4705, 0
    %v4769 = vsel %vm4758, %v4706, 0
    %v4772 = vsel %vm4758, %v4707, 0
    %v4775 = vsel %vm4758, %v4708, 0
    %v4778 = vsel %vm4758, %v4709, 0
    %v4781 = vsel %vm4758, %v4710, 0
    %v4784 = vsel %vm4758, %v4711, 0
    %v4787 = vsel %vm4758, %v4712, 0
    %v4790 = vsel %vm4758, %v4713, 0
    %v4793 = vsel %vm4758, %v4714, 0
    %v4796 = vsel %vm4758, %v4715, 0
    %v4799 = vsel %vm4758, %v4716, 0
    %v4802 = vsel %vm4758, %v4717, 0
    %v4805 = vsel %vm4758, %v4718, 0
    %4807 = vmatprep.subr.bf16.mxu0 0
    %4808 = vmatpush1.bf16.msra.mxu0 %v4750
    %4809 = vmatprep.subr.bf16.mxu0 0
    %4810 = vmatpush1.bf16.msra.mxu0 %v4751
    %4811 = vmatprep.subr.bf16.mxu0 0
    %4812 = vmatpush1.bf16.msra.mxu0 %v4752
    %4813 = vmatprep.subr.bf16.mxu0 0
    %4814 = vmatpush1.bf16.msra.mxu0 %v4753
    %4815 = vmatprep.subr.bf16.mxu0 0
    %4816 = vmatpush1.bf16.msra.mxu0 0
    %4817 = vmatprep.subr.bf16.mxu0 0
    %4818 = vmatpush1.bf16.msra.mxu0 0
    %4819 = vmatprep.subr.bf16.mxu0 0
    %4820 = vmatpush1.bf16.msra.mxu0 0
    %4821 = vmatprep.subr.bf16.mxu0 0
    %4822 = vmatpush1.bf16.msra.mxu0 0
    %4823 = vmatprep.subr.bf16.mxu0 0
    %4824 = vmatpush1.bf16.msra.mxu0 0
    %4825 = vmatprep.subr.bf16.mxu0 0
    %4826 = vmatpush1.bf16.msra.mxu0 0
    %4827 = vmatprep.subr.bf16.mxu0 0
    %4828 = vmatpush1.bf16.msra.mxu0 0
    %4829 = vmatprep.subr.bf16.mxu0 0
    %4830 = vmatpush1.bf16.msra.mxu0 0
    %4831 = vmatprep.subr.bf16.mxu0 0
    %4832 = vmatpush1.bf16.msra.mxu0 0
    %4833 = vmatprep.subr.bf16.mxu0 0
    %4834 = vmatpush1.bf16.msra.mxu0 0
    %4835 = vmatprep.subr.bf16.mxu0 0
    %4836 = vmatpush1.bf16.msra.mxu0 0
    %4837 = vmatprep.subr.bf16.mxu0 0
    %4838 = vmatpush1.bf16.msra.mxu0 0
    %4839 = vmatprep.mubr.bf16.mxu0 0
    %4840 = vmatmul.mubr.bf16.gmra.mrb[0].mxu0 %v4760
    %v4841 = vpop.f32.mrb[0].mxu0
    %v4842 = vadd.f32 %v4732, %v4841
    %v4843 = vpop.f32.mrb[0].mxu0
    %v4844 = vpop.f32.mrb[0].mxu0
    %v4845 = vadd.f32 %v4732, %v4844
    %v4846 = vpop.f32.mrb[0].mxu0
    %4847 = vmatprep.mubr.bf16.mxu0 0
    %4848 = vmatmul.mubr.bf16.gmra.mrb[0].mxu0 %v4763
    %v4849 = vpop.f32.mrb[0].mxu0
    %v4850 = vadd.f32 %v4732, %v4849
    %v4851 = vpop.f32.mrb[0].mxu0
    %v4852 = vpop.f32.mrb[0].mxu0
    %v4853 = vadd.f32 %v4732, %v4852
    %v4854 = vpop.f32.mrb[0].mxu0
    %4855 = vmatprep.mubr.bf16.mxu0 0
    %4856 = vmatmul.mubr.bf16.gmra.mrb[0].mxu0 %v4766
    %v4857 = vpop.f32.mrb[0].mxu0
    %v4858 = vadd.f32 %v4732, %v4857
    %v4859 = vpop.f32.mrb[0].mxu0
    %v4860 = vpop.f32.mrb[0].mxu0
    %v4861 = vadd.f32 %v4732, %v4860
    %v4862 = vpop.f32.mrb[0].mxu0
    %4863 = vmatprep.mubr.bf16.mxu0 0
    %4864 = vmatmul.mubr.bf16.gmra.mrb[0].mxu0 %v4769
    %v4865 = vpop.f32.mrb[0].mxu0
    %v4866 = vadd.f32 %v4732, %v4865
    %v4867 = vpop.f32.mrb[0].mxu0
    %v4868 = vpop.f32.mrb[0].mxu0
    %v4869 = vadd.f32 %v4732, %v4868
    %v4870 = vpop.f32.mrb[0].mxu0
    %4871 = vmatprep.mubr.bf16.mxu0 0
    %4872 = vmatmul.mubr.bf16.gmra.mrb[0].mxu0 %v4772
    %v4873 = vpop.f32.mrb[0].mxu0
    %v4874 = vadd.f32 %v4732, %v4873
    %v4875 = vpop.f32.mrb[0].mxu0
    %v4876 = vpop.f32.mrb[0].mxu0
    %v4877 = vadd.f32 %v4732, %v4876
    %v4878 = vpop.f32.mrb[0].mxu0
    %4879 = vmatprep.mubr.bf16.mxu0 0
    %4880 = vmatmul.mubr.bf16.gmra.mrb[0].mxu0 %v4775
    %v4881 = vpop.f32.mrb[0].mxu0
    %v4882 = vadd.f32 %v4732, %v4881
    %v4883 = vpop.f32.mrb[0].mxu0
    %v4884 = vpop.f32.mrb[0].mxu0
    %v4885 = vadd.f32 %v4732, %v4884
    %v4886 = vpop.f32.mrb[0].mxu0
    %4887 = vmatprep.mubr.bf16.mxu0 0
    %4888 = vmatmul.mubr.bf16.gmra.mrb[0].mxu0 %v4778
    %v4889 = vpop.f32.mrb[0].mxu0
    %v4890 = vadd.f32 %v4732, %v4889
    %v4891 = vpop.f32.mrb[0].mxu0
    %v4892 = vpop.f32.mrb[0].mxu0
    %v4893 = vadd.f32 %v4732, %v4892
    %v4894 = vpop.f32.mrb[0].mxu0
    %4895 = vmatprep.mubr.bf16.mxu0 0
    %4896 = vmatmul.mubr.bf16.gmra.mrb[0].mxu0 %v4781
    %v4897 = vpop.f32.mrb[0].mxu0
    %v4898 = vadd.f32 %v4732, %v4897
    %v4899 = vpop.f32.mrb[0].mxu0
    %v4900 = vpop.f32.mrb[0].mxu0
    %v4901 = vadd.f32 %v4732, %v4900
    %v4902 = vpop.f32.mrb[0].mxu0
    %4903 = vmatprep.mubr.bf16.mxu0 0
    %4904 = vmatmul.mubr.bf16.gmra.mrb[0].mxu0 %v4784
    %v4905 = vpop.f32.mrb[0].mxu0
    %v4906 = vadd.f32 %v4732, %v4905
    %v4907 = vpop.f32.mrb[0].mxu0
    %v4908 = vpop.f32.mrb[0].mxu0
    %v4909 = vadd.f32 %v4732, %v4908
    %v4910 = vpop.f32.mrb[0].mxu0
    %4911 = vmatprep.mubr.bf16.mxu0 0
    %4912 = vmatmul.mubr.bf16.gmra.mrb[0].mxu0 %v4787
    %v4913 = vpop.f32.mrb[0].mxu0
    %v4914 = vadd.f32 %v4732, %v4913
    %v4915 = vpop.f32.mrb[0].mxu0
    %v4916 = vpop.f32.mrb[0].mxu0
    %v4917 = vadd.f32 %v4732, %v4916
    %v4918 = vpop.f32.mrb[0].mxu0
    %4919 = vmatprep.mubr.bf16.mxu0 0
    %4920 = vmatmul.mubr.bf16.gmra.mrb[0].mxu0 %v4790
    %v4921 = vpop.f32.mrb[0].mxu0
    %v4922 = vadd.f32 %v4732, %v4921
    %v4923 = vpop.f32.mrb[0].mxu0
    %v4924 = vpop.f32.mrb[0].mxu0
    %v4925 = vadd.f32 %v4732, %v4924
    %v4926 = vpop.f32.mrb[0].mxu0
    %4927 = vmatprep.mubr.bf16.mxu0 0
    %4928 = vmatmul.mubr.bf16.gmra.mrb[0].mxu0 %v4793
    %v4929 = vpop.f32.mrb[0].mxu0
    %v4930 = vadd.f32 %v4732, %v4929
    %v4931 = vpop.f32.mrb[0].mxu0
    %v4932 = vpop.f32.mrb[0].mxu0
    %v4933 = vadd.f32 %v4732, %v4932
    %v4934 = vpop.f32.mrb[0].mxu0
    %4935 = vmatprep.mubr.bf16.mxu0 0
    %4936 = vmatmul.mubr.bf16.gmra.mrb[0].mxu0 %v4796
    %v4937 = vpop.f32.mrb[0].mxu0
    %v4938 = vadd.f32 %v4732, %v4937
    %v4939 = vpop.f32.mrb[0].mxu0
    %v4940 = vpop.f32.mrb[0].mxu0
    %v4941 = vadd.f32 %v4732, %v4940
    %v4942 = vpop.f32.mrb[0].mxu0
    %4943 = vmatprep.mubr.bf16.mxu0 0
    %4944 = vmatmul.mubr.bf16.gmra.mrb[0].mxu0 %v4799
    %v4945 = vpop.f32.mrb[0].mxu0
    %v4946 = vadd.f32 %v4732, %v4945
    %v4947 = vpop.f32.mrb[0].mxu0
    %v4948 = vpop.f32.mrb[0].mxu0
    %v4949 = vadd.f32 %v4732, %v4948
    %v4950 = vpop.f32.mrb[0].mxu0
    %4951 = vmatprep.mubr.bf16.mxu0 0
    %4952 = vmatmul.mubr.bf16.gmra.mrb[0].mxu0 %v4802
    %v4953 = vpop.f32.mrb[0].mxu0
    %v4954 = vadd.f32 %v4732, %v4953
    %v4955 = vpop.f32.mrb[0].mxu0
    %v4956 = vpop.f32.mrb[0].mxu0
    %v4957 = vadd.f32 %v4732, %v4956
    %v4958 = vpop.f32.mrb[0].mxu0
    %4959 = vmatprep.mubr.bf16.mxu0 0
    %4960 = vmatmul.mubr.bf16.gmra.mrb[0].mxu0 %v4805
    %v4961 = vpop.f32.mrb[0].mxu0
    %v4962 = vadd.f32 %v4732, %v4961
    %v4963 = vpop.f32.mrb[0].mxu0
    %v4964 = vpop.f32.mrb[0].mxu0
    %v4965 = vadd.f32 %v4732, %v4964
    %v4966 = vpop.f32.mrb[0].mxu0
    %4967 = vdwg.mxu0
    %4968 = vmax.xlane.f32.xlu0 %v4842
    %v4969 = vpop.xlane.xlu0 %4968
    %4970 = vmax.xlane.f32.xlu0 %v4845
    %v4971 = vpop.xlane.xlu0 %4970
    %4972 = vmax.xlane.f32.xlu0 %v4850
    %v4973 = vpop.xlane.xlu0 %4972
    %4974 = vmax.xlane.f32.xlu0 %v4853
    %v4975 = vpop.xlane.xlu0 %4974
    %4976 = vmax.xlane.f32.xlu0 %v4858
    %v4977 = vpop.xlane.xlu0 %4976
    %4978 = vmax.xlane.f32.xlu0 %v4861
    %v4979 = vpop.xlane.xlu0 %4978
    %4980 = vmax.xlane.f32.xlu0 %v4866
    %v4981 = vpop.xlane.xlu0 %4980
    %4982 = vmax.xlane.f32.xlu0 %v4869
    %v4983 = vpop.xlane.xlu0 %4982
    %4984 = vmax.xlane.f32.xlu0 %v4874
    %v4985 = vpop.xlane.xlu0 %4984
    %4986 = vmax.xlane.f32.xlu0 %v4877
    %v4987 = vpop.xlane.xlu0 %4986
    %4988 = vmax.xlane.f32.xlu0 %v4882
    %v4989 = vpop.xlane.xlu0 %4988
    %4990 = vmax.xlane.f32.xlu0 %v4885
    %v4991 = vpop.xlane.xlu0 %4990
    %4992 = vmax.xlane.f32.xlu0 %v4890
    %v4993 = vpop.xlane.xlu0 %4992
    %4994 = vmax.xlane.f32.xlu0 %v4893
    %v4995 = vpop.xlane.xlu0 %4994
    %4996 = vmax.xlane.f32.xlu0 %v4898
    %v4997 = vpop.xlane.xlu0 %4996
    %4998 = vmax.xlane.f32.xlu0 %v4901
    %v4999 = vpop.xlane.xlu0 %4998
    %5000 = vmax.xlane.f32.xlu0 %v4906
    %v5001 = vpop.xlane.xlu0 %5000
    %5002 = vmax.xlane.f32.xlu0 %v4909
    %v5003 = vpop.xlane.xlu0 %5002
    %5004 = vmax.xlane.f32.xlu0 %v4914
    %v5005 = vpop.xlane.xlu0 %5004
    %5006 = vmax.xlane.f32.xlu0 %v4917
    %v5007 = vpop.xlane.xlu0 %5006
    %5008 = vmax.xlane.f32.xlu0 %v4922
    %v5009 = vpop.xlane.xlu0 %5008
    %5010 = vmax.xlane.f32.xlu0 %v4925
    %v5011 = vpop.xlane.xlu0 %5010
    %5012 = vmax.xlane.f32.xlu0 %v4930
    %v5013 = vpop.xlane.xlu0 %5012
    %5014 = vmax.xlane.f32.xlu0 %v4933
    %v5015 = vpop.xlane.xlu0 %5014
    %5016 = vmax.xlane.f32.xlu0 %v4938
    %v5017 = vpop.xlane.xlu0 %5016
    %5018 = vmax.xlane.f32.xlu0 %v4941
    %v5019 = vpop.xlane.xlu0 %5018
    %5020 = vmax.xlane.f32.xlu0 %v4946
    %v5021 = vpop.xlane.xlu0 %5020
    %5022 = vmax.xlane.f32.xlu0 %v4949
    %v5023 = vpop.xlane.xlu0 %5022
    %5024 = vmax.xlane.f32.xlu0 %v4954
    %v5025 = vpop.xlane.xlu0 %5024
    %5026 = vmax.xlane.f32.xlu0 %v4957
    %v5027 = vpop.xlane.xlu0 %5026
    %5028 = vmax.xlane.f32.xlu0 %v4962
    %v5029 = vpop.xlane.xlu0 %5028
    %5030 = vmax.xlane.f32.xlu0 %v4965
    %v5031 = vpop.xlane.xlu0 %5030
    %v5032 = vsub.f32 %v4842, %v4969
    %v5033 = vsub.f32 %v4845, %v4971
    %v5034 = vsub.f32 %v4850, %v4973
    %v5035 = vsub.f32 %v4853, %v4975
    %v5036 = vsub.f32 %v4858, %v4977
    %v5037 = vsub.f32 %v4861, %v4979
    %v5038 = vsub.f32 %v4866, %v4981
    %v5039 = vsub.f32 %v4869, %v4983
    %v5040 = vsub.f32 %v4874, %v4985
    %v5041 = vsub.f32 %v4877, %v4987
    %v5042 = vsub.f32 %v4882, %v4989
    %v5043 = vsub.f32 %v4885, %v4991
    %v5044 = vsub.f32 %v4890, %v4993
    %v5045 = vsub.f32 %v4893, %v4995
    %v5046 = vsub.f32 %v4898, %v4997
    %v5047 = vsub.f32 %v4901, %v4999
    %v5048 = vsub.f32 %v4906, %v5001
    %v5049 = vsub.f32 %v4909, %v5003
    %v5050 = vsub.f32 %v4914, %v5005
    %v5051 = vsub.f32 %v4917, %v5007
    %v5052 = vsub.f32 %v4922, %v5009
    %v5053 = vsub.f32 %v4925, %v5011
    %v5054 = vsub.f32 %v4930, %v5013
    %v5055 = vsub.f32 %v4933, %v5015
    %v5056 = vsub.f32 %v4938, %v5017
    %v5057 = vsub.f32 %v4941, %v5019
    %v5058 = vsub.f32 %v4946, %v5021
    %v5059 = vsub.f32 %v4949, %v5023
    %v5060 = vsub.f32 %v4954, %v5025
    %v5061 = vsub.f32 %v4957, %v5027
    %v5062 = vsub.f32 %v4962, %v5029
    %v5063 = vsub.f32 %v4965, %v5031
    %v5064 = vmul.f32 %v5032, 1.442695
    %v5065 = vpow.pop %v5064
    %v5066 = vmul.f32 %v5033, 1.442695
    %v5067 = vpow.pop %v5066
    %v5068 = vmul.f32 %v5034, 1.442695
    %v5069 = vpow.pop %v5068
    %v5070 = vmul.f32 %v5035, 1.442695
    %v5071 = vpow.pop %v5070
    %v5072 = vmul.f32 %v5036, 1.442695
    %v5073 = vpow.pop %v5072
    %v5074 = vmul.f32 %v5037, 1.442695
    %v5075 = vpow.pop %v5074
    %v5076 = vmul.f32 %v5038, 1.442695
    %v5077 = vpow.pop %v5076
    %v5078 = vmul.f32 %v5039, 1.442695
    %v5079 = vpow.pop %v5078
    %v5080 = vmul.f32 %v5040, 1.442695
    %v5081 = vpow.pop %v5080
    %v5082 = vmul.f32 %v5041, 1.442695
    %v5083 = vpow.pop %v5082
    %v5084 = vmul.f32 %v5042, 1.442695
    %v5085 = vpow.pop %v5084
    %v5086 = vmul.f32 %v5043, 1.442695
    %v5087 = vpow.pop %v5086
    %v5088 = vmul.f32 %v5044, 1.442695
    %v5089 = vpow.pop %v5088
    %v5090 = vmul.f32 %v5045, 1.442695
    %v5091 = vpow.pop %v5090
    %v5092 = vmul.f32 %v5046, 1.442695
    %v5093 = vpow.pop %v5092
    %v5094 = vmul.f32 %v5047, 1.442695
    %v5095 = vpow.pop %v5094
    %v5096 = vmul.f32 %v5048, 1.442695
    %v5097 = vpow.pop %v5096
    %v5098 = vmul.f32 %v5049, 1.442695
    %v5099 = vpow.pop %v5098
    %v5100 = vmul.f32 %v5050, 1.442695
    %v5101 = vpow.pop %v5100
    %v5102 = vmul.f32 %v5051, 1.442695
    %v5103 = vpow.pop %v5102
    %v5104 = vmul.f32 %v5052, 1.442695
    %v5105 = vpow.pop %v5104
    %v5106 = vmul.f32 %v5053, 1.442695
    %v5107 = vpow.pop %v5106
    %v5108 = vmul.f32 %v5054, 1.442695
    %v5109 = vpow.pop %v5108
    %v5110 = vmul.f32 %v5055, 1.442695
    %v5111 = vpow.pop %v5110
    %v5112 = vmul.f32 %v5056, 1.442695
    %v5113 = vpow.pop %v5112
    %v5114 = vmul.f32 %v5057, 1.442695
    %v5115 = vpow.pop %v5114
    %v5116 = vmul.f32 %v5058, 1.442695
    %v5117 = vpow.pop %v5116
    %v5118 = vmul.f32 %v5059, 1.442695
    %v5119 = vpow.pop %v5118
    %v5120 = vmul.f32 %v5060, 1.442695
    %v5121 = vpow.pop %v5120
    %v5122 = vmul.f32 %v5061, 1.442695
    %v5123 = vpow.pop %v5122
    %v5124 = vmul.f32 %v5062, 1.442695
    %v5125 = vpow.pop %v5124
    %v5126 = vmul.f32 %v5063, 1.442695
    %v5127 = vpow.pop %v5126
    %5128 = vadd.xlane.f32.xlu0 %v5065
    %v5129 = vpop.xlane.xlu0 %5128
    %5130 = vadd.xlane.f32.xlu0 %v5067
    %v5131 = vpop.xlane.xlu0 %5130
    %5132 = vadd.xlane.f32.xlu0 %v5069
    %v5133 = vpop.xlane.xlu0 %5132
    %5134 = vadd.xlane.f32.xlu0 %v5071
    %v5135 = vpop.xlane.xlu0 %5134
    %5136 = vadd.xlane.f32.xlu0 %v5073
    %v5137 = vpop.xlane.xlu0 %5136
    %5138 = vadd.xlane.f32.xlu0 %v5075
    %v5139 = vpop.xlane.xlu0 %5138
    %5140 = vadd.xlane.f32.xlu0 %v5077
    %v5141 = vpop.xlane.xlu0 %5140
    %5142 = vadd.xlane.f32.xlu0 %v5079
    %v5143 = vpop.xlane.xlu0 %5142
    %5144 = vadd.xlane.f32.xlu0 %v5081
    %v5145 = vpop.xlane.xlu0 %5144
    %5146 = vadd.xlane.f32.xlu0 %v5083
    %v5147 = vpop.xlane.xlu0 %5146
    %5148 = vadd.xlane.f32.xlu0 %v5085
    %v5149 = vpop.xlane.xlu0 %5148
    %5150 = vadd.xlane.f32.xlu0 %v5087
    %v5151 = vpop.xlane.xlu0 %5150
    %5152 = vadd.xlane.f32.xlu0 %v5089
    %v5153 = vpop.xlane.xlu0 %5152
    %5154 = vadd.xlane.f32.xlu0 %v5091
    %v5155 = vpop.xlane.xlu0 %5154
    %5156 = vadd.xlane.f32.xlu0 %v5093
    %v5157 = vpop.xlane.xlu0 %5156
    %5158 = vadd.xlane.f32.xlu0 %v5095
    %v5159 = vpop.xlane.xlu0 %5158
    %5160 = vadd.xlane.f32.xlu0 %v5097
    %v5161 = vpop.xlane.xlu0 %5160
    %5162 = vadd.xlane.f32.xlu0 %v5099
    %v5163 = vpop.xlane.xlu0 %5162
    %5164 = vadd.xlane.f32.xlu0 %v5101
    %v5165 = vpop.xlane.xlu0 %5164
    %5166 = vadd.xlane.f32.xlu0 %v5103
    %v5167 = vpop.xlane.xlu0 %5166
    %5168 = vadd.xlane.f32.xlu0 %v5105
    %v5169 = vpop.xlane.xlu0 %5168
    %5170 = vadd.xlane.f32.xlu0 %v5107
    %v5171 = vpop.xlane.xlu0 %5170
    %5172 = vadd.xlane.f32.xlu0 %v5109
    %v5173 = vpop.xlane.xlu0 %5172
    %5174 = vadd.xlane.f32.xlu0 %v5111
    %v5175 = vpop.xlane.xlu0 %5174
    %5176 = vadd.xlane.f32.xlu0 %v5113
    %v5177 = vpop.xlane.xlu0 %5176
    %5178 = vadd.xlane.f32.xlu0 %v5115
    %v5179 = vpop.xlane.xlu0 %5178
    %5180 = vadd.xlane.f32.xlu0 %v5117
    %v5181 = vpop.xlane.xlu0 %5180
    %5182 = vadd.xlane.f32.xlu0 %v5119
    %v5183 = vpop.xlane.xlu0 %5182
    %5184 = vadd.xlane.f32.xlu0 %v5121
    %v5185 = vpop.xlane.xlu0 %5184
    %5186 = vadd.xlane.f32.xlu0 %v5123
    %v5187 = vpop.xlane.xlu0 %5186
    %5188 = vadd.xlane.f32.xlu0 %v5125
    %v5189 = vpop.xlane.xlu0 %5188
    %5190 = vadd.xlane.f32.xlu0 %v5127
    %v5191 = vpop.xlane.xlu0 %5190
    %v5192 = vlog2.pop %v5129
    %v5193 = vmul.f32 %v5192, 0.6931472
    %v5194 = vlog2.pop %v5131
    %v5195 = vmul.f32 %v5194, 0.6931472
    %v5196 = vlog2.pop %v5133
    %v5197 = vmul.f32 %v5196, 0.6931472
    %v5198 = vlog2.pop %v5135
    %v5199 = vmul.f32 %v5198, 0.6931472
    %v5200 = vlog2.pop %v5137
    %v5201 = vmul.f32 %v5200, 0.6931472
    %v5202 = vlog2.pop %v5139
    %v5203 = vmul.f32 %v5202, 0.6931472
    %v5204 = vlog2.pop %v5141
    %v5205 = vmul.f32 %v5204, 0.6931472
    %v5206 = vlog2.pop %v5143
    %v5207 = vmul.f32 %v5206, 0.6931472
    %v5208 = vlog2.pop %v5145
    %v5209 = vmul.f32 %v5208, 0.6931472
    %v5210 = vlog2.pop %v5147
    %v5211 = vmul.f32 %v5210, 0.6931472
    %v5212 = vlog2.pop %v5149
    %v5213 = vmul.f32 %v5212, 0.6931472
    %v5214 = vlog2.pop %v5151
    %v5215 = vmul.f32 %v5214, 0.6931472
    %v5216 = vlog2.pop %v5153
    %v5217 = vmul.f32 %v5216, 0.6931472
    %v5218 = vlog2.pop %v5155
    %v5219 = vmul.f32 %v5218, 0.6931472
    %v5220 = vlog2.pop %v5157
    %v5221 = vmul.f32 %v5220, 0.6931472
    %v5222 = vlog2.pop %v5159
    %v5223 = vmul.f32 %v5222, 0.6931472
    %v5224 = vlog2.pop %v5161
    %v5225 = vmul.f32 %v5224, 0.6931472
    %v5226 = vlog2.pop %v5163
    %v5227 = vmul.f32 %v5226, 0.6931472
    %v5228 = vlog2.pop %v5165
    %v5229 = vmul.f32 %v5228, 0.6931472
    %v5230 = vlog2.pop %v5167
    %v5231 = vmul.f32 %v5230, 0.6931472
    %v5232 = vlog2.pop %v5169
    %v5233 = vmul.f32 %v5232, 0.6931472
    %v5234 = vlog2.pop %v5171
    %v5235 = vmul.f32 %v5234, 0.6931472
    %v5236 = vlog2.pop %v5173
    %v5237 = vmul.f32 %v5236, 0.6931472
    %v5238 = vlog2.pop %v5175
    %v5239 = vmul.f32 %v5238, 0.6931472
    %v5240 = vlog2.pop %v5177
    %v5241 = vmul.f32 %v5240, 0.6931472
    %v5242 = vlog2.pop %v5179
    %v5243 = vmul.f32 %v5242, 0.6931472
    %v5244 = vlog2.pop %v5181
    %v5245 = vmul.f32 %v5244, 0.6931472
    %v5246 = vlog2.pop %v5183
    %v5247 = vmul.f32 %v5246, 0.6931472
    %v5248 = vlog2.pop %v5185
    %v5249 = vmul.f32 %v5248, 0.6931472
    %v5250 = vlog2.pop %v5187
    %v5251 = vmul.f32 %v5250, 0.6931472
    %v5252 = vlog2.pop %v5189
    %v5253 = vmul.f32 %v5252, 0.6931472
    %v5254 = vlog2.pop %v5191
    %v5255 = vmul.f32 %v5254, 0.6931472
    %v5256 = vsub.f32 %v5032, %v5193
    %v5257 = vsub.f32 %v5033, %v5195
    %v5258 = vsub.f32 %v5034, %v5197
    %v5259 = vsub.f32 %v5035, %v5199
    %v5260 = vsub.f32 %v5036, %v5201
    %v5261 = vsub.f32 %v5037, %v5203
    %v5262 = vsub.f32 %v5038, %v5205
    %v5263 = vsub.f32 %v5039, %v5207
    %v5264 = vsub.f32 %v5040, %v5209
    %v5265 = vsub.f32 %v5041, %v5211
    %v5266 = vsub.f32 %v5042, %v5213
    %v5267 = vsub.f32 %v5043, %v5215
    %v5268 = vsub.f32 %v5044, %v5217
    %v5269 = vsub.f32 %v5045, %v5219
    %v5270 = vsub.f32 %v5046, %v5221
    %v5271 = vsub.f32 %v5047, %v5223
    %v5272 = vsub.f32 %v5048, %v5225
    %v5273 = vsub.f32 %v5049, %v5227
    %v5274 = vsub.f32 %v5050, %v5229
    %v5275 = vsub.f32 %v5051, %v5231
    %v5276 = vsub.f32 %v5052, %v5233
    %v5277 = vsub.f32 %v5053, %v5235
    %v5278 = vsub.f32 %v5054, %v5237
    %v5279 = vsub.f32 %v5055, %v5239
    %v5280 = vsub.f32 %v5056, %v5241
    %v5281 = vsub.f32 %v5057, %v5243
    %v5282 = vsub.f32 %v5058, %v5245
    %v5283 = vsub.f32 %v5059, %v5247
    %v5284 = vsub.f32 %v5060, %v5249
    %v5285 = vsub.f32 %v5061, %v5251
    %v5286 = vsub.f32 %v5062, %v5253
    %v5287 = vsub.f32 %v5063, %v5255
    %5288 = vst [vmem:[#allocation2] sm:$0xff] %v5256
    %5289 = vst [vmem:[#allocation2 + $0x8] sm:$0xff] %v5257
    %5290 = vst [vmem:[#allocation2 + $0x10] sm:$0xff] %v5258
    %5291 = vst [vmem:[#allocation2 + $0x18] sm:$0xff] %v5259
    %5292 = vst [vmem:[#allocation2 + $0x20] sm:$0xff] %v5260
    %5293 = vst [vmem:[#allocation2 + $0x28] sm:$0xff] %v5261
    %5294 = vst [vmem:[#allocation2 + $0x30] sm:$0xff] %v5262
    %5295 = vst [vmem:[#allocation2 + $0x38] sm:$0xff] %v5263
    %5296 = vst [vmem:[#allocation2 + $0x40] sm:$0xff] %v5264
    %5297 = vst [vmem:[#allocation2 + $0x48] sm:$0xff] %v5265
    %5298 = vst [vmem:[#allocation2 + $0x50] sm:$0xff] %v5266
    %5299 = vst [vmem:[#allocation2 + $0x58] sm:$0xff] %v5267
    %5300 = vst [vmem:[#allocation2 + $0x60] sm:$0xff] %v5268
    %5301 = vst [vmem:[#allocation2 + $0x68] sm:$0xff] %v5269
    %5302 = vst [vmem:[#allocation2 + $0x70] sm:$0xff] %v5270
    %5303 = vst [vmem:[#allocation2 + $0x78] sm:$0xff] %v5271
    %5304 = vst [vmem:[#allocation2 + $0x80] sm:$0xff] %v5272
    %5305 = vst [vmem:[#allocation2 + $0x88] sm:$0xff] %v5273
    %5306 = vst [vmem:[#allocation2 + $0x90] sm:$0xff] %v5274
    %5307 = vst [vmem:[#allocation2 + $0x98] sm:$0xff] %v5275
    %5308 = vst [vmem:[#allocation2 + $0xa0] sm:$0xff] %v5276
    %5309 = vst [vmem:[#allocation2 + $0xa8] sm:$0xff] %v5277
    %5310 = vst [vmem:[#allocation2 + $0xb0] sm:$0xff] %v5278
    %5311 = vst [vmem:[#allocation2 + $0xb8] sm:$0xff] %v5279
    %5312 = vst [vmem:[#allocation2 + $0xc0] sm:$0xff] %v5280
    %5313 = vst [vmem:[#allocation2 + $0xc8] sm:$0xff] %v5281
    %5314 = vst [vmem:[#allocation2 + $0xd0] sm:$0xff] %v5282
    %5315 = vst [vmem:[#allocation2 + $0xd8] sm:$0xff] %v5283
    %5316 = vst [vmem:[#allocation2 + $0xe0] sm:$0xff] %v5284
    %5317 = vst [vmem:[#allocation2 + $0xe8] sm:$0xff] %v5285
    %5318 = vst [vmem:[#allocation2 + $0xf0] sm:$0xff] %v5286
    %5319 = vst [vmem:[#allocation2 + $0xf8] sm:$0xff] %v5287
    // Predicated region
    $region30: #{_mlp_forward_impl.1} parent=1 // pred_check
      _
    $region31: #{_mlp_forward_impl.1} parent=1 // pred_check_branch
      %5321 = sbr.rel (0) target = $region33
    $region32: #{_mlp_forward_impl.1} parent=1 // pred_region
      %s5323 = ssub.s32 4096, 32
      %5324 = vsyncadd [#allocation3], %s5323
      %s5325 = sshll.u32 [#allocation2], 4
      %s5326 = int_to_ptr.vmem [resolvable:$true] %s5325
      %5331 = dma.vmem_to_hbm [thread:$0]  %s5326, 32, %s7, [#allocation3], 32, 32, 2
    $region33: #{_mlp_forward_impl.1} parent=1 // pred_fallthru
      _
    // Predicated region
    $region34: #{_mlp_forward_impl.1} parent=1 // pred_check
      _
    $region35: #{_mlp_forward_impl.1} parent=1 // pred_check_branch
      %5333 = sbr.rel (0) target = $region37
    $region36: #{_mlp_forward_impl.1} parent=1 // pred_region
      %5334 = dma.done [#allocation3], 4096
    $region37: #{_mlp_forward_impl.1} parent=1 // pred_fallthru
      _
    %5335 = vsyncpa [#allocation3], 1

</llo_original>
